<compile_context>
chip_gen: v5e
topology: v5e:2x2
jax: 0.10.0
libtpu: 0.0.40
codegen_flags: <defaults>
</compile_context>

<pallas_src>
import jax
import jax.numpy as jnp
from jax.experimental import pallas as pl
from jax.experimental.pallas import tpu as pltpu

# Fixed by the PyTorch module.
IC, OC = 64, 32
KH = KW = 16
SH = SW = 8


# ----------------------------- Pallas kernel --------------------------------

def conv_emb_kernel(patches_ref, wc_ref, wemb_ref, bias_ref, out_ref):
    """Single-shot fused conv (im2col matmul) + emb projection.

    patches_ref: (P_pad, K)  f32  im2col rows, K ordered (ic, kh, kw)
    wc_ref:      (OC, K)     f32  conv weight, lane-dense in K
    wemb_ref:    (1, P_pad)  f32  emb weight (zero past the real 21 positions)
    bias_ref:    (1, OC)     f32  fused bias = sum(w_emb) * b_conv + b_emb
    out_ref:     (1, OC)     f32
    """
    # (P_pad, K) . (OC, K)^T -> (P_pad, OC); both operands contract their
    # lane-dense last dim (no transposes, MXU-friendly).
    conv = jax.lax.dot_general(
        patches_ref[...], wc_ref[...],
        dimension_numbers=(((1,), (1,)), ((), ())),
        preferred_element_type=jnp.float32)
    # emb: (1, P_pad) @ (P_pad, OC) + fused bias -> (1, OC)
    out_ref[...] = (
        jnp.dot(wemb_ref[...], conv, preferred_element_type=jnp.float32)
        + bias_ref[...])


def cnn6_forward_pallas(patches, w_conv_mat, w_emb_pad, fused_bias):
    p_pad, k = patches.shape            # (24, 16384)
    oc, _ = w_conv_mat.shape            # (32, 16384)
    return pl.pallas_call(
        conv_emb_kernel,
        out_shape=jax.ShapeDtypeStruct((1, oc), jnp.float32),
        grid_spec=pltpu.PrefetchScalarGridSpec(
            num_scalar_prefetch=0,
            grid=(1,),                                   # single shot
            in_specs=[
                pl.BlockSpec((p_pad, k), lambda i: (0, 0)),   # im2col patches
                pl.BlockSpec((oc, k), lambda i: (0, 0)),      # conv weight (OC, K)
                pl.BlockSpec((1, p_pad), lambda i: (0, 0)),   # emb weight
                pl.BlockSpec((1, oc), lambda i: (0, 0)),      # fused bias
            ],
            out_specs=pl.BlockSpec((1, oc), lambda i: (0, 0)),
        ),
        compiler_params=pltpu.CompilerParams(
            dimension_semantics=("arbitrary",)),
    )(patches, w_conv_mat, w_emb_pad, fused_bias)


# ------------------------------- JAX glue ------------------------------------

def cnn6_forward(x, params):
    """x: (1, 32, 64, 64) float32 — same axis convention as the PyTorch module."""
    w_conv, b_conv, w_emb, b_emb = params

    # x.permute(0, 3, 2, 1): (1, 32, 64, 64) -> (1, 64, 64, 32) = (N, C, H, W)
    x_nchw = jnp.transpose(x, (0, 3, 2, 1)).astype(jnp.float32)
    _, C, H, W = x_nchw.shape
    HO = (H - KH) // SH + 1                       # 7
    WO = (W - KW) // SW + 1                       # 3
    P = HO * WO                                   # 21  (matches Linear(21, 1))

    # Pad H so there are 8 output rows -> 24 positions (8-sublane aligned);
    # the 3 extra rows are killed below by zero-padded emb weights.
    HO_PAD = 8
    P_PAD = HO_PAD * WO                           # 24
    pad_h = (HO_PAD - 1) * SH + KH - H            # 8

    # One fused XLA op builds the im2col matrix; channels ordered (ic, kh, kw),
    # matching torch's weight.reshape(OC, -1). NHWC output layout makes the
    # reshape to (P_PAD, K) free (no transpose). HIGHEST keeps the 0/1
    # patch-extraction conv numerically exact.
    patches = jax.lax.conv_general_dilated_patches(
        x_nchw, filter_shape=(KH, KW), window_strides=(SH, SW),
        padding=((0, pad_h), (0, 0)),
        dimension_numbers=("NCHW", "OIHW", "NHWC"),
        precision=jax.lax.Precision.HIGHEST)      # (1, 8, 3, C*KH*KW)
    patches = patches.reshape(P_PAD, C * KH * KW)                 # (24, 16384)

    # Conv weight kept as (OC, K): lane-dense in K, no host-side transpose.
    w_conv_mat = w_conv.reshape(OC, -1).astype(jnp.float32)       # (32, 16384)

    # Emb weight, zero-padded over the 3 fake positions.
    w_emb_row = w_emb.reshape(1, -1).astype(jnp.float32)          # (1, 21)
    w_emb_pad = jnp.zeros((1, P_PAD), jnp.float32).at[:, :P].set(w_emb_row)

    # Fold both biases:  w_emb @ (A + 1 b_conv^T) + b_emb
    #                  = w_emb @ A + (sum(w_emb) * b_conv + b_emb)
    fused_bias = (jnp.sum(w_emb_row) * b_conv.astype(jnp.float32)
                  + b_emb.astype(jnp.float32)).reshape(1, OC)     # (1, 32)

    return cnn6_forward_pallas(patches, w_conv_mat, w_emb_pad, fused_bias)


def cnn6_reference(x, params):
    """Pure-JAX reference using the real XLA conv (ground-truth semantics)."""
    w_conv, b_conv, w_emb, b_emb = params
    x_nchw = jnp.transpose(x, (0, 3, 2, 1))
    conv = jax.lax.conv_general_dilated(
        x_nchw, w_conv, window_strides=(SH, SW), padding="VALID",
        dimension_numbers=("NCHW", "OIHW", "NCHW"),
        precision=jax.lax.Precision.HIGHEST)                       # (1, 32, 7, 3)
    conv = conv + b_conv[None, :, None, None]
    feat = conv.reshape(OC, -1)                                    # (32, 21)
    y = jnp.einsum("np,qp->nq", feat, w_emb,
                   precision=jax.lax.Precision.HIGHEST) + b_emb    # (32, 1)
    return y.T                                                     # (1, 32)


def init_params(key):
    k1, k2, k3, k4 = jax.random.split(key, 4)
    w_conv = jax.random.normal(k1, (OC, IC, KH, KW), jnp.float32) * 0.01
    b_conv = jax.random.normal(k2, (OC,), jnp.float32) * 0.01
    w_emb = jax.random.normal(k3, (1, 21), jnp.float32) * 0.1
    b_emb = jax.random.normal(k4, (1,), jnp.float32) * 0.1
    return w_conv, b_conv, w_emb, b_emb


if __name__ == "__main__":
    key = jax.random.PRNGKey(0)
    kx, kp = jax.random.split(key)
    # Input shape fixed by the module's Linear(21, 1): (1, 32, 64, 64)
    x = jax.random.normal(kx, (1, 32, 64, 64), jnp.float32)
    params = init_params(kp)

    fwd = jax.jit(cnn6_forward)
    out = jax.block_until_ready(fwd(x, params))
    ref = jax.block_until_ready(cnn6_reference(x, params))

    assert out.shape == (1, 32), out.shape
    assert jnp.allclose(out, ref, atol=2e-3, rtol=2e-3), (
        float(jnp.max(jnp.abs(out - ref))))
    print("KERNEL_OK")
</pallas_src>

<mosaic_0001>
module attributes {stable_mosaic.version = 11 : i64} {
  func.func @conv_emb_kernel(%arg0: i32, %arg1: memref<24x16384xf32, #tpu.memory_space<vmem>>, %arg2: memref<32x16384xf32, #tpu.memory_space<vmem>>, %arg3: memref<1x24xf32, #tpu.memory_space<vmem>>, %arg4: memref<1x32xf32, #tpu.memory_space<vmem>>, %arg5: memref<1x32xf32, #tpu.memory_space<vmem>>) attributes {dimension_semantics = [#tpu.dimension_semantics<arbitrary>], iteration_bounds = array<i64: 1>, scalar_prefetch = 0 : i64, scratch_operands = 0 : i64, tpu.core_type = #tpu.core_type<tc>, window_params = [{pipeline_mode = #tpu.pipeline_mode<synchronous>, transform_indices = @transform_0, window_bounds = array<i64: 24, 16384>}, {pipeline_mode = #tpu.pipeline_mode<synchronous>, transform_indices = @transform_1, window_bounds = array<i64: 32, 16384>}, {pipeline_mode = #tpu.pipeline_mode<synchronous>, transform_indices = @transform_2, window_bounds = array<i64: 1, 24>}, {pipeline_mode = #tpu.pipeline_mode<synchronous>, transform_indices = @transform_3, window_bounds = array<i64: 1, 32>}, {pipeline_mode = #tpu.pipeline_mode<synchronous>, transform_indices = @transform_4, window_bounds = array<i64: 1, 32>}]} {
    %c0 = arith.constant 0 : index
    %c0_0 = arith.constant 0 : index
    %0 = vector.load %arg1[%c0, %c0_0] : memref<24x16384xf32, #tpu.memory_space<vmem>>, vector<24x16384xf32>
    %c0_1 = arith.constant 0 : index
    %c0_2 = arith.constant 0 : index
    %1 = vector.load %arg2[%c0_1, %c0_2] : memref<32x16384xf32, #tpu.memory_space<vmem>>, vector<32x16384xf32>
    %cst = arith.constant dense<0.000000e+00> : vector<24x32xf32>
    %2 = tpu.matmul %0, %1, %cst {dimension_numbers = #tpu.dot_dimension_numbers<[1], [1], [0], [0], [0, 0, 1, 0], [], []>} : vector<24x16384xf32>, vector<32x16384xf32>, vector<24x32xf32> -> vector<24x32xf32>
    %c0_3 = arith.constant 0 : index
    %c0_4 = arith.constant 0 : index
    %3 = vector.load %arg3[%c0_3, %c0_4] : memref<1x24xf32, #tpu.memory_space<vmem>>, vector<1x24xf32>
    %cst_5 = arith.constant dense<0.000000e+00> : vector<1x32xf32>
    %4 = tpu.matmul %3, %2, %cst_5 {dimension_numbers = #tpu.dot_dimension_numbers<[1], [0], [0], [1], [0, 0, 1, 1], [], []>} : vector<1x24xf32>, vector<24x32xf32>, vector<1x32xf32> -> vector<1x32xf32>
    %c0_6 = arith.constant 0 : index
    %c0_7 = arith.constant 0 : index
    %5 = vector.load %arg4[%c0_6, %c0_7] : memref<1x32xf32, #tpu.memory_space<vmem>>, vector<1x32xf32>
    %6 = arith.addf %4, %5 : vector<1x32xf32>
    %c0_8 = arith.constant 0 : index
    %c0_9 = arith.constant 0 : index
    %7 = vector.load %arg5[%c0_8, %c0_9] : memref<1x32xf32, #tpu.memory_space<vmem>>, vector<1x32xf32>
    tpu.vector_store %arg5[%c0_8, %c0_9], %6 {strides = array<i32>} : memref<1x32xf32, #tpu.memory_space<vmem>>, vector<1x32xf32>,
    return
  }
  func.func @transform_0(%arg0: i32) -> (i32, i32) {
    %c0_i32 = arith.constant 0 : i32
    %c0_i32_0 = arith.constant 0 : i32
    %c0_i32_1 = arith.constant 0 : i32
    return %c0_i32, %c0_i32_0 : i32, i32
  }
  func.func @transform_1(%arg0: i32) -> (i32, i32) {
    %c0_i32 = arith.constant 0 : i32
    %c0_i32_0 = arith.constant 0 : i32
    %c0_i32_1 = arith.constant 0 : i32
    return %c0_i32, %c0_i32_0 : i32, i32
  }
  func.func @transform_2(%arg0: i32) -> (i32, i32) {
    %c0_i32 = arith.constant 0 : i32
    %c0_i32_0 = arith.constant 0 : i32
    %c0_i32_1 = arith.constant 0 : i32
    return %c0_i32, %c0_i32_0 : i32, i32
  }
  func.func @transform_3(%arg0: i32) -> (i32, i32) {
    %c0_i32 = arith.constant 0 : i32
    %c0_i32_0 = arith.constant 0 : i32
    %c0_i32_1 = arith.constant 0 : i32
    return %c0_i32, %c0_i32_0 : i32, i32
  }
  func.func @transform_4(%arg0: i32) -> (i32, i32) {
    %c0_i32 = arith.constant 0 : i32
    %c0_i32_0 = arith.constant 0 : i32
    %c0_i32_1 = arith.constant 0 : i32
    return %c0_i32, %c0_i32_0 : i32, i32
  }
}

</mosaic_0001>

<llo_original>
// kernel: cnn6_forward.1
$region0: #{cnn6_forward.1}
  #allocation0 [shape = 'u32[]', space=smem, size = 0x4, offset = 0x4, fixed_abs, tag = 'smem constant byte address 0x4 - core index']
  #allocation1 [shape = 'u32[72,128]{1,0:T(1,128)}', space=vmem, size = 0x9000, scoped, tag = 'internal scratch']
  %s0 = inlined_call_operand.vmem [shape: f32[24,16384], index: 0, kind: input, shape index: {}]
  %s1 = inlined_call_operand.vmem [shape: f32[32,16384], index: 1, kind: input, shape index: {}]
  %s2 = inlined_call_operand.vmem [shape: f32[1,24], index: 2, kind: input, shape index: {}]
  %s3 = inlined_call_operand.vmem [shape: f32[1,32], index: 3, kind: input, shape index: {}]
  %s4 = inlined_call_operand.hbm [shape: f32[1,32], index: 4, kind: output, shape index: {}]
  %s5 = sld [smem:[#allocation0]]
  $region26: #{cnn6_forward.1} parent=0
    _
  %s7 = ssub.s32 1, %s5
  %s8 = scalar_select 0, %s7, %s5
  $region1: #{cnn6_forward.1} parent=0
    #allocation2 [shape = 'u8[512]{0}', space=vmem, size = 0x400, scoped, tag = 'output window, operand 0, single buffered']
    #allocation3 [shape = 's32[1]{0}', space=sflag, size = 0x4, scoped, tag = 'scoped memory for cnn6_forward.1']
    %9 = vsyncpa [#allocation3], 0
    // Predicated region
    $region2: #{cnn6_forward.1} parent=1 // pred_check
      _
    $region3: #{cnn6_forward.1} parent=1 // pred_check_branch
      %11 = sbr.rel (0) target = $region5
    $region4: #{cnn6_forward.1} parent=1 // pred_region
      _
    $region5: #{cnn6_forward.1} parent=1 // pred_fallthru
      _
    // Predicated region
    $region6: #{cnn6_forward.1} parent=1 // pred_check
      _
    $region7: #{cnn6_forward.1} parent=1 // pred_check_branch
      %13 = sbr.rel (0) target = $region9
    $region8: #{cnn6_forward.1} parent=1 // pred_region
      _
    $region9: #{cnn6_forward.1} parent=1 // pred_fallthru
      _
    // Predicated region
    $region10: #{cnn6_forward.1} parent=1 // pred_check
      _
    $region11: #{cnn6_forward.1} parent=1 // pred_check_branch
      %15 = sbr.rel (0) target = $region13
    $region12: #{cnn6_forward.1} parent=1 // pred_region
      _
    $region13: #{cnn6_forward.1} parent=1 // pred_fallthru
      _
    // Predicated region
    $region14: #{cnn6_forward.1} parent=1 // pred_check
      _
    $region15: #{cnn6_forward.1} parent=1 // pred_check_branch
      %17 = sbr.rel (0) target = $region17
    $region16: #{cnn6_forward.1} parent=1 // pred_region
      _
    $region17: #{cnn6_forward.1} parent=1 // pred_fallthru
      _
    %v18 = vld [vmem:[%s0] sm:$0xff]
    %v19 = vld [vmem:[%s0 + $0x8] sm:$0xff]
    %v20 = vld [vmem:[%s0 + $0x10] sm:$0xff]
    %v21 = vld [vmem:[%s0 + $0x18] sm:$0xff]
    %v22 = vld [vmem:[%s0 + $0x20] sm:$0xff]
    %v23 = vld [vmem:[%s0 + $0x28] sm:$0xff]
    %v24 = vld [vmem:[%s0 + $0x30] sm:$0xff]
    %v25 = vld [vmem:[%s0 + $0x38] sm:$0xff]
    %v26 = vld [vmem:[%s0 + $0x40] sm:$0xff]
    %v27 = vld [vmem:[%s0 + $0x48] sm:$0xff]
    %v28 = vld [vmem:[%s0 + $0x50] sm:$0xff]
    %v29 = vld [vmem:[%s0 + $0x58] sm:$0xff]
    %v30 = vld [vmem:[%s0 + $0x60] sm:$0xff]
    %v31 = vld [vmem:[%s0 + $0x68] sm:$0xff]
    %v32 = vld [vmem:[%s0 + $0x70] sm:$0xff]
    %v33 = vld [vmem:[%s0 + $0x78] sm:$0xff]
    %v34 = vld [vmem:[%s0 + $0x80] sm:$0xff]
    %v35 = vld [vmem:[%s0 + $0x88] sm:$0xff]
    %v36 = vld [vmem:[%s0 + $0x90] sm:$0xff]
    %v37 = vld [vmem:[%s0 + $0x98] sm:$0xff]
    %v38 = vld [vmem:[%s0 + $0xa0] sm:$0xff]
    %v39 = vld [vmem:[%s0 + $0xa8] sm:$0xff]
    %v40 = vld [vmem:[%s0 + $0xb0] sm:$0xff]
    %v41 = vld [vmem:[%s0 + $0xb8] sm:$0xff]
    %v42 = vld [vmem:[%s0 + $0xc0] sm:$0xff]
    %v43 = vld [vmem:[%s0 + $0xc8] sm:$0xff]
    %v44 = vld [vmem:[%s0 + $0xd0] sm:$0xff]
    %v45 = vld [vmem:[%s0 + $0xd8] sm:$0xff]
    %v46 = vld [vmem:[%s0 + $0xe0] sm:$0xff]
    %v47 = vld [vmem:[%s0 + $0xe8] sm:$0xff]
    %v48 = vld [vmem:[%s0 + $0xf0] sm:$0xff]
    %v49 = vld [vmem:[%s0 + $0xf8] sm:$0xff]
    %v50 = vld [vmem:[%s0 + $0x100] sm:$0xff]
    %v51 = vld [vmem:[%s0 + $0x108] sm:$0xff]
    %v52 = vld [vmem:[%s0 + $0x110] sm:$0xff]
    %v53 = vld [vmem:[%s0 + $0x118] sm:$0xff]
    %v54 = vld [vmem:[%s0 + $0x120] sm:$0xff]
    %v55 = vld [vmem:[%s0 + $0x128] sm:$0xff]
    %v56 = vld [vmem:[%s0 + $0x130] sm:$0xff]
    %v57 = vld [vmem:[%s0 + $0x138] sm:$0xff]
    %v58 = vld [vmem:[%s0 + $0x140] sm:$0xff]
    %v59 = vld [vmem:[%s0 + $0x148] sm:$0xff]
    %v60 = vld [vmem:[%s0 + $0x150] sm:$0xff]
    %v61 = vld [vmem:[%s0 + $0x158] sm:$0xff]
    %v62 = vld [vmem:[%s0 + $0x160] sm:$0xff]
    %v63 = vld [vmem:[%s0 + $0x168] sm:$0xff]
    %v64 = vld [vmem:[%s0 + $0x170] sm:$0xff]
    %v65 = vld [vmem:[%s0 + $0x178] sm:$0xff]
    %v66 = vld [vmem:[%s0 + $0x180] sm:$0xff]
    %v67 = vld [vmem:[%s0 + $0x188] sm:$0xff]
    %v68 = vld [vmem:[%s0 + $0x190] sm:$0xff]
    %v69 = vld [vmem:[%s0 + $0x198] sm:$0xff]
    %v70 = vld [vmem:[%s0 + $0x1a0] sm:$0xff]
    %v71 = vld [vmem:[%s0 + $0x1a8] sm:$0xff]
    %v72 = vld [vmem:[%s0 + $0x1b0] sm:$0xff]
    %v73 = vld [vmem:[%s0 + $0x1b8] sm:$0xff]
    %v74 = vld [vmem:[%s0 + $0x1c0] sm:$0xff]
    %v75 = vld [vmem:[%s0 + $0x1c8] sm:$0xff]
    %v76 = vld [vmem:[%s0 + $0x1d0] sm:$0xff]
    %v77 = vld [vmem:[%s0 + $0x1d8] sm:$0xff]
    %v78 = vld [vmem:[%s0 + $0x1e0] sm:$0xff]
    %v79 = vld [vmem:[%s0 + $0x1e8] sm:$0xff]
    %v80 = vld [vmem:[%s0 + $0x1f0] sm:$0xff]
    %v81 = vld [vmem:[%s0 + $0x1f8] sm:$0xff]
    %v82 = vld [vmem:[%s0 + $0x200] sm:$0xff]
    %v83 = vld [vmem:[%s0 + $0x208] sm:$0xff]
    %v84 = vld [vmem:[%s0 + $0x210] sm:$0xff]
    %v85 = vld [vmem:[%s0 + $0x218] sm:$0xff]
    %v86 = vld [vmem:[%s0 + $0x220] sm:$0xff]
    %v87 = vld [vmem:[%s0 + $0x228] sm:$0xff]
    %v88 = vld [vmem:[%s0 + $0x230] sm:$0xff]
    %v89 = vld [vmem:[%s0 + $0x238] sm:$0xff]
    %v90 = vld [vmem:[%s0 + $0x240] sm:$0xff]
    %v91 = vld [vmem:[%s0 + $0x248] sm:$0xff]
    %v92 = vld [vmem:[%s0 + $0x250] sm:$0xff]
    %v93 = vld [vmem:[%s0 + $0x258] sm:$0xff]
    %v94 = vld [vmem:[%s0 + $0x260] sm:$0xff]
    %v95 = vld [vmem:[%s0 + $0x268] sm:$0xff]
    %v96 = vld [vmem:[%s0 + $0x270] sm:$0xff]
    %v97 = vld [vmem:[%s0 + $0x278] sm:$0xff]
    %v98 = vld [vmem:[%s0 + $0x280] sm:$0xff]
    %v99 = vld [vmem:[%s0 + $0x288] sm:$0xff]
    %v100 = vld [vmem:[%s0 + $0x290] sm:$0xff]
    %v101 = vld [vmem:[%s0 + $0x298] sm:$0xff]
    %v102 = vld [vmem:[%s0 + $0x2a0] sm:$0xff]
    %v103 = vld [vmem:[%s0 + $0x2a8] sm:$0xff]
    %v104 = vld [vmem:[%s0 + $0x2b0] sm:$0xff]
    %v105 = vld [vmem:[%s0 + $0x2b8] sm:$0xff]
    %v106 = vld [vmem:[%s0 + $0x2c0] sm:$0xff]
    %v107 = vld [vmem:[%s0 + $0x2c8] sm:$0xff]
    %v108 = vld [vmem:[%s0 + $0x2d0] sm:$0xff]
    %v109 = vld [vmem:[%s0 + $0x2d8] sm:$0xff]
    %v110 = vld [vmem:[%s0 + $0x2e0] sm:$0xff]
    %v111 = vld [vmem:[%s0 + $0x2e8] sm:$0xff]
    %v112 = vld [vmem:[%s0 + $0x2f0] sm:$0xff]
    %v113 = vld [vmem:[%s0 + $0x2f8] sm:$0xff]
    %v114 = vld [vmem:[%s0 + $0x300] sm:$0xff]
    %v115 = vld [vmem:[%s0 + $0x308] sm:$0xff]
    %v116 = vld [vmem:[%s0 + $0x310] sm:$0xff]
    %v117 = vld [vmem:[%s0 + $0x318] sm:$0xff]
    %v118 = vld [vmem:[%s0 + $0x320] sm:$0xff]
    %v119 = vld [vmem:[%s0 + $0x328] sm:$0xff]
    %v120 = vld [vmem:[%s0 + $0x330] sm:$0xff]
    %v121 = vld [vmem:[%s0 + $0x338] sm:$0xff]
    %v122 = vld [vmem:[%s0 + $0x340] sm:$0xff]
    %v123 = vld [vmem:[%s0 + $0x348] sm:$0xff]
    %v124 = vld [vmem:[%s0 + $0x350] sm:$0xff]
    %v125 = vld [vmem:[%s0 + $0x358] sm:$0xff]
    %v126 = vld [vmem:[%s0 + $0x360] sm:$0xff]
    %v127 = vld [vmem:[%s0 + $0x368] sm:$0xff]
    %v128 = vld [vmem:[%s0 + $0x370] sm:$0xff]
    %v129 = vld [vmem:[%s0 + $0x378] sm:$0xff]
    %v130 = vld [vmem:[%s0 + $0x380] sm:$0xff]
    %v131 = vld [vmem:[%s0 + $0x388] sm:$0xff]
    %v132 = vld [vmem:[%s0 + $0x390] sm:$0xff]
    %v133 = vld [vmem:[%s0 + $0x398] sm:$0xff]
    %v134 = vld [vmem:[%s0 + $0x3a0] sm:$0xff]
    %v135 = vld [vmem:[%s0 + $0x3a8] sm:$0xff]
    %v136 = vld [vmem:[%s0 + $0x3b0] sm:$0xff]
    %v137 = vld [vmem:[%s0 + $0x3b8] sm:$0xff]
    %v138 = vld [vmem:[%s0 + $0x3c0] sm:$0xff]
    %v139 = vld [vmem:[%s0 + $0x3c8] sm:$0xff]
    %v140 = vld [vmem:[%s0 + $0x3d0] sm:$0xff]
    %v141 = vld [vmem:[%s0 + $0x3d8] sm:$0xff]
    %v142 = vld [vmem:[%s0 + $0x3e0] sm:$0xff]
    %v143 = vld [vmem:[%s0 + $0x3e8] sm:$0xff]
    %v144 = vld [vmem:[%s0 + $0x3f0] sm:$0xff]
    %v145 = vld [vmem:[%s0 + $0x3f8] sm:$0xff]
    %v146 = vld [vmem:[%s0 + $0x400] sm:$0xff]
    %v147 = vld [vmem:[%s0 + $0x408] sm:$0xff]
    %v148 = vld [vmem:[%s0 + $0x410] sm:$0xff]
    %v149 = vld [vmem:[%s0 + $0x418] sm:$0xff]
    %v150 = vld [vmem:[%s0 + $0x420] sm:$0xff]
    %v151 = vld [vmem:[%s0 + $0x428] sm:$0xff]
    %v152 = vld [vmem:[%s0 + $0x430] sm:$0xff]
    %v153 = vld [vmem:[%s0 + $0x438] sm:$0xff]
    %v154 = vld [vmem:[%s0 + $0x440] sm:$0xff]
    %v155 = vld [vmem:[%s0 + $0x448] sm:$0xff]
    %v156 = vld [vmem:[%s0 + $0x450] sm:$0xff]
    %v157 = vld [vmem:[%s0 + $0x458] sm:$0xff]
    %v158 = vld [vmem:[%s0 + $0x460] sm:$0xff]
    %v159 = vld [vmem:[%s0 + $0x468] sm:$0xff]
    %v160 = vld [vmem:[%s0 + $0x470] sm:$0xff]
    %v161 = vld [vmem:[%s0 + $0x478] sm:$0xff]
    %v162 = vld [vmem:[%s0 + $0x480] sm:$0xff]
    %v163 = vld [vmem:[%s0 + $0x488] sm:$0xff]
    %v164 = vld [vmem:[%s0 + $0x490] sm:$0xff]
    %v165 = vld [vmem:[%s0 + $0x498] sm:$0xff]
    %v166 = vld [vmem:[%s0 + $0x4a0] sm:$0xff]
    %v167 = vld [vmem:[%s0 + $0x4a8] sm:$0xff]
    %v168 = vld [vmem:[%s0 + $0x4b0] sm:$0xff]
    %v169 = vld [vmem:[%s0 + $0x4b8] sm:$0xff]
    %v170 = vld [vmem:[%s0 + $0x4c0] sm:$0xff]
    %v171 = vld [vmem:[%s0 + $0x4c8] sm:$0xff]
    %v172 = vld [vmem:[%s0 + $0x4d0] sm:$0xff]
    %v173 = vld [vmem:[%s0 + $0x4d8] sm:$0xff]
    %v174 = vld [vmem:[%s0 + $0x4e0] sm:$0xff]
    %v175 = vld [vmem:[%s0 + $0x4e8] sm:$0xff]
    %v176 = vld [vmem:[%s0 + $0x4f0] sm:$0xff]
    %v177 = vld [vmem:[%s0 + $0x4f8] sm:$0xff]
    %v178 = vld [vmem:[%s0 + $0x500] sm:$0xff]
    %v179 = vld [vmem:[%s0 + $0x508] sm:$0xff]
    %v180 = vld [vmem:[%s0 + $0x510] sm:$0xff]
    %v181 = vld [vmem:[%s0 + $0x518] sm:$0xff]
    %v182 = vld [vmem:[%s0 + $0x520] sm:$0xff]
    %v183 = vld [vmem:[%s0 + $0x528] sm:$0xff]
    %v184 = vld [vmem:[%s0 + $0x530] sm:$0xff]
    %v185 = vld [vmem:[%s0 + $0x538] sm:$0xff]
    %v186 = vld [vmem:[%s0 + $0x540] sm:$0xff]
    %v187 = vld [vmem:[%s0 + $0x548] sm:$0xff]
    %v188 = vld [vmem:[%s0 + $0x550] sm:$0xff]
    %v189 = vld [vmem:[%s0 + $0x558] sm:$0xff]
    %v190 = vld [vmem:[%s0 + $0x560] sm:$0xff]
    %v191 = vld [vmem:[%s0 + $0x568] sm:$0xff]
    %v192 = vld [vmem:[%s0 + $0x570] sm:$0xff]
    %v193 = vld [vmem:[%s0 + $0x578] sm:$0xff]
    %v194 = vld [vmem:[%s0 + $0x580] sm:$0xff]
    %v195 = vld [vmem:[%s0 + $0x588] sm:$0xff]
    %v196 = vld [vmem:[%s0 + $0x590] sm:$0xff]
    %v197 = vld [vmem:[%s0 + $0x598] sm:$0xff]
    %v198 = vld [vmem:[%s0 + $0x5a0] sm:$0xff]
    %v199 = vld [vmem:[%s0 + $0x5a8] sm:$0xff]
    %v200 = vld [vmem:[%s0 + $0x5b0] sm:$0xff]
    %v201 = vld [vmem:[%s0 + $0x5b8] sm:$0xff]
    %v202 = vld [vmem:[%s0 + $0x5c0] sm:$0xff]
    %v203 = vld [vmem:[%s0 + $0x5c8] sm:$0xff]
    %v204 = vld [vmem:[%s0 + $0x5d0] sm:$0xff]
    %v205 = vld [vmem:[%s0 + $0x5d8] sm:$0xff]
    %v206 = vld [vmem:[%s0 + $0x5e0] sm:$0xff]
    %v207 = vld [vmem:[%s0 + $0x5e8] sm:$0xff]
    %v208 = vld [vmem:[%s0 + $0x5f0] sm:$0xff]
    %v209 = vld [vmem:[%s0 + $0x5f8] sm:$0xff]
    %v210 = vld [vmem:[%s0 + $0x600] sm:$0xff]
    %v211 = vld [vmem:[%s0 + $0x608] sm:$0xff]
    %v212 = vld [vmem:[%s0 + $0x610] sm:$0xff]
    %v213 = vld [vmem:[%s0 + $0x618] sm:$0xff]
    %v214 = vld [vmem:[%s0 + $0x620] sm:$0xff]
    %v215 = vld [vmem:[%s0 + $0x628] sm:$0xff]
    %v216 = vld [vmem:[%s0 + $0x630] sm:$0xff]
    %v217 = vld [vmem:[%s0 + $0x638] sm:$0xff]
    %v218 = vld [vmem:[%s0 + $0x640] sm:$0xff]
    %v219 = vld [vmem:[%s0 + $0x648] sm:$0xff]
    %v220 = vld [vmem:[%s0 + $0x650] sm:$0xff]
    %v221 = vld [vmem:[%s0 + $0x658] sm:$0xff]
    %v222 = vld [vmem:[%s0 + $0x660] sm:$0xff]
    %v223 = vld [vmem:[%s0 + $0x668] sm:$0xff]
    %v224 = vld [vmem:[%s0 + $0x670] sm:$0xff]
    %v225 = vld [vmem:[%s0 + $0x678] sm:$0xff]
    %v226 = vld [vmem:[%s0 + $0x680] sm:$0xff]
    %v227 = vld [vmem:[%s0 + $0x688] sm:$0xff]
    %v228 = vld [vmem:[%s0 + $0x690] sm:$0xff]
    %v229 = vld [vmem:[%s0 + $0x698] sm:$0xff]
    %v230 = vld [vmem:[%s0 + $0x6a0] sm:$0xff]
    %v231 = vld [vmem:[%s0 + $0x6a8] sm:$0xff]
    %v232 = vld [vmem:[%s0 + $0x6b0] sm:$0xff]
    %v233 = vld [vmem:[%s0 + $0x6b8] sm:$0xff]
    %v234 = vld [vmem:[%s0 + $0x6c0] sm:$0xff]
    %v235 = vld [vmem:[%s0 + $0x6c8] sm:$0xff]
    %v236 = vld [vmem:[%s0 + $0x6d0] sm:$0xff]
    %v237 = vld [vmem:[%s0 + $0x6d8] sm:$0xff]
    %v238 = vld [vmem:[%s0 + $0x6e0] sm:$0xff]
    %v239 = vld [vmem:[%s0 + $0x6e8] sm:$0xff]
    %v240 = vld [vmem:[%s0 + $0x6f0] sm:$0xff]
    %v241 = vld [vmem:[%s0 + $0x6f8] sm:$0xff]
    %v242 = vld [vmem:[%s0 + $0x700] sm:$0xff]
    %v243 = vld [vmem:[%s0 + $0x708] sm:$0xff]
    %v244 = vld [vmem:[%s0 + $0x710] sm:$0xff]
    %v245 = vld [vmem:[%s0 + $0x718] sm:$0xff]
    %v246 = vld [vmem:[%s0 + $0x720] sm:$0xff]
    %v247 = vld [vmem:[%s0 + $0x728] sm:$0xff]
    %v248 = vld [vmem:[%s0 + $0x730] sm:$0xff]
    %v249 = vld [vmem:[%s0 + $0x738] sm:$0xff]
    %v250 = vld [vmem:[%s0 + $0x740] sm:$0xff]
    %v251 = vld [vmem:[%s0 + $0x748] sm:$0xff]
    %v252 = vld [vmem:[%s0 + $0x750] sm:$0xff]
    %v253 = vld [vmem:[%s0 + $0x758] sm:$0xff]
    %v254 = vld [vmem:[%s0 + $0x760] sm:$0xff]
    %v255 = vld [vmem:[%s0 + $0x768] sm:$0xff]
    %v256 = vld [vmem:[%s0 + $0x770] sm:$0xff]
    %v257 = vld [vmem:[%s0 + $0x778] sm:$0xff]
    %v258 = vld [vmem:[%s0 + $0x780] sm:$0xff]
    %v259 = vld [vmem:[%s0 + $0x788] sm:$0xff]
    %v260 = vld [vmem:[%s0 + $0x790] sm:$0xff]
    %v261 = vld [vmem:[%s0 + $0x798] sm:$0xff]
    %v262 = vld [vmem:[%s0 + $0x7a0] sm:$0xff]
    %v263 = vld [vmem:[%s0 + $0x7a8] sm:$0xff]
    %v264 = vld [vmem:[%s0 + $0x7b0] sm:$0xff]
    %v265 = vld [vmem:[%s0 + $0x7b8] sm:$0xff]
    %v266 = vld [vmem:[%s0 + $0x7c0] sm:$0xff]
    %v267 = vld [vmem:[%s0 + $0x7c8] sm:$0xff]
    %v268 = vld [vmem:[%s0 + $0x7d0] sm:$0xff]
    %v269 = vld [vmem:[%s0 + $0x7d8] sm:$0xff]
    %v270 = vld [vmem:[%s0 + $0x7e0] sm:$0xff]
    %v271 = vld [vmem:[%s0 + $0x7e8] sm:$0xff]
    %v272 = vld [vmem:[%s0 + $0x7f0] sm:$0xff]
    %v273 = vld [vmem:[%s0 + $0x7f8] sm:$0xff]
    %v274 = vld [vmem:[%s0 + $0x800] sm:$0xff]
    %v275 = vld [vmem:[%s0 + $0x808] sm:$0xff]
    %v276 = vld [vmem:[%s0 + $0x810] sm:$0xff]
    %v277 = vld [vmem:[%s0 + $0x818] sm:$0xff]
    %v278 = vld [vmem:[%s0 + $0x820] sm:$0xff]
    %v279 = vld [vmem:[%s0 + $0x828] sm:$0xff]
    %v280 = vld [vmem:[%s0 + $0x830] sm:$0xff]
    %v281 = vld [vmem:[%s0 + $0x838] sm:$0xff]
    %v282 = vld [vmem:[%s0 + $0x840] sm:$0xff]
    %v283 = vld [vmem:[%s0 + $0x848] sm:$0xff]
    %v284 = vld [vmem:[%s0 + $0x850] sm:$0xff]
    %v285 = vld [vmem:[%s0 + $0x858] sm:$0xff]
    %v286 = vld [vmem:[%s0 + $0x860] sm:$0xff]
    %v287 = vld [vmem:[%s0 + $0x868] sm:$0xff]
    %v288 = vld [vmem:[%s0 + $0x870] sm:$0xff]
    %v289 = vld [vmem:[%s0 + $0x878] sm:$0xff]
    %v290 = vld [vmem:[%s0 + $0x880] sm:$0xff]
    %v291 = vld [vmem:[%s0 + $0x888] sm:$0xff]
    %v292 = vld [vmem:[%s0 + $0x890] sm:$0xff]
    %v293 = vld [vmem:[%s0 + $0x898] sm:$0xff]
    %v294 = vld [vmem:[%s0 + $0x8a0] sm:$0xff]
    %v295 = vld [vmem:[%s0 + $0x8a8] sm:$0xff]
    %v296 = vld [vmem:[%s0 + $0x8b0] sm:$0xff]
    %v297 = vld [vmem:[%s0 + $0x8b8] sm:$0xff]
    %v298 = vld [vmem:[%s0 + $0x8c0] sm:$0xff]
    %v299 = vld [vmem:[%s0 + $0x8c8] sm:$0xff]
    %v300 = vld [vmem:[%s0 + $0x8d0] sm:$0xff]
    %v301 = vld [vmem:[%s0 + $0x8d8] sm:$0xff]
    %v302 = vld [vmem:[%s0 + $0x8e0] sm:$0xff]
    %v303 = vld [vmem:[%s0 + $0x8e8] sm:$0xff]
    %v304 = vld [vmem:[%s0 + $0x8f0] sm:$0xff]
    %v305 = vld [vmem:[%s0 + $0x8f8] sm:$0xff]
    %v306 = vld [vmem:[%s0 + $0x900] sm:$0xff]
    %v307 = vld [vmem:[%s0 + $0x908] sm:$0xff]
    %v308 = vld [vmem:[%s0 + $0x910] sm:$0xff]
    %v309 = vld [vmem:[%s0 + $0x918] sm:$0xff]
    %v310 = vld [vmem:[%s0 + $0x920] sm:$0xff]
    %v311 = vld [vmem:[%s0 + $0x928] sm:$0xff]
    %v312 = vld [vmem:[%s0 + $0x930] sm:$0xff]
    %v313 = vld [vmem:[%s0 + $0x938] sm:$0xff]
    %v314 = vld [vmem:[%s0 + $0x940] sm:$0xff]
    %v315 = vld [vmem:[%s0 + $0x948] sm:$0xff]
    %v316 = vld [vmem:[%s0 + $0x950] sm:$0xff]
    %v317 = vld [vmem:[%s0 + $0x958] sm:$0xff]
    %v318 = vld [vmem:[%s0 + $0x960] sm:$0xff]
    %v319 = vld [vmem:[%s0 + $0x968] sm:$0xff]
    %v320 = vld [vmem:[%s0 + $0x970] sm:$0xff]
    %v321 = vld [vmem:[%s0 + $0x978] sm:$0xff]
    %v322 = vld [vmem:[%s0 + $0x980] sm:$0xff]
    %v323 = vld [vmem:[%s0 + $0x988] sm:$0xff]
    %v324 = vld [vmem:[%s0 + $0x990] sm:$0xff]
    %v325 = vld [vmem:[%s0 + $0x998] sm:$0xff]
    %v326 = vld [vmem:[%s0 + $0x9a0] sm:$0xff]
    %v327 = vld [vmem:[%s0 + $0x9a8] sm:$0xff]
    %v328 = vld [vmem:[%s0 + $0x9b0] sm:$0xff]
    %v329 = vld [vmem:[%s0 + $0x9b8] sm:$0xff]
    %v330 = vld [vmem:[%s0 + $0x9c0] sm:$0xff]
    %v331 = vld [vmem:[%s0 + $0x9c8] sm:$0xff]
    %v332 = vld [vmem:[%s0 + $0x9d0] sm:$0xff]
    %v333 = vld [vmem:[%s0 + $0x9d8] sm:$0xff]
    %v334 = vld [vmem:[%s0 + $0x9e0] sm:$0xff]
    %v335 = vld [vmem:[%s0 + $0x9e8] sm:$0xff]
    %v336 = vld [vmem:[%s0 + $0x9f0] sm:$0xff]
    %v337 = vld [vmem:[%s0 + $0x9f8] sm:$0xff]
    %v338 = vld [vmem:[%s0 + $0xa00] sm:$0xff]
    %v339 = vld [vmem:[%s0 + $0xa08] sm:$0xff]
    %v340 = vld [vmem:[%s0 + $0xa10] sm:$0xff]
    %v341 = vld [vmem:[%s0 + $0xa18] sm:$0xff]
    %v342 = vld [vmem:[%s0 + $0xa20] sm:$0xff]
    %v343 = vld [vmem:[%s0 + $0xa28] sm:$0xff]
    %v344 = vld [vmem:[%s0 + $0xa30] sm:$0xff]
    %v345 = vld [vmem:[%s0 + $0xa38] sm:$0xff]
    %v346 = vld [vmem:[%s0 + $0xa40] sm:$0xff]
    %v347 = vld [vmem:[%s0 + $0xa48] sm:$0xff]
    %v348 = vld [vmem:[%s0 + $0xa50] sm:$0xff]
    %v349 = vld [vmem:[%s0 + $0xa58] sm:$0xff]
    %v350 = vld [vmem:[%s0 + $0xa60] sm:$0xff]
    %v351 = vld [vmem:[%s0 + $0xa68] sm:$0xff]
    %v352 = vld [vmem:[%s0 + $0xa70] sm:$0xff]
    %v353 = vld [vmem:[%s0 + $0xa78] sm:$0xff]
    %v354 = vld [vmem:[%s0 + $0xa80] sm:$0xff]
    %v355 = vld [vmem:[%s0 + $0xa88] sm:$0xff]
    %v356 = vld [vmem:[%s0 + $0xa90] sm:$0xff]
    %v357 = vld [vmem:[%s0 + $0xa98] sm:$0xff]
    %v358 = vld [vmem:[%s0 + $0xaa0] sm:$0xff]
    %v359 = vld [vmem:[%s0 + $0xaa8] sm:$0xff]
    %v360 = vld [vmem:[%s0 + $0xab0] sm:$0xff]
    %v361 = vld [vmem:[%s0 + $0xab8] sm:$0xff]
    %v362 = vld [vmem:[%s0 + $0xac0] sm:$0xff]
    %v363 = vld [vmem:[%s0 + $0xac8] sm:$0xff]
    %v364 = vld [vmem:[%s0 + $0xad0] sm:$0xff]
    %v365 = vld [vmem:[%s0 + $0xad8] sm:$0xff]
    %v366 = vld [vmem:[%s0 + $0xae0] sm:$0xff]
    %v367 = vld [vmem:[%s0 + $0xae8] sm:$0xff]
    %v368 = vld [vmem:[%s0 + $0xaf0] sm:$0xff]
    %v369 = vld [vmem:[%s0 + $0xaf8] sm:$0xff]
    %v370 = vld [vmem:[%s0 + $0xb00] sm:$0xff]
    %v371 = vld [vmem:[%s0 + $0xb08] sm:$0xff]
    %v372 = vld [vmem:[%s0 + $0xb10] sm:$0xff]
    %v373 = vld [vmem:[%s0 + $0xb18] sm:$0xff]
    %v374 = vld [vmem:[%s0 + $0xb20] sm:$0xff]
    %v375 = vld [vmem:[%s0 + $0xb28] sm:$0xff]
    %v376 = vld [vmem:[%s0 + $0xb30] sm:$0xff]
    %v377 = vld [vmem:[%s0 + $0xb38] sm:$0xff]
    %v378 = vld [vmem:[%s0 + $0xb40] sm:$0xff]
    %v379 = vld [vmem:[%s0 + $0xb48] sm:$0xff]
    %v380 = vld [vmem:[%s0 + $0xb50] sm:$0xff]
    %v381 = vld [vmem:[%s0 + $0xb58] sm:$0xff]
    %v382 = vld [vmem:[%s0 + $0xb60] sm:$0xff]
    %v383 = vld [vmem:[%s0 + $0xb68] sm:$0xff]
    %v384 = vld [vmem:[%s0 + $0xb70] sm:$0xff]
    %v385 = vld [vmem:[%s0 + $0xb78] sm:$0xff]
    %v386 = vld [vmem:[%s0 + $0xb80] sm:$0xff]
    %v387 = vld [vmem:[%s0 + $0xb88] sm:$0xff]
    %v388 = vld [vmem:[%s0 + $0xb90] sm:$0xff]
    %v389 = vld [vmem:[%s0 + $0xb98] sm:$0xff]
    %v390 = vld [vmem:[%s0 + $0xba0] sm:$0xff]
    %v391 = vld [vmem:[%s0 + $0xba8] sm:$0xff]
    %v392 = vld [vmem:[%s0 + $0xbb0] sm:$0xff]
    %v393 = vld [vmem:[%s0 + $0xbb8] sm:$0xff]
    %v394 = vld [vmem:[%s0 + $0xbc0] sm:$0xff]
    %v395 = vld [vmem:[%s0 + $0xbc8] sm:$0xff]
    %v396 = vld [vmem:[%s0 + $0xbd0] sm:$0xff]
    %v397 = vld [vmem:[%s0 + $0xbd8] sm:$0xff]
    %v398 = vld [vmem:[%s0 + $0xbe0] sm:$0xff]
    %v399 = vld [vmem:[%s0 + $0xbe8] sm:$0xff]
    %v400 = vld [vmem:[%s0 + $0xbf0] sm:$0xff]
    %v401 = vld [vmem:[%s0 + $0xbf8] sm:$0xff]
    %v402 = vld [vmem:[%s1] sm:$0xff]
    %v403 = vld [vmem:[%s1 + $0x8] sm:$0xff]
    %v404 = vld [vmem:[%s1 + $0x10] sm:$0xff]
    %v405 = vld [vmem:[%s1 + $0x18] sm:$0xff]
    %v406 = vld [vmem:[%s1 + $0x20] sm:$0xff]
    %v407 = vld [vmem:[%s1 + $0x28] sm:$0xff]
    %v408 = vld [vmem:[%s1 + $0x30] sm:$0xff]
    %v409 = vld [vmem:[%s1 + $0x38] sm:$0xff]
    %v410 = vld [vmem:[%s1 + $0x40] sm:$0xff]
    %v411 = vld [vmem:[%s1 + $0x48] sm:$0xff]
    %v412 = vld [vmem:[%s1 + $0x50] sm:$0xff]
    %v413 = vld [vmem:[%s1 + $0x58] sm:$0xff]
    %v414 = vld [vmem:[%s1 + $0x60] sm:$0xff]
    %v415 = vld [vmem:[%s1 + $0x68] sm:$0xff]
    %v416 = vld [vmem:[%s1 + $0x70] sm:$0xff]
    %v417 = vld [vmem:[%s1 + $0x78] sm:$0xff]
    %v418 = vld [vmem:[%s1 + $0x80] sm:$0xff]
    %v419 = vld [vmem:[%s1 + $0x88] sm:$0xff]
    %v420 = vld [vmem:[%s1 + $0x90] sm:$0xff]
    %v421 = vld [vmem:[%s1 + $0x98] sm:$0xff]
    %v422 = vld [vmem:[%s1 + $0xa0] sm:$0xff]
    %v423 = vld [vmem:[%s1 + $0xa8] sm:$0xff]
    %v424 = vld [vmem:[%s1 + $0xb0] sm:$0xff]
    %v425 = vld [vmem:[%s1 + $0xb8] sm:$0xff]
    %v426 = vld [vmem:[%s1 + $0xc0] sm:$0xff]
    %v427 = vld [vmem:[%s1 + $0xc8] sm:$0xff]
    %v428 = vld [vmem:[%s1 + $0xd0] sm:$0xff]
    %v429 = vld [vmem:[%s1 + $0xd8] sm:$0xff]
    %v430 = vld [vmem:[%s1 + $0xe0] sm:$0xff]
    %v431 = vld [vmem:[%s1 + $0xe8] sm:$0xff]
    %v432 = vld [vmem:[%s1 + $0xf0] sm:$0xff]
    %v433 = vld [vmem:[%s1 + $0xf8] sm:$0xff]
    %v434 = vld [vmem:[%s1 + $0x100] sm:$0xff]
    %v435 = vld [vmem:[%s1 + $0x108] sm:$0xff]
    %v436 = vld [vmem:[%s1 + $0x110] sm:$0xff]
    %v437 = vld [vmem:[%s1 + $0x118] sm:$0xff]
    %v438 = vld [vmem:[%s1 + $0x120] sm:$0xff]
    %v439 = vld [vmem:[%s1 + $0x128] sm:$0xff]
    %v440 = vld [vmem:[%s1 + $0x130] sm:$0xff]
    %v441 = vld [vmem:[%s1 + $0x138] sm:$0xff]
    %v442 = vld [vmem:[%s1 + $0x140] sm:$0xff]
    %v443 = vld [vmem:[%s1 + $0x148] sm:$0xff]
    %v444 = vld [vmem:[%s1 + $0x150] sm:$0xff]
    %v445 = vld [vmem:[%s1 + $0x158] sm:$0xff]
    %v446 = vld [vmem:[%s1 + $0x160] sm:$0xff]
    %v447 = vld [vmem:[%s1 + $0x168] sm:$0xff]
    %v448 = vld [vmem:[%s1 + $0x170] sm:$0xff]
    %v449 = vld [vmem:[%s1 + $0x178] sm:$0xff]
    %v450 = vld [vmem:[%s1 + $0x180] sm:$0xff]
    %v451 = vld [vmem:[%s1 + $0x188] sm:$0xff]
    %v452 = vld [vmem:[%s1 + $0x190] sm:$0xff]
    %v453 = vld [vmem:[%s1 + $0x198] sm:$0xff]
    %v454 = vld [vmem:[%s1 + $0x1a0] sm:$0xff]
    %v455 = vld [vmem:[%s1 + $0x1a8] sm:$0xff]
    %v456 = vld [vmem:[%s1 + $0x1b0] sm:$0xff]
    %v457 = vld [vmem:[%s1 + $0x1b8] sm:$0xff]
    %v458 = vld [vmem:[%s1 + $0x1c0] sm:$0xff]
    %v459 = vld [vmem:[%s1 + $0x1c8] sm:$0xff]
    %v460 = vld [vmem:[%s1 + $0x1d0] sm:$0xff]
    %v461 = vld [vmem:[%s1 + $0x1d8] sm:$0xff]
    %v462 = vld [vmem:[%s1 + $0x1e0] sm:$0xff]
    %v463 = vld [vmem:[%s1 + $0x1e8] sm:$0xff]
    %v464 = vld [vmem:[%s1 + $0x1f0] sm:$0xff]
    %v465 = vld [vmem:[%s1 + $0x1f8] sm:$0xff]
    %v466 = vld [vmem:[%s1 + $0x200] sm:$0xff]
    %v467 = vld [vmem:[%s1 + $0x208] sm:$0xff]
    %v468 = vld [vmem:[%s1 + $0x210] sm:$0xff]
    %v469 = vld [vmem:[%s1 + $0x218] sm:$0xff]
    %v470 = vld [vmem:[%s1 + $0x220] sm:$0xff]
    %v471 = vld [vmem:[%s1 + $0x228] sm:$0xff]
    %v472 = vld [vmem:[%s1 + $0x230] sm:$0xff]
    %v473 = vld [vmem:[%s1 + $0x238] sm:$0xff]
    %v474 = vld [vmem:[%s1 + $0x240] sm:$0xff]
    %v475 = vld [vmem:[%s1 + $0x248] sm:$0xff]
    %v476 = vld [vmem:[%s1 + $0x250] sm:$0xff]
    %v477 = vld [vmem:[%s1 + $0x258] sm:$0xff]
    %v478 = vld [vmem:[%s1 + $0x260] sm:$0xff]
    %v479 = vld [vmem:[%s1 + $0x268] sm:$0xff]
    %v480 = vld [vmem:[%s1 + $0x270] sm:$0xff]
    %v481 = vld [vmem:[%s1 + $0x278] sm:$0xff]
    %v482 = vld [vmem:[%s1 + $0x280] sm:$0xff]
    %v483 = vld [vmem:[%s1 + $0x288] sm:$0xff]
    %v484 = vld [vmem:[%s1 + $0x290] sm:$0xff]
    %v485 = vld [vmem:[%s1 + $0x298] sm:$0xff]
    %v486 = vld [vmem:[%s1 + $0x2a0] sm:$0xff]
    %v487 = vld [vmem:[%s1 + $0x2a8] sm:$0xff]
    %v488 = vld [vmem:[%s1 + $0x2b0] sm:$0xff]
    %v489 = vld [vmem:[%s1 + $0x2b8] sm:$0xff]
    %v490 = vld [vmem:[%s1 + $0x2c0] sm:$0xff]
    %v491 = vld [vmem:[%s1 + $0x2c8] sm:$0xff]
    %v492 = vld [vmem:[%s1 + $0x2d0] sm:$0xff]
    %v493 = vld [vmem:[%s1 + $0x2d8] sm:$0xff]
    %v494 = vld [vmem:[%s1 + $0x2e0] sm:$0xff]
    %v495 = vld [vmem:[%s1 + $0x2e8] sm:$0xff]
    %v496 = vld [vmem:[%s1 + $0x2f0] sm:$0xff]
    %v497 = vld [vmem:[%s1 + $0x2f8] sm:$0xff]
    %v498 = vld [vmem:[%s1 + $0x300] sm:$0xff]
    %v499 = vld [vmem:[%s1 + $0x308] sm:$0xff]
    %v500 = vld [vmem:[%s1 + $0x310] sm:$0xff]
    %v501 = vld [vmem:[%s1 + $0x318] sm:$0xff]
    %v502 = vld [vmem:[%s1 + $0x320] sm:$0xff]
    %v503 = vld [vmem:[%s1 + $0x328] sm:$0xff]
    %v504 = vld [vmem:[%s1 + $0x330] sm:$0xff]
    %v505 = vld [vmem:[%s1 + $0x338] sm:$0xff]
    %v506 = vld [vmem:[%s1 + $0x340] sm:$0xff]
    %v507 = vld [vmem:[%s1 + $0x348] sm:$0xff]
    %v508 = vld [vmem:[%s1 + $0x350] sm:$0xff]
    %v509 = vld [vmem:[%s1 + $0x358] sm:$0xff]
    %v510 = vld [vmem:[%s1 + $0x360] sm:$0xff]
    %v511 = vld [vmem:[%s1 + $0x368] sm:$0xff]
    %v512 = vld [vmem:[%s1 + $0x370] sm:$0xff]
    %v513 = vld [vmem:[%s1 + $0x378] sm:$0xff]
    %v514 = vld [vmem:[%s1 + $0x380] sm:$0xff]
    %v515 = vld [vmem:[%s1 + $0x388] sm:$0xff]
    %v516 = vld [vmem:[%s1 + $0x390] sm:$0xff]
    %v517 = vld [vmem:[%s1 + $0x398] sm:$0xff]
    %v518 = vld [vmem:[%s1 + $0x3a0] sm:$0xff]
    %v519 = vld [vmem:[%s1 + $0x3a8] sm:$0xff]
    %v520 = vld [vmem:[%s1 + $0x3b0] sm:$0xff]
    %v521 = vld [vmem:[%s1 + $0x3b8] sm:$0xff]
    %v522 = vld [vmem:[%s1 + $0x3c0] sm:$0xff]
    %v523 = vld [vmem:[%s1 + $0x3c8] sm:$0xff]
    %v524 = vld [vmem:[%s1 + $0x3d0] sm:$0xff]
    %v525 = vld [vmem:[%s1 + $0x3d8] sm:$0xff]
    %v526 = vld [vmem:[%s1 + $0x3e0] sm:$0xff]
    %v527 = vld [vmem:[%s1 + $0x3e8] sm:$0xff]
    %v528 = vld [vmem:[%s1 + $0x3f0] sm:$0xff]
    %v529 = vld [vmem:[%s1 + $0x3f8] sm:$0xff]
    %v530 = vld [vmem:[%s1 + $0x400] sm:$0xff]
    %v531 = vld [vmem:[%s1 + $0x408] sm:$0xff]
    %v532 = vld [vmem:[%s1 + $0x410] sm:$0xff]
    %v533 = vld [vmem:[%s1 + $0x418] sm:$0xff]
    %v534 = vld [vmem:[%s1 + $0x420] sm:$0xff]
    %v535 = vld [vmem:[%s1 + $0x428] sm:$0xff]
    %v536 = vld [vmem:[%s1 + $0x430] sm:$0xff]
    %v537 = vld [vmem:[%s1 + $0x438] sm:$0xff]
    %v538 = vld [vmem:[%s1 + $0x440] sm:$0xff]
    %v539 = vld [vmem:[%s1 + $0x448] sm:$0xff]
    %v540 = vld [vmem:[%s1 + $0x450] sm:$0xff]
    %v541 = vld [vmem:[%s1 + $0x458] sm:$0xff]
    %v542 = vld [vmem:[%s1 + $0x460] sm:$0xff]
    %v543 = vld [vmem:[%s1 + $0x468] sm:$0xff]
    %v544 = vld [vmem:[%s1 + $0x470] sm:$0xff]
    %v545 = vld [vmem:[%s1 + $0x478] sm:$0xff]
    %v546 = vld [vmem:[%s1 + $0x480] sm:$0xff]
    %v547 = vld [vmem:[%s1 + $0x488] sm:$0xff]
    %v548 = vld [vmem:[%s1 + $0x490] sm:$0xff]
    %v549 = vld [vmem:[%s1 + $0x498] sm:$0xff]
    %v550 = vld [vmem:[%s1 + $0x4a0] sm:$0xff]
    %v551 = vld [vmem:[%s1 + $0x4a8] sm:$0xff]
    %v552 = vld [vmem:[%s1 + $0x4b0] sm:$0xff]
    %v553 = vld [vmem:[%s1 + $0x4b8] sm:$0xff]
    %v554 = vld [vmem:[%s1 + $0x4c0] sm:$0xff]
    %v555 = vld [vmem:[%s1 + $0x4c8] sm:$0xff]
    %v556 = vld [vmem:[%s1 + $0x4d0] sm:$0xff]
    %v557 = vld [vmem:[%s1 + $0x4d8] sm:$0xff]
    %v558 = vld [vmem:[%s1 + $0x4e0] sm:$0xff]
    %v559 = vld [vmem:[%s1 + $0x4e8] sm:$0xff]
    %v560 = vld [vmem:[%s1 + $0x4f0] sm:$0xff]
    %v561 = vld [vmem:[%s1 + $0x4f8] sm:$0xff]
    %v562 = vld [vmem:[%s1 + $0x500] sm:$0xff]
    %v563 = vld [vmem:[%s1 + $0x508] sm:$0xff]
    %v564 = vld [vmem:[%s1 + $0x510] sm:$0xff]
    %v565 = vld [vmem:[%s1 + $0x518] sm:$0xff]
    %v566 = vld [vmem:[%s1 + $0x520] sm:$0xff]
    %v567 = vld [vmem:[%s1 + $0x528] sm:$0xff]
    %v568 = vld [vmem:[%s1 + $0x530] sm:$0xff]
    %v569 = vld [vmem:[%s1 + $0x538] sm:$0xff]
    %v570 = vld [vmem:[%s1 + $0x540] sm:$0xff]
    %v571 = vld [vmem:[%s1 + $0x548] sm:$0xff]
    %v572 = vld [vmem:[%s1 + $0x550] sm:$0xff]
    %v573 = vld [vmem:[%s1 + $0x558] sm:$0xff]
    %v574 = vld [vmem:[%s1 + $0x560] sm:$0xff]
    %v575 = vld [vmem:[%s1 + $0x568] sm:$0xff]
    %v576 = vld [vmem:[%s1 + $0x570] sm:$0xff]
    %v577 = vld [vmem:[%s1 + $0x578] sm:$0xff]
    %v578 = vld [vmem:[%s1 + $0x580] sm:$0xff]
    %v579 = vld [vmem:[%s1 + $0x588] sm:$0xff]
    %v580 = vld [vmem:[%s1 + $0x590] sm:$0xff]
    %v581 = vld [vmem:[%s1 + $0x598] sm:$0xff]
    %v582 = vld [vmem:[%s1 + $0x5a0] sm:$0xff]
    %v583 = vld [vmem:[%s1 + $0x5a8] sm:$0xff]
    %v584 = vld [vmem:[%s1 + $0x5b0] sm:$0xff]
    %v585 = vld [vmem:[%s1 + $0x5b8] sm:$0xff]
    %v586 = vld [vmem:[%s1 + $0x5c0] sm:$0xff]
    %v587 = vld [vmem:[%s1 + $0x5c8] sm:$0xff]
    %v588 = vld [vmem:[%s1 + $0x5d0] sm:$0xff]
    %v589 = vld [vmem:[%s1 + $0x5d8] sm:$0xff]
    %v590 = vld [vmem:[%s1 + $0x5e0] sm:$0xff]
    %v591 = vld [vmem:[%s1 + $0x5e8] sm:$0xff]
    %v592 = vld [vmem:[%s1 + $0x5f0] sm:$0xff]
    %v593 = vld [vmem:[%s1 + $0x5f8] sm:$0xff]
    %v594 = vld [vmem:[%s1 + $0x600] sm:$0xff]
    %v595 = vld [vmem:[%s1 + $0x608] sm:$0xff]
    %v596 = vld [vmem:[%s1 + $0x610] sm:$0xff]
    %v597 = vld [vmem:[%s1 + $0x618] sm:$0xff]
    %v598 = vld [vmem:[%s1 + $0x620] sm:$0xff]
    %v599 = vld [vmem:[%s1 + $0x628] sm:$0xff]
    %v600 = vld [vmem:[%s1 + $0x630] sm:$0xff]
    %v601 = vld [vmem:[%s1 + $0x638] sm:$0xff]
    %v602 = vld [vmem:[%s1 + $0x640] sm:$0xff]
    %v603 = vld [vmem:[%s1 + $0x648] sm:$0xff]
    %v604 = vld [vmem:[%s1 + $0x650] sm:$0xff]
    %v605 = vld [vmem:[%s1 + $0x658] sm:$0xff]
    %v606 = vld [vmem:[%s1 + $0x660] sm:$0xff]
    %v607 = vld [vmem:[%s1 + $0x668] sm:$0xff]
    %v608 = vld [vmem:[%s1 + $0x670] sm:$0xff]
    %v609 = vld [vmem:[%s1 + $0x678] sm:$0xff]
    %v610 = vld [vmem:[%s1 + $0x680] sm:$0xff]
    %v611 = vld [vmem:[%s1 + $0x688] sm:$0xff]
    %v612 = vld [vmem:[%s1 + $0x690] sm:$0xff]
    %v613 = vld [vmem:[%s1 + $0x698] sm:$0xff]
    %v614 = vld [vmem:[%s1 + $0x6a0] sm:$0xff]
    %v615 = vld [vmem:[%s1 + $0x6a8] sm:$0xff]
    %v616 = vld [vmem:[%s1 + $0x6b0] sm:$0xff]
    %v617 = vld [vmem:[%s1 + $0x6b8] sm:$0xff]
    %v618 = vld [vmem:[%s1 + $0x6c0] sm:$0xff]
    %v619 = vld [vmem:[%s1 + $0x6c8] sm:$0xff]
    %v620 = vld [vmem:[%s1 + $0x6d0] sm:$0xff]
    %v621 = vld [vmem:[%s1 + $0x6d8] sm:$0xff]
    %v622 = vld [vmem:[%s1 + $0x6e0] sm:$0xff]
    %v623 = vld [vmem:[%s1 + $0x6e8] sm:$0xff]
    %v624 = vld [vmem:[%s1 + $0x6f0] sm:$0xff]
    %v625 = vld [vmem:[%s1 + $0x6f8] sm:$0xff]
    %v626 = vld [vmem:[%s1 + $0x700] sm:$0xff]
    %v627 = vld [vmem:[%s1 + $0x708] sm:$0xff]
    %v628 = vld [vmem:[%s1 + $0x710] sm:$0xff]
    %v629 = vld [vmem:[%s1 + $0x718] sm:$0xff]
    %v630 = vld [vmem:[%s1 + $0x720] sm:$0xff]
    %v631 = vld [vmem:[%s1 + $0x728] sm:$0xff]
    %v632 = vld [vmem:[%s1 + $0x730] sm:$0xff]
    %v633 = vld [vmem:[%s1 + $0x738] sm:$0xff]
    %v634 = vld [vmem:[%s1 + $0x740] sm:$0xff]
    %v635 = vld [vmem:[%s1 + $0x748] sm:$0xff]
    %v636 = vld [vmem:[%s1 + $0x750] sm:$0xff]
    %v637 = vld [vmem:[%s1 + $0x758] sm:$0xff]
    %v638 = vld [vmem:[%s1 + $0x760] sm:$0xff]
    %v639 = vld [vmem:[%s1 + $0x768] sm:$0xff]
    %v640 = vld [vmem:[%s1 + $0x770] sm:$0xff]
    %v641 = vld [vmem:[%s1 + $0x778] sm:$0xff]
    %v642 = vld [vmem:[%s1 + $0x780] sm:$0xff]
    %v643 = vld [vmem:[%s1 + $0x788] sm:$0xff]
    %v644 = vld [vmem:[%s1 + $0x790] sm:$0xff]
    %v645 = vld [vmem:[%s1 + $0x798] sm:$0xff]
    %v646 = vld [vmem:[%s1 + $0x7a0] sm:$0xff]
    %v647 = vld [vmem:[%s1 + $0x7a8] sm:$0xff]
    %v648 = vld [vmem:[%s1 + $0x7b0] sm:$0xff]
    %v649 = vld [vmem:[%s1 + $0x7b8] sm:$0xff]
    %v650 = vld [vmem:[%s1 + $0x7c0] sm:$0xff]
    %v651 = vld [vmem:[%s1 + $0x7c8] sm:$0xff]
    %v652 = vld [vmem:[%s1 + $0x7d0] sm:$0xff]
    %v653 = vld [vmem:[%s1 + $0x7d8] sm:$0xff]
    %v654 = vld [vmem:[%s1 + $0x7e0] sm:$0xff]
    %v655 = vld [vmem:[%s1 + $0x7e8] sm:$0xff]
    %v656 = vld [vmem:[%s1 + $0x7f0] sm:$0xff]
    %v657 = vld [vmem:[%s1 + $0x7f8] sm:$0xff]
    %v658 = vld [vmem:[%s1 + $0x800] sm:$0xff]
    %v659 = vld [vmem:[%s1 + $0x808] sm:$0xff]
    %v660 = vld [vmem:[%s1 + $0x810] sm:$0xff]
    %v661 = vld [vmem:[%s1 + $0x818] sm:$0xff]
    %v662 = vld [vmem:[%s1 + $0x820] sm:$0xff]
    %v663 = vld [vmem:[%s1 + $0x828] sm:$0xff]
    %v664 = vld [vmem:[%s1 + $0x830] sm:$0xff]
    %v665 = vld [vmem:[%s1 + $0x838] sm:$0xff]
    %v666 = vld [vmem:[%s1 + $0x840] sm:$0xff]
    %v667 = vld [vmem:[%s1 + $0x848] sm:$0xff]
    %v668 = vld [vmem:[%s1 + $0x850] sm:$0xff]
    %v669 = vld [vmem:[%s1 + $0x858] sm:$0xff]
    %v670 = vld [vmem:[%s1 + $0x860] sm:$0xff]
    %v671 = vld [vmem:[%s1 + $0x868] sm:$0xff]
    %v672 = vld [vmem:[%s1 + $0x870] sm:$0xff]
    %v673 = vld [vmem:[%s1 + $0x878] sm:$0xff]
    %v674 = vld [vmem:[%s1 + $0x880] sm:$0xff]
    %v675 = vld [vmem:[%s1 + $0x888] sm:$0xff]
    %v676 = vld [vmem:[%s1 + $0x890] sm:$0xff]
    %v677 = vld [vmem:[%s1 + $0x898] sm:$0xff]
    %v678 = vld [vmem:[%s1 + $0x8a0] sm:$0xff]
    %v679 = vld [vmem:[%s1 + $0x8a8] sm:$0xff]
    %v680 = vld [vmem:[%s1 + $0x8b0] sm:$0xff]
    %v681 = vld [vmem:[%s1 + $0x8b8] sm:$0xff]
    %v682 = vld [vmem:[%s1 + $0x8c0] sm:$0xff]
    %v683 = vld [vmem:[%s1 + $0x8c8] sm:$0xff]
    %v684 = vld [vmem:[%s1 + $0x8d0] sm:$0xff]
    %v685 = vld [vmem:[%s1 + $0x8d8] sm:$0xff]
    %v686 = vld [vmem:[%s1 + $0x8e0] sm:$0xff]
    %v687 = vld [vmem:[%s1 + $0x8e8] sm:$0xff]
    %v688 = vld [vmem:[%s1 + $0x8f0] sm:$0xff]
    %v689 = vld [vmem:[%s1 + $0x8f8] sm:$0xff]
    %v690 = vld [vmem:[%s1 + $0x900] sm:$0xff]
    %v691 = vld [vmem:[%s1 + $0x908] sm:$0xff]
    %v692 = vld [vmem:[%s1 + $0x910] sm:$0xff]
    %v693 = vld [vmem:[%s1 + $0x918] sm:$0xff]
    %v694 = vld [vmem:[%s1 + $0x920] sm:$0xff]
    %v695 = vld [vmem:[%s1 + $0x928] sm:$0xff]
    %v696 = vld [vmem:[%s1 + $0x930] sm:$0xff]
    %v697 = vld [vmem:[%s1 + $0x938] sm:$0xff]
    %v698 = vld [vmem:[%s1 + $0x940] sm:$0xff]
    %v699 = vld [vmem:[%s1 + $0x948] sm:$0xff]
    %v700 = vld [vmem:[%s1 + $0x950] sm:$0xff]
    %v701 = vld [vmem:[%s1 + $0x958] sm:$0xff]
    %v702 = vld [vmem:[%s1 + $0x960] sm:$0xff]
    %v703 = vld [vmem:[%s1 + $0x968] sm:$0xff]
    %v704 = vld [vmem:[%s1 + $0x970] sm:$0xff]
    %v705 = vld [vmem:[%s1 + $0x978] sm:$0xff]
    %v706 = vld [vmem:[%s1 + $0x980] sm:$0xff]
    %v707 = vld [vmem:[%s1 + $0x988] sm:$0xff]
    %v708 = vld [vmem:[%s1 + $0x990] sm:$0xff]
    %v709 = vld [vmem:[%s1 + $0x998] sm:$0xff]
    %v710 = vld [vmem:[%s1 + $0x9a0] sm:$0xff]
    %v711 = vld [vmem:[%s1 + $0x9a8] sm:$0xff]
    %v712 = vld [vmem:[%s1 + $0x9b0] sm:$0xff]
    %v713 = vld [vmem:[%s1 + $0x9b8] sm:$0xff]
    %v714 = vld [vmem:[%s1 + $0x9c0] sm:$0xff]
    %v715 = vld [vmem:[%s1 + $0x9c8] sm:$0xff]
    %v716 = vld [vmem:[%s1 + $0x9d0] sm:$0xff]
    %v717 = vld [vmem:[%s1 + $0x9d8] sm:$0xff]
    %v718 = vld [vmem:[%s1 + $0x9e0] sm:$0xff]
    %v719 = vld [vmem:[%s1 + $0x9e8] sm:$0xff]
    %v720 = vld [vmem:[%s1 + $0x9f0] sm:$0xff]
    %v721 = vld [vmem:[%s1 + $0x9f8] sm:$0xff]
    %v722 = vld [vmem:[%s1 + $0xa00] sm:$0xff]
    %v723 = vld [vmem:[%s1 + $0xa08] sm:$0xff]
    %v724 = vld [vmem:[%s1 + $0xa10] sm:$0xff]
    %v725 = vld [vmem:[%s1 + $0xa18] sm:$0xff]
    %v726 = vld [vmem:[%s1 + $0xa20] sm:$0xff]
    %v727 = vld [vmem:[%s1 + $0xa28] sm:$0xff]
    %v728 = vld [vmem:[%s1 + $0xa30] sm:$0xff]
    %v729 = vld [vmem:[%s1 + $0xa38] sm:$0xff]
    %v730 = vld [vmem:[%s1 + $0xa40] sm:$0xff]
    %v731 = vld [vmem:[%s1 + $0xa48] sm:$0xff]
    %v732 = vld [vmem:[%s1 + $0xa50] sm:$0xff]
    %v733 = vld [vmem:[%s1 + $0xa58] sm:$0xff]
    %v734 = vld [vmem:[%s1 + $0xa60] sm:$0xff]
    %v735 = vld [vmem:[%s1 + $0xa68] sm:$0xff]
    %v736 = vld [vmem:[%s1 + $0xa70] sm:$0xff]
    %v737 = vld [vmem:[%s1 + $0xa78] sm:$0xff]
    %v738 = vld [vmem:[%s1 + $0xa80] sm:$0xff]
    %v739 = vld [vmem:[%s1 + $0xa88] sm:$0xff]
    %v740 = vld [vmem:[%s1 + $0xa90] sm:$0xff]
    %v741 = vld [vmem:[%s1 + $0xa98] sm:$0xff]
    %v742 = vld [vmem:[%s1 + $0xaa0] sm:$0xff]
    %v743 = vld [vmem:[%s1 + $0xaa8] sm:$0xff]
    %v744 = vld [vmem:[%s1 + $0xab0] sm:$0xff]
    %v745 = vld [vmem:[%s1 + $0xab8] sm:$0xff]
    %v746 = vld [vmem:[%s1 + $0xac0] sm:$0xff]
    %v747 = vld [vmem:[%s1 + $0xac8] sm:$0xff]
    %v748 = vld [vmem:[%s1 + $0xad0] sm:$0xff]
    %v749 = vld [vmem:[%s1 + $0xad8] sm:$0xff]
    %v750 = vld [vmem:[%s1 + $0xae0] sm:$0xff]
    %v751 = vld [vmem:[%s1 + $0xae8] sm:$0xff]
    %v752 = vld [vmem:[%s1 + $0xaf0] sm:$0xff]
    %v753 = vld [vmem:[%s1 + $0xaf8] sm:$0xff]
    %v754 = vld [vmem:[%s1 + $0xb00] sm:$0xff]
    %v755 = vld [vmem:[%s1 + $0xb08] sm:$0xff]
    %v756 = vld [vmem:[%s1 + $0xb10] sm:$0xff]
    %v757 = vld [vmem:[%s1 + $0xb18] sm:$0xff]
    %v758 = vld [vmem:[%s1 + $0xb20] sm:$0xff]
    %v759 = vld [vmem:[%s1 + $0xb28] sm:$0xff]
    %v760 = vld [vmem:[%s1 + $0xb30] sm:$0xff]
    %v761 = vld [vmem:[%s1 + $0xb38] sm:$0xff]
    %v762 = vld [vmem:[%s1 + $0xb40] sm:$0xff]
    %v763 = vld [vmem:[%s1 + $0xb48] sm:$0xff]
    %v764 = vld [vmem:[%s1 + $0xb50] sm:$0xff]
    %v765 = vld [vmem:[%s1 + $0xb58] sm:$0xff]
    %v766 = vld [vmem:[%s1 + $0xb60] sm:$0xff]
    %v767 = vld [vmem:[%s1 + $0xb68] sm:$0xff]
    %v768 = vld [vmem:[%s1 + $0xb70] sm:$0xff]
    %v769 = vld [vmem:[%s1 + $0xb78] sm:$0xff]
    %v770 = vld [vmem:[%s1 + $0xb80] sm:$0xff]
    %v771 = vld [vmem:[%s1 + $0xb88] sm:$0xff]
    %v772 = vld [vmem:[%s1 + $0xb90] sm:$0xff]
    %v773 = vld [vmem:[%s1 + $0xb98] sm:$0xff]
    %v774 = vld [vmem:[%s1 + $0xba0] sm:$0xff]
    %v775 = vld [vmem:[%s1 + $0xba8] sm:$0xff]
    %v776 = vld [vmem:[%s1 + $0xbb0] sm:$0xff]
    %v777 = vld [vmem:[%s1 + $0xbb8] sm:$0xff]
    %v778 = vld [vmem:[%s1 + $0xbc0] sm:$0xff]
    %v779 = vld [vmem:[%s1 + $0xbc8] sm:$0xff]
    %v780 = vld [vmem:[%s1 + $0xbd0] sm:$0xff]
    %v781 = vld [vmem:[%s1 + $0xbd8] sm:$0xff]
    %v782 = vld [vmem:[%s1 + $0xbe0] sm:$0xff]
    %v783 = vld [vmem:[%s1 + $0xbe8] sm:$0xff]
    %v784 = vld [vmem:[%s1 + $0xbf0] sm:$0xff]
    %v785 = vld [vmem:[%s1 + $0xbf8] sm:$0xff]
    %v786 = vld [vmem:[%s1 + $0xc00] sm:$0xff]
    %v787 = vld [vmem:[%s1 + $0xc08] sm:$0xff]
    %v788 = vld [vmem:[%s1 + $0xc10] sm:$0xff]
    %v789 = vld [vmem:[%s1 + $0xc18] sm:$0xff]
    %v790 = vld [vmem:[%s1 + $0xc20] sm:$0xff]
    %v791 = vld [vmem:[%s1 + $0xc28] sm:$0xff]
    %v792 = vld [vmem:[%s1 + $0xc30] sm:$0xff]
    %v793 = vld [vmem:[%s1 + $0xc38] sm:$0xff]
    %v794 = vld [vmem:[%s1 + $0xc40] sm:$0xff]
    %v795 = vld [vmem:[%s1 + $0xc48] sm:$0xff]
    %v796 = vld [vmem:[%s1 + $0xc50] sm:$0xff]
    %v797 = vld [vmem:[%s1 + $0xc58] sm:$0xff]
    %v798 = vld [vmem:[%s1 + $0xc60] sm:$0xff]
    %v799 = vld [vmem:[%s1 + $0xc68] sm:$0xff]
    %v800 = vld [vmem:[%s1 + $0xc70] sm:$0xff]
    %v801 = vld [vmem:[%s1 + $0xc78] sm:$0xff]
    %v802 = vld [vmem:[%s1 + $0xc80] sm:$0xff]
    %v803 = vld [vmem:[%s1 + $0xc88] sm:$0xff]
    %v804 = vld [vmem:[%s1 + $0xc90] sm:$0xff]
    %v805 = vld [vmem:[%s1 + $0xc98] sm:$0xff]
    %v806 = vld [vmem:[%s1 + $0xca0] sm:$0xff]
    %v807 = vld [vmem:[%s1 + $0xca8] sm:$0xff]
    %v808 = vld [vmem:[%s1 + $0xcb0] sm:$0xff]
    %v809 = vld [vmem:[%s1 + $0xcb8] sm:$0xff]
    %v810 = vld [vmem:[%s1 + $0xcc0] sm:$0xff]
    %v811 = vld [vmem:[%s1 + $0xcc8] sm:$0xff]
    %v812 = vld [vmem:[%s1 + $0xcd0] sm:$0xff]
    %v813 = vld [vmem:[%s1 + $0xcd8] sm:$0xff]
    %v814 = vld [vmem:[%s1 + $0xce0] sm:$0xff]
    %v815 = vld [vmem:[%s1 + $0xce8] sm:$0xff]
    %v816 = vld [vmem:[%s1 + $0xcf0] sm:$0xff]
    %v817 = vld [vmem:[%s1 + $0xcf8] sm:$0xff]
    %v818 = vld [vmem:[%s1 + $0xd00] sm:$0xff]
    %v819 = vld [vmem:[%s1 + $0xd08] sm:$0xff]
    %v820 = vld [vmem:[%s1 + $0xd10] sm:$0xff]
    %v821 = vld [vmem:[%s1 + $0xd18] sm:$0xff]
    %v822 = vld [vmem:[%s1 + $0xd20] sm:$0xff]
    %v823 = vld [vmem:[%s1 + $0xd28] sm:$0xff]
    %v824 = vld [vmem:[%s1 + $0xd30] sm:$0xff]
    %v825 = vld [vmem:[%s1 + $0xd38] sm:$0xff]
    %v826 = vld [vmem:[%s1 + $0xd40] sm:$0xff]
    %v827 = vld [vmem:[%s1 + $0xd48] sm:$0xff]
    %v828 = vld [vmem:[%s1 + $0xd50] sm:$0xff]
    %v829 = vld [vmem:[%s1 + $0xd58] sm:$0xff]
    %v830 = vld [vmem:[%s1 + $0xd60] sm:$0xff]
    %v831 = vld [vmem:[%s1 + $0xd68] sm:$0xff]
    %v832 = vld [vmem:[%s1 + $0xd70] sm:$0xff]
    %v833 = vld [vmem:[%s1 + $0xd78] sm:$0xff]
    %v834 = vld [vmem:[%s1 + $0xd80] sm:$0xff]
    %v835 = vld [vmem:[%s1 + $0xd88] sm:$0xff]
    %v836 = vld [vmem:[%s1 + $0xd90] sm:$0xff]
    %v837 = vld [vmem:[%s1 + $0xd98] sm:$0xff]
    %v838 = vld [vmem:[%s1 + $0xda0] sm:$0xff]
    %v839 = vld [vmem:[%s1 + $0xda8] sm:$0xff]
    %v840 = vld [vmem:[%s1 + $0xdb0] sm:$0xff]
    %v841 = vld [vmem:[%s1 + $0xdb8] sm:$0xff]
    %v842 = vld [vmem:[%s1 + $0xdc0] sm:$0xff]
    %v843 = vld [vmem:[%s1 + $0xdc8] sm:$0xff]
    %v844 = vld [vmem:[%s1 + $0xdd0] sm:$0xff]
    %v845 = vld [vmem:[%s1 + $0xdd8] sm:$0xff]
    %v846 = vld [vmem:[%s1 + $0xde0] sm:$0xff]
    %v847 = vld [vmem:[%s1 + $0xde8] sm:$0xff]
    %v848 = vld [vmem:[%s1 + $0xdf0] sm:$0xff]
    %v849 = vld [vmem:[%s1 + $0xdf8] sm:$0xff]
    %v850 = vld [vmem:[%s1 + $0xe00] sm:$0xff]
    %v851 = vld [vmem:[%s1 + $0xe08] sm:$0xff]
    %v852 = vld [vmem:[%s1 + $0xe10] sm:$0xff]
    %v853 = vld [vmem:[%s1 + $0xe18] sm:$0xff]
    %v854 = vld [vmem:[%s1 + $0xe20] sm:$0xff]
    %v855 = vld [vmem:[%s1 + $0xe28] sm:$0xff]
    %v856 = vld [vmem:[%s1 + $0xe30] sm:$0xff]
    %v857 = vld [vmem:[%s1 + $0xe38] sm:$0xff]
    %v858 = vld [vmem:[%s1 + $0xe40] sm:$0xff]
    %v859 = vld [vmem:[%s1 + $0xe48] sm:$0xff]
    %v860 = vld [vmem:[%s1 + $0xe50] sm:$0xff]
    %v861 = vld [vmem:[%s1 + $0xe58] sm:$0xff]
    %v862 = vld [vmem:[%s1 + $0xe60] sm:$0xff]
    %v863 = vld [vmem:[%s1 + $0xe68] sm:$0xff]
    %v864 = vld [vmem:[%s1 + $0xe70] sm:$0xff]
    %v865 = vld [vmem:[%s1 + $0xe78] sm:$0xff]
    %v866 = vld [vmem:[%s1 + $0xe80] sm:$0xff]
    %v867 = vld [vmem:[%s1 + $0xe88] sm:$0xff]
    %v868 = vld [vmem:[%s1 + $0xe90] sm:$0xff]
    %v869 = vld [vmem:[%s1 + $0xe98] sm:$0xff]
    %v870 = vld [vmem:[%s1 + $0xea0] sm:$0xff]
    %v871 = vld [vmem:[%s1 + $0xea8] sm:$0xff]
    %v872 = vld [vmem:[%s1 + $0xeb0] sm:$0xff]
    %v873 = vld [vmem:[%s1 + $0xeb8] sm:$0xff]
    %v874 = vld [vmem:[%s1 + $0xec0] sm:$0xff]
    %v875 = vld [vmem:[%s1 + $0xec8] sm:$0xff]
    %v876 = vld [vmem:[%s1 + $0xed0] sm:$0xff]
    %v877 = vld [vmem:[%s1 + $0xed8] sm:$0xff]
    %v878 = vld [vmem:[%s1 + $0xee0] sm:$0xff]
    %v879 = vld [vmem:[%s1 + $0xee8] sm:$0xff]
    %v880 = vld [vmem:[%s1 + $0xef0] sm:$0xff]
    %v881 = vld [vmem:[%s1 + $0xef8] sm:$0xff]
    %v882 = vld [vmem:[%s1 + $0xf00] sm:$0xff]
    %v883 = vld [vmem:[%s1 + $0xf08] sm:$0xff]
    %v884 = vld [vmem:[%s1 + $0xf10] sm:$0xff]
    %v885 = vld [vmem:[%s1 + $0xf18] sm:$0xff]
    %v886 = vld [vmem:[%s1 + $0xf20] sm:$0xff]
    %v887 = vld [vmem:[%s1 + $0xf28] sm:$0xff]
    %v888 = vld [vmem:[%s1 + $0xf30] sm:$0xff]
    %v889 = vld [vmem:[%s1 + $0xf38] sm:$0xff]
    %v890 = vld [vmem:[%s1 + $0xf40] sm:$0xff]
    %v891 = vld [vmem:[%s1 + $0xf48] sm:$0xff]
    %v892 = vld [vmem:[%s1 + $0xf50] sm:$0xff]
    %v893 = vld [vmem:[%s1 + $0xf58] sm:$0xff]
    %v894 = vld [vmem:[%s1 + $0xf60] sm:$0xff]
    %v895 = vld [vmem:[%s1 + $0xf68] sm:$0xff]
    %v896 = vld [vmem:[%s1 + $0xf70] sm:$0xff]
    %v897 = vld [vmem:[%s1 + $0xf78] sm:$0xff]
    %v898 = vld [vmem:[%s1 + $0xf80] sm:$0xff]
    %v899 = vld [vmem:[%s1 + $0xf88] sm:$0xff]
    %v900 = vld [vmem:[%s1 + $0xf90] sm:$0xff]
    %v901 = vld [vmem:[%s1 + $0xf98] sm:$0xff]
    %v902 = vld [vmem:[%s1 + $0xfa0] sm:$0xff]
    %v903 = vld [vmem:[%s1 + $0xfa8] sm:$0xff]
    %v904 = vld [vmem:[%s1 + $0xfb0] sm:$0xff]
    %v905 = vld [vmem:[%s1 + $0xfb8] sm:$0xff]
    %v906 = vld [vmem:[%s1 + $0xfc0] sm:$0xff]
    %v907 = vld [vmem:[%s1 + $0xfc8] sm:$0xff]
    %v908 = vld [vmem:[%s1 + $0xfd0] sm:$0xff]
    %v909 = vld [vmem:[%s1 + $0xfd8] sm:$0xff]
    %v910 = vld [vmem:[%s1 + $0xfe0] sm:$0xff]
    %v911 = vld [vmem:[%s1 + $0xfe8] sm:$0xff]
    %v912 = vld [vmem:[%s1 + $0xff0] sm:$0xff]
    %v913 = vld [vmem:[%s1 + $0xff8] sm:$0xff]
    %914 = vmatpush.xpose.msra.mxu0 0.0
    %915 = vmatpush.xpose.msra.mxu0 0.0
    %916 = vmatpush.xpose.msra.mxu0 0.0
    %917 = vmatpush.xpose.msra.mxu0 0.0
    %918 = vmatpush.xpose.msra.mxu0 0.0
    %919 = vmatpush.xpose.msra.mxu0 0.0
    %920 = vmatpush.xpose.msra.mxu0 0.0
    %921 = vmatpush.xpose.msra.mxu0 0.0
    %922 = vmatpush.xpose.msra.mxu0 0.0
    %923 = vmatpush.xpose.msra.mxu0 0.0
    %924 = vmatpush.xpose.msra.mxu0 0.0
    %925 = vmatpush.xpose.msra.mxu0 0.0
    %926 = vmatpush.xpose.msra.mxu0 %v786
    %927 = vmatpush.xpose.msra.mxu0 %v658
    %928 = vmatpush.xpose.msra.mxu0 %v530
    %929 = vmatpush.xpose.msra.mxu0 %v402
    %930 = vmatmul.f32.gmra.mxu0 %v18
    %v931 = vpop.f32.mrf.mxu0
    %v932 = vadd.f32 0.0, %v931
    %933 = vmatmul.f32.gmra.mxu0 %v146
    %v934 = vpop.f32.mrf.mxu0
    %v935 = vadd.f32 0.0, %v934
    %936 = vmatmul.f32.gmra.mxu0 %v274
    %v937 = vpop.f32.mrf.mxu0
    %v938 = vadd.f32 0.0, %v937
    %939 = vdwg.mxu0
    %940 = vmatpush.xpose.msra.mxu0 0.0
    %941 = vmatpush.xpose.msra.mxu0 0.0
    %942 = vmatpush.xpose.msra.mxu0 0.0
    %943 = vmatpush.xpose.msra.mxu0 0.0
    %944 = vmatpush.xpose.msra.mxu0 0.0
    %945 = vmatpush.xpose.msra.mxu0 0.0
    %946 = vmatpush.xpose.msra.mxu0 0.0
    %947 = vmatpush.xpose.msra.mxu0 0.0
    %948 = vmatpush.xpose.msra.mxu0 0.0
    %949 = vmatpush.xpose.msra.mxu0 0.0
    %950 = vmatpush.xpose.msra.mxu0 0.0
    %951 = vmatpush.xpose.msra.mxu0 0.0
    %952 = vmatpush.xpose.msra.mxu0 %v787
    %953 = vmatpush.xpose.msra.mxu0 %v659
    %954 = vmatpush.xpose.msra.mxu0 %v531
    %955 = vmatpush.xpose.msra.mxu0 %v403
    %956 = vmatmul.f32.gmra.mxu0 %v19
    %v957 = vpop.f32.mrf.mxu0
    %v958 = vadd.f32 %v932, %v957
    %959 = vmatmul.f32.gmra.mxu0 %v147
    %v960 = vpop.f32.mrf.mxu0
    %v961 = vadd.f32 %v935, %v960
    %962 = vmatmul.f32.gmra.mxu0 %v275
    %v963 = vpop.f32.mrf.mxu0
    %v964 = vadd.f32 %v938, %v963
    %965 = vdwg.mxu0
    %966 = vmatpush.xpose.msra.mxu0 0.0
    %967 = vmatpush.xpose.msra.mxu0 0.0
    %968 = vmatpush.xpose.msra.mxu0 0.0
    %969 = vmatpush.xpose.msra.mxu0 0.0
    %970 = vmatpush.xpose.msra.mxu0 0.0
    %971 = vmatpush.xpose.msra.mxu0 0.0
    %972 = vmatpush.xpose.msra.mxu0 0.0
    %973 = vmatpush.xpose.msra.mxu0 0.0
    %974 = vmatpush.xpose.msra.mxu0 0.0
    %975 = vmatpush.xpose.msra.mxu0 0.0
    %976 = vmatpush.xpose.msra.mxu0 0.0
    %977 = vmatpush.xpose.msra.mxu0 0.0
    %978 = vmatpush.xpose.msra.mxu0 %v788
    %979 = vmatpush.xpose.msra.mxu0 %v660
    %980 = vmatpush.xpose.msra.mxu0 %v532
    %981 = vmatpush.xpose.msra.mxu0 %v404
    %982 = vmatmul.f32.gmra.mxu0 %v20
    %v983 = vpop.f32.mrf.mxu0
    %v984 = vadd.f32 %v958, %v983
    %985 = vmatmul.f32.gmra.mxu0 %v148
    %v986 = vpop.f32.mrf.mxu0
    %v987 = vadd.f32 %v961, %v986
    %988 = vmatmul.f32.gmra.mxu0 %v276
    %v989 = vpop.f32.mrf.mxu0
    %v990 = vadd.f32 %v964, %v989
    %991 = vdwg.mxu0
    %992 = vmatpush.xpose.msra.mxu0 0.0
    %993 = vmatpush.xpose.msra.mxu0 0.0
    %994 = vmatpush.xpose.msra.mxu0 0.0
    %995 = vmatpush.xpose.msra.mxu0 0.0
    %996 = vmatpush.xpose.msra.mxu0 0.0
    %997 = vmatpush.xpose.msra.mxu0 0.0
    %998 = vmatpush.xpose.msra.mxu0 0.0
    %999 = vmatpush.xpose.msra.mxu0 0.0
    %1000 = vmatpush.xpose.msra.mxu0 0.0
    %1001 = vmatpush.xpose.msra.mxu0 0.0
    %1002 = vmatpush.xpose.msra.mxu0 0.0
    %1003 = vmatpush.xpose.msra.mxu0 0.0
    %1004 = vmatpush.xpose.msra.mxu0 %v789
    %1005 = vmatpush.xpose.msra.mxu0 %v661
    %1006 = vmatpush.xpose.msra.mxu0 %v533
    %1007 = vmatpush.xpose.msra.mxu0 %v405
    %1008 = vmatmul.f32.gmra.mxu0 %v21
    %v1009 = vpop.f32.mrf.mxu0
    %v1010 = vadd.f32 %v984, %v1009
    %1011 = vmatmul.f32.gmra.mxu0 %v149
    %v1012 = vpop.f32.mrf.mxu0
    %v1013 = vadd.f32 %v987, %v1012
    %1014 = vmatmul.f32.gmra.mxu0 %v277
    %v1015 = vpop.f32.mrf.mxu0
    %v1016 = vadd.f32 %v990, %v1015
    %1017 = vdwg.mxu0
    %1018 = vmatpush.xpose.msra.mxu0 0.0
    %1019 = vmatpush.xpose.msra.mxu0 0.0
    %1020 = vmatpush.xpose.msra.mxu0 0.0
    %1021 = vmatpush.xpose.msra.mxu0 0.0
    %1022 = vmatpush.xpose.msra.mxu0 0.0
    %1023 = vmatpush.xpose.msra.mxu0 0.0
    %1024 = vmatpush.xpose.msra.mxu0 0.0
    %1025 = vmatpush.xpose.msra.mxu0 0.0
    %1026 = vmatpush.xpose.msra.mxu0 0.0
    %1027 = vmatpush.xpose.msra.mxu0 0.0
    %1028 = vmatpush.xpose.msra.mxu0 0.0
    %1029 = vmatpush.xpose.msra.mxu0 0.0
    %1030 = vmatpush.xpose.msra.mxu0 %v790
    %1031 = vmatpush.xpose.msra.mxu0 %v662
    %1032 = vmatpush.xpose.msra.mxu0 %v534
    %1033 = vmatpush.xpose.msra.mxu0 %v406
    %1034 = vmatmul.f32.gmra.mxu0 %v22
    %v1035 = vpop.f32.mrf.mxu0
    %v1036 = vadd.f32 %v1010, %v1035
    %1037 = vmatmul.f32.gmra.mxu0 %v150
    %v1038 = vpop.f32.mrf.mxu0
    %v1039 = vadd.f32 %v1013, %v1038
    %1040 = vmatmul.f32.gmra.mxu0 %v278
    %v1041 = vpop.f32.mrf.mxu0
    %v1042 = vadd.f32 %v1016, %v1041
    %1043 = vdwg.mxu0
    %1044 = vmatpush.xpose.msra.mxu0 0.0
    %1045 = vmatpush.xpose.msra.mxu0 0.0
    %1046 = vmatpush.xpose.msra.mxu0 0.0
    %1047 = vmatpush.xpose.msra.mxu0 0.0
    %1048 = vmatpush.xpose.msra.mxu0 0.0
    %1049 = vmatpush.xpose.msra.mxu0 0.0
    %1050 = vmatpush.xpose.msra.mxu0 0.0
    %1051 = vmatpush.xpose.msra.mxu0 0.0
    %1052 = vmatpush.xpose.msra.mxu0 0.0
    %1053 = vmatpush.xpose.msra.mxu0 0.0
    %1054 = vmatpush.xpose.msra.mxu0 0.0
    %1055 = vmatpush.xpose.msra.mxu0 0.0
    %1056 = vmatpush.xpose.msra.mxu0 %v791
    %1057 = vmatpush.xpose.msra.mxu0 %v663
    %1058 = vmatpush.xpose.msra.mxu0 %v535
    %1059 = vmatpush.xpose.msra.mxu0 %v407
    %1060 = vmatmul.f32.gmra.mxu0 %v23
    %v1061 = vpop.f32.mrf.mxu0
    %v1062 = vadd.f32 %v1036, %v1061
    %1063 = vmatmul.f32.gmra.mxu0 %v151
    %v1064 = vpop.f32.mrf.mxu0
    %v1065 = vadd.f32 %v1039, %v1064
    %1066 = vmatmul.f32.gmra.mxu0 %v279
    %v1067 = vpop.f32.mrf.mxu0
    %v1068 = vadd.f32 %v1042, %v1067
    %1069 = vdwg.mxu0
    %1070 = vmatpush.xpose.msra.mxu0 0.0
    %1071 = vmatpush.xpose.msra.mxu0 0.0
    %1072 = vmatpush.xpose.msra.mxu0 0.0
    %1073 = vmatpush.xpose.msra.mxu0 0.0
    %1074 = vmatpush.xpose.msra.mxu0 0.0
    %1075 = vmatpush.xpose.msra.mxu0 0.0
    %1076 = vmatpush.xpose.msra.mxu0 0.0
    %1077 = vmatpush.xpose.msra.mxu0 0.0
    %1078 = vmatpush.xpose.msra.mxu0 0.0
    %1079 = vmatpush.xpose.msra.mxu0 0.0
    %1080 = vmatpush.xpose.msra.mxu0 0.0
    %1081 = vmatpush.xpose.msra.mxu0 0.0
    %1082 = vmatpush.xpose.msra.mxu0 %v792
    %1083 = vmatpush.xpose.msra.mxu0 %v664
    %1084 = vmatpush.xpose.msra.mxu0 %v536
    %1085 = vmatpush.xpose.msra.mxu0 %v408
    %1086 = vmatmul.f32.gmra.mxu0 %v24
    %v1087 = vpop.f32.mrf.mxu0
    %v1088 = vadd.f32 %v1062, %v1087
    %1089 = vmatmul.f32.gmra.mxu0 %v152
    %v1090 = vpop.f32.mrf.mxu0
    %v1091 = vadd.f32 %v1065, %v1090
    %1092 = vmatmul.f32.gmra.mxu0 %v280
    %v1093 = vpop.f32.mrf.mxu0
    %v1094 = vadd.f32 %v1068, %v1093
    %1095 = vdwg.mxu0
    %1096 = vmatpush.xpose.msra.mxu0 0.0
    %1097 = vmatpush.xpose.msra.mxu0 0.0
    %1098 = vmatpush.xpose.msra.mxu0 0.0
    %1099 = vmatpush.xpose.msra.mxu0 0.0
    %1100 = vmatpush.xpose.msra.mxu0 0.0
    %1101 = vmatpush.xpose.msra.mxu0 0.0
    %1102 = vmatpush.xpose.msra.mxu0 0.0
    %1103 = vmatpush.xpose.msra.mxu0 0.0
    %1104 = vmatpush.xpose.msra.mxu0 0.0
    %1105 = vmatpush.xpose.msra.mxu0 0.0
    %1106 = vmatpush.xpose.msra.mxu0 0.0
    %1107 = vmatpush.xpose.msra.mxu0 0.0
    %1108 = vmatpush.xpose.msra.mxu0 %v793
    %1109 = vmatpush.xpose.msra.mxu0 %v665
    %1110 = vmatpush.xpose.msra.mxu0 %v537
    %1111 = vmatpush.xpose.msra.mxu0 %v409
    %1112 = vmatmul.f32.gmra.mxu0 %v25
    %v1113 = vpop.f32.mrf.mxu0
    %v1114 = vadd.f32 %v1088, %v1113
    %1115 = vmatmul.f32.gmra.mxu0 %v153
    %v1116 = vpop.f32.mrf.mxu0
    %v1117 = vadd.f32 %v1091, %v1116
    %1118 = vmatmul.f32.gmra.mxu0 %v281
    %v1119 = vpop.f32.mrf.mxu0
    %v1120 = vadd.f32 %v1094, %v1119
    %1121 = vdwg.mxu0
    %1122 = vmatpush.xpose.msra.mxu0 0.0
    %1123 = vmatpush.xpose.msra.mxu0 0.0
    %1124 = vmatpush.xpose.msra.mxu0 0.0
    %1125 = vmatpush.xpose.msra.mxu0 0.0
    %1126 = vmatpush.xpose.msra.mxu0 0.0
    %1127 = vmatpush.xpose.msra.mxu0 0.0
    %1128 = vmatpush.xpose.msra.mxu0 0.0
    %1129 = vmatpush.xpose.msra.mxu0 0.0
    %1130 = vmatpush.xpose.msra.mxu0 0.0
    %1131 = vmatpush.xpose.msra.mxu0 0.0
    %1132 = vmatpush.xpose.msra.mxu0 0.0
    %1133 = vmatpush.xpose.msra.mxu0 0.0
    %1134 = vmatpush.xpose.msra.mxu0 %v794
    %1135 = vmatpush.xpose.msra.mxu0 %v666
    %1136 = vmatpush.xpose.msra.mxu0 %v538
    %1137 = vmatpush.xpose.msra.mxu0 %v410
    %1138 = vmatmul.f32.gmra.mxu0 %v26
    %v1139 = vpop.f32.mrf.mxu0
    %v1140 = vadd.f32 %v1114, %v1139
    %1141 = vmatmul.f32.gmra.mxu0 %v154
    %v1142 = vpop.f32.mrf.mxu0
    %v1143 = vadd.f32 %v1117, %v1142
    %1144 = vmatmul.f32.gmra.mxu0 %v282
    %v1145 = vpop.f32.mrf.mxu0
    %v1146 = vadd.f32 %v1120, %v1145
    %1147 = vdwg.mxu0
    %1148 = vmatpush.xpose.msra.mxu0 0.0
    %1149 = vmatpush.xpose.msra.mxu0 0.0
    %1150 = vmatpush.xpose.msra.mxu0 0.0
    %1151 = vmatpush.xpose.msra.mxu0 0.0
    %1152 = vmatpush.xpose.msra.mxu0 0.0
    %1153 = vmatpush.xpose.msra.mxu0 0.0
    %1154 = vmatpush.xpose.msra.mxu0 0.0
    %1155 = vmatpush.xpose.msra.mxu0 0.0
    %1156 = vmatpush.xpose.msra.mxu0 0.0
    %1157 = vmatpush.xpose.msra.mxu0 0.0
    %1158 = vmatpush.xpose.msra.mxu0 0.0
    %1159 = vmatpush.xpose.msra.mxu0 0.0
    %1160 = vmatpush.xpose.msra.mxu0 %v795
    %1161 = vmatpush.xpose.msra.mxu0 %v667
    %1162 = vmatpush.xpose.msra.mxu0 %v539
    %1163 = vmatpush.xpose.msra.mxu0 %v411
    %1164 = vmatmul.f32.gmra.mxu0 %v27
    %v1165 = vpop.f32.mrf.mxu0
    %v1166 = vadd.f32 %v1140, %v1165
    %1167 = vmatmul.f32.gmra.mxu0 %v155
    %v1168 = vpop.f32.mrf.mxu0
    %v1169 = vadd.f32 %v1143, %v1168
    %1170 = vmatmul.f32.gmra.mxu0 %v283
    %v1171 = vpop.f32.mrf.mxu0
    %v1172 = vadd.f32 %v1146, %v1171
    %1173 = vdwg.mxu0
    %1174 = vmatpush.xpose.msra.mxu0 0.0
    %1175 = vmatpush.xpose.msra.mxu0 0.0
    %1176 = vmatpush.xpose.msra.mxu0 0.0
    %1177 = vmatpush.xpose.msra.mxu0 0.0
    %1178 = vmatpush.xpose.msra.mxu0 0.0
    %1179 = vmatpush.xpose.msra.mxu0 0.0
    %1180 = vmatpush.xpose.msra.mxu0 0.0
    %1181 = vmatpush.xpose.msra.mxu0 0.0
    %1182 = vmatpush.xpose.msra.mxu0 0.0
    %1183 = vmatpush.xpose.msra.mxu0 0.0
    %1184 = vmatpush.xpose.msra.mxu0 0.0
    %1185 = vmatpush.xpose.msra.mxu0 0.0
    %1186 = vmatpush.xpose.msra.mxu0 %v796
    %1187 = vmatpush.xpose.msra.mxu0 %v668
    %1188 = vmatpush.xpose.msra.mxu0 %v540
    %1189 = vmatpush.xpose.msra.mxu0 %v412
    %1190 = vmatmul.f32.gmra.mxu0 %v28
    %v1191 = vpop.f32.mrf.mxu0
    %v1192 = vadd.f32 %v1166, %v1191
    %1193 = vmatmul.f32.gmra.mxu0 %v156
    %v1194 = vpop.f32.mrf.mxu0
    %v1195 = vadd.f32 %v1169, %v1194
    %1196 = vmatmul.f32.gmra.mxu0 %v284
    %v1197 = vpop.f32.mrf.mxu0
    %v1198 = vadd.f32 %v1172, %v1197
    %1199 = vdwg.mxu0
    %1200 = vmatpush.xpose.msra.mxu0 0.0
    %1201 = vmatpush.xpose.msra.mxu0 0.0
    %1202 = vmatpush.xpose.msra.mxu0 0.0
    %1203 = vmatpush.xpose.msra.mxu0 0.0
    %1204 = vmatpush.xpose.msra.mxu0 0.0
    %1205 = vmatpush.xpose.msra.mxu0 0.0
    %1206 = vmatpush.xpose.msra.mxu0 0.0
    %1207 = vmatpush.xpose.msra.mxu0 0.0
    %1208 = vmatpush.xpose.msra.mxu0 0.0
    %1209 = vmatpush.xpose.msra.mxu0 0.0
    %1210 = vmatpush.xpose.msra.mxu0 0.0
    %1211 = vmatpush.xpose.msra.mxu0 0.0
    %1212 = vmatpush.xpose.msra.mxu0 %v797
    %1213 = vmatpush.xpose.msra.mxu0 %v669
    %1214 = vmatpush.xpose.msra.mxu0 %v541
    %1215 = vmatpush.xpose.msra.mxu0 %v413
    %1216 = vmatmul.f32.gmra.mxu0 %v29
    %v1217 = vpop.f32.mrf.mxu0
    %v1218 = vadd.f32 %v1192, %v1217
    %1219 = vmatmul.f32.gmra.mxu0 %v157
    %v1220 = vpop.f32.mrf.mxu0
    %v1221 = vadd.f32 %v1195, %v1220
    %1222 = vmatmul.f32.gmra.mxu0 %v285
    %v1223 = vpop.f32.mrf.mxu0
    %v1224 = vadd.f32 %v1198, %v1223
    %1225 = vdwg.mxu0
    %1226 = vmatpush.xpose.msra.mxu0 0.0
    %1227 = vmatpush.xpose.msra.mxu0 0.0
    %1228 = vmatpush.xpose.msra.mxu0 0.0
    %1229 = vmatpush.xpose.msra.mxu0 0.0
    %1230 = vmatpush.xpose.msra.mxu0 0.0
    %1231 = vmatpush.xpose.msra.mxu0 0.0
    %1232 = vmatpush.xpose.msra.mxu0 0.0
    %1233 = vmatpush.xpose.msra.mxu0 0.0
    %1234 = vmatpush.xpose.msra.mxu0 0.0
    %1235 = vmatpush.xpose.msra.mxu0 0.0
    %1236 = vmatpush.xpose.msra.mxu0 0.0
    %1237 = vmatpush.xpose.msra.mxu0 0.0
    %1238 = vmatpush.xpose.msra.mxu0 %v798
    %1239 = vmatpush.xpose.msra.mxu0 %v670
    %1240 = vmatpush.xpose.msra.mxu0 %v542
    %1241 = vmatpush.xpose.msra.mxu0 %v414
    %1242 = vmatmul.f32.gmra.mxu0 %v30
    %v1243 = vpop.f32.mrf.mxu0
    %v1244 = vadd.f32 %v1218, %v1243
    %1245 = vmatmul.f32.gmra.mxu0 %v158
    %v1246 = vpop.f32.mrf.mxu0
    %v1247 = vadd.f32 %v1221, %v1246
    %1248 = vmatmul.f32.gmra.mxu0 %v286
    %v1249 = vpop.f32.mrf.mxu0
    %v1250 = vadd.f32 %v1224, %v1249
    %1251 = vdwg.mxu0
    %1252 = vmatpush.xpose.msra.mxu0 0.0
    %1253 = vmatpush.xpose.msra.mxu0 0.0
    %1254 = vmatpush.xpose.msra.mxu0 0.0
    %1255 = vmatpush.xpose.msra.mxu0 0.0
    %1256 = vmatpush.xpose.msra.mxu0 0.0
    %1257 = vmatpush.xpose.msra.mxu0 0.0
    %1258 = vmatpush.xpose.msra.mxu0 0.0
    %1259 = vmatpush.xpose.msra.mxu0 0.0
    %1260 = vmatpush.xpose.msra.mxu0 0.0
    %1261 = vmatpush.xpose.msra.mxu0 0.0
    %1262 = vmatpush.xpose.msra.mxu0 0.0
    %1263 = vmatpush.xpose.msra.mxu0 0.0
    %1264 = vmatpush.xpose.msra.mxu0 %v799
    %1265 = vmatpush.xpose.msra.mxu0 %v671
    %1266 = vmatpush.xpose.msra.mxu0 %v543
    %1267 = vmatpush.xpose.msra.mxu0 %v415
    %1268 = vmatmul.f32.gmra.mxu0 %v31
    %v1269 = vpop.f32.mrf.mxu0
    %v1270 = vadd.f32 %v1244, %v1269
    %1271 = vmatmul.f32.gmra.mxu0 %v159
    %v1272 = vpop.f32.mrf.mxu0
    %v1273 = vadd.f32 %v1247, %v1272
    %1274 = vmatmul.f32.gmra.mxu0 %v287
    %v1275 = vpop.f32.mrf.mxu0
    %v1276 = vadd.f32 %v1250, %v1275
    %1277 = vdwg.mxu0
    %1278 = vmatpush.xpose.msra.mxu0 0.0
    %1279 = vmatpush.xpose.msra.mxu0 0.0
    %1280 = vmatpush.xpose.msra.mxu0 0.0
    %1281 = vmatpush.xpose.msra.mxu0 0.0
    %1282 = vmatpush.xpose.msra.mxu0 0.0
    %1283 = vmatpush.xpose.msra.mxu0 0.0
    %1284 = vmatpush.xpose.msra.mxu0 0.0
    %1285 = vmatpush.xpose.msra.mxu0 0.0
    %1286 = vmatpush.xpose.msra.mxu0 0.0
    %1287 = vmatpush.xpose.msra.mxu0 0.0
    %1288 = vmatpush.xpose.msra.mxu0 0.0
    %1289 = vmatpush.xpose.msra.mxu0 0.0
    %1290 = vmatpush.xpose.msra.mxu0 %v800
    %1291 = vmatpush.xpose.msra.mxu0 %v672
    %1292 = vmatpush.xpose.msra.mxu0 %v544
    %1293 = vmatpush.xpose.msra.mxu0 %v416
    %1294 = vmatmul.f32.gmra.mxu0 %v32
    %v1295 = vpop.f32.mrf.mxu0
    %v1296 = vadd.f32 %v1270, %v1295
    %1297 = vmatmul.f32.gmra.mxu0 %v160
    %v1298 = vpop.f32.mrf.mxu0
    %v1299 = vadd.f32 %v1273, %v1298
    %1300 = vmatmul.f32.gmra.mxu0 %v288
    %v1301 = vpop.f32.mrf.mxu0
    %v1302 = vadd.f32 %v1276, %v1301
    %1303 = vdwg.mxu0
    %1304 = vmatpush.xpose.msra.mxu0 0.0
    %1305 = vmatpush.xpose.msra.mxu0 0.0
    %1306 = vmatpush.xpose.msra.mxu0 0.0
    %1307 = vmatpush.xpose.msra.mxu0 0.0
    %1308 = vmatpush.xpose.msra.mxu0 0.0
    %1309 = vmatpush.xpose.msra.mxu0 0.0
    %1310 = vmatpush.xpose.msra.mxu0 0.0
    %1311 = vmatpush.xpose.msra.mxu0 0.0
    %1312 = vmatpush.xpose.msra.mxu0 0.0
    %1313 = vmatpush.xpose.msra.mxu0 0.0
    %1314 = vmatpush.xpose.msra.mxu0 0.0
    %1315 = vmatpush.xpose.msra.mxu0 0.0
    %1316 = vmatpush.xpose.msra.mxu0 %v801
    %1317 = vmatpush.xpose.msra.mxu0 %v673
    %1318 = vmatpush.xpose.msra.mxu0 %v545
    %1319 = vmatpush.xpose.msra.mxu0 %v417
    %1320 = vmatmul.f32.gmra.mxu0 %v33
    %v1321 = vpop.f32.mrf.mxu0
    %v1322 = vadd.f32 %v1296, %v1321
    %1323 = vmatmul.f32.gmra.mxu0 %v161
    %v1324 = vpop.f32.mrf.mxu0
    %v1325 = vadd.f32 %v1299, %v1324
    %1326 = vmatmul.f32.gmra.mxu0 %v289
    %v1327 = vpop.f32.mrf.mxu0
    %v1328 = vadd.f32 %v1302, %v1327
    %1329 = vdwg.mxu0
    %1330 = vmatpush.xpose.msra.mxu0 0.0
    %1331 = vmatpush.xpose.msra.mxu0 0.0
    %1332 = vmatpush.xpose.msra.mxu0 0.0
    %1333 = vmatpush.xpose.msra.mxu0 0.0
    %1334 = vmatpush.xpose.msra.mxu0 0.0
    %1335 = vmatpush.xpose.msra.mxu0 0.0
    %1336 = vmatpush.xpose.msra.mxu0 0.0
    %1337 = vmatpush.xpose.msra.mxu0 0.0
    %1338 = vmatpush.xpose.msra.mxu0 0.0
    %1339 = vmatpush.xpose.msra.mxu0 0.0
    %1340 = vmatpush.xpose.msra.mxu0 0.0
    %1341 = vmatpush.xpose.msra.mxu0 0.0
    %1342 = vmatpush.xpose.msra.mxu0 %v802
    %1343 = vmatpush.xpose.msra.mxu0 %v674
    %1344 = vmatpush.xpose.msra.mxu0 %v546
    %1345 = vmatpush.xpose.msra.mxu0 %v418
    %1346 = vmatmul.f32.gmra.mxu0 %v34
    %v1347 = vpop.f32.mrf.mxu0
    %v1348 = vadd.f32 %v1322, %v1347
    %1349 = vmatmul.f32.gmra.mxu0 %v162
    %v1350 = vpop.f32.mrf.mxu0
    %v1351 = vadd.f32 %v1325, %v1350
    %1352 = vmatmul.f32.gmra.mxu0 %v290
    %v1353 = vpop.f32.mrf.mxu0
    %v1354 = vadd.f32 %v1328, %v1353
    %1355 = vdwg.mxu0
    %1356 = vmatpush.xpose.msra.mxu0 0.0
    %1357 = vmatpush.xpose.msra.mxu0 0.0
    %1358 = vmatpush.xpose.msra.mxu0 0.0
    %1359 = vmatpush.xpose.msra.mxu0 0.0
    %1360 = vmatpush.xpose.msra.mxu0 0.0
    %1361 = vmatpush.xpose.msra.mxu0 0.0
    %1362 = vmatpush.xpose.msra.mxu0 0.0
    %1363 = vmatpush.xpose.msra.mxu0 0.0
    %1364 = vmatpush.xpose.msra.mxu0 0.0
    %1365 = vmatpush.xpose.msra.mxu0 0.0
    %1366 = vmatpush.xpose.msra.mxu0 0.0
    %1367 = vmatpush.xpose.msra.mxu0 0.0
    %1368 = vmatpush.xpose.msra.mxu0 %v803
    %1369 = vmatpush.xpose.msra.mxu0 %v675
    %1370 = vmatpush.xpose.msra.mxu0 %v547
    %1371 = vmatpush.xpose.msra.mxu0 %v419
    %1372 = vmatmul.f32.gmra.mxu0 %v35
    %v1373 = vpop.f32.mrf.mxu0
    %v1374 = vadd.f32 %v1348, %v1373
    %1375 = vmatmul.f32.gmra.mxu0 %v163
    %v1376 = vpop.f32.mrf.mxu0
    %v1377 = vadd.f32 %v1351, %v1376
    %1378 = vmatmul.f32.gmra.mxu0 %v291
    %v1379 = vpop.f32.mrf.mxu0
    %v1380 = vadd.f32 %v1354, %v1379
    %1381 = vdwg.mxu0
    %1382 = vmatpush.xpose.msra.mxu0 0.0
    %1383 = vmatpush.xpose.msra.mxu0 0.0
    %1384 = vmatpush.xpose.msra.mxu0 0.0
    %1385 = vmatpush.xpose.msra.mxu0 0.0
    %1386 = vmatpush.xpose.msra.mxu0 0.0
    %1387 = vmatpush.xpose.msra.mxu0 0.0
    %1388 = vmatpush.xpose.msra.mxu0 0.0
    %1389 = vmatpush.xpose.msra.mxu0 0.0
    %1390 = vmatpush.xpose.msra.mxu0 0.0
    %1391 = vmatpush.xpose.msra.mxu0 0.0
    %1392 = vmatpush.xpose.msra.mxu0 0.0
    %1393 = vmatpush.xpose.msra.mxu0 0.0
    %1394 = vmatpush.xpose.msra.mxu0 %v804
    %1395 = vmatpush.xpose.msra.mxu0 %v676
    %1396 = vmatpush.xpose.msra.mxu0 %v548
    %1397 = vmatpush.xpose.msra.mxu0 %v420
    %1398 = vmatmul.f32.gmra.mxu0 %v36
    %v1399 = vpop.f32.mrf.mxu0
    %v1400 = vadd.f32 %v1374, %v1399
    %1401 = vmatmul.f32.gmra.mxu0 %v164
    %v1402 = vpop.f32.mrf.mxu0
    %v1403 = vadd.f32 %v1377, %v1402
    %1404 = vmatmul.f32.gmra.mxu0 %v292
    %v1405 = vpop.f32.mrf.mxu0
    %v1406 = vadd.f32 %v1380, %v1405
    %1407 = vdwg.mxu0
    %1408 = vmatpush.xpose.msra.mxu0 0.0
    %1409 = vmatpush.xpose.msra.mxu0 0.0
    %1410 = vmatpush.xpose.msra.mxu0 0.0
    %1411 = vmatpush.xpose.msra.mxu0 0.0
    %1412 = vmatpush.xpose.msra.mxu0 0.0
    %1413 = vmatpush.xpose.msra.mxu0 0.0
    %1414 = vmatpush.xpose.msra.mxu0 0.0
    %1415 = vmatpush.xpose.msra.mxu0 0.0
    %1416 = vmatpush.xpose.msra.mxu0 0.0
    %1417 = vmatpush.xpose.msra.mxu0 0.0
    %1418 = vmatpush.xpose.msra.mxu0 0.0
    %1419 = vmatpush.xpose.msra.mxu0 0.0
    %1420 = vmatpush.xpose.msra.mxu0 %v805
    %1421 = vmatpush.xpose.msra.mxu0 %v677
    %1422 = vmatpush.xpose.msra.mxu0 %v549
    %1423 = vmatpush.xpose.msra.mxu0 %v421
    %1424 = vmatmul.f32.gmra.mxu0 %v37
    %v1425 = vpop.f32.mrf.mxu0
    %v1426 = vadd.f32 %v1400, %v1425
    %1427 = vmatmul.f32.gmra.mxu0 %v165
    %v1428 = vpop.f32.mrf.mxu0
    %v1429 = vadd.f32 %v1403, %v1428
    %1430 = vmatmul.f32.gmra.mxu0 %v293
    %v1431 = vpop.f32.mrf.mxu0
    %v1432 = vadd.f32 %v1406, %v1431
    %1433 = vdwg.mxu0
    %1434 = vmatpush.xpose.msra.mxu0 0.0
    %1435 = vmatpush.xpose.msra.mxu0 0.0
    %1436 = vmatpush.xpose.msra.mxu0 0.0
    %1437 = vmatpush.xpose.msra.mxu0 0.0
    %1438 = vmatpush.xpose.msra.mxu0 0.0
    %1439 = vmatpush.xpose.msra.mxu0 0.0
    %1440 = vmatpush.xpose.msra.mxu0 0.0
    %1441 = vmatpush.xpose.msra.mxu0 0.0
    %1442 = vmatpush.xpose.msra.mxu0 0.0
    %1443 = vmatpush.xpose.msra.mxu0 0.0
    %1444 = vmatpush.xpose.msra.mxu0 0.0
    %1445 = vmatpush.xpose.msra.mxu0 0.0
    %1446 = vmatpush.xpose.msra.mxu0 %v806
    %1447 = vmatpush.xpose.msra.mxu0 %v678
    %1448 = vmatpush.xpose.msra.mxu0 %v550
    %1449 = vmatpush.xpose.msra.mxu0 %v422
    %1450 = vmatmul.f32.gmra.mxu0 %v38
    %v1451 = vpop.f32.mrf.mxu0
    %v1452 = vadd.f32 %v1426, %v1451
    %1453 = vmatmul.f32.gmra.mxu0 %v166
    %v1454 = vpop.f32.mrf.mxu0
    %v1455 = vadd.f32 %v1429, %v1454
    %1456 = vmatmul.f32.gmra.mxu0 %v294
    %v1457 = vpop.f32.mrf.mxu0
    %v1458 = vadd.f32 %v1432, %v1457
    %1459 = vdwg.mxu0
    %1460 = vmatpush.xpose.msra.mxu0 0.0
    %1461 = vmatpush.xpose.msra.mxu0 0.0
    %1462 = vmatpush.xpose.msra.mxu0 0.0
    %1463 = vmatpush.xpose.msra.mxu0 0.0
    %1464 = vmatpush.xpose.msra.mxu0 0.0
    %1465 = vmatpush.xpose.msra.mxu0 0.0
    %1466 = vmatpush.xpose.msra.mxu0 0.0
    %1467 = vmatpush.xpose.msra.mxu0 0.0
    %1468 = vmatpush.xpose.msra.mxu0 0.0
    %1469 = vmatpush.xpose.msra.mxu0 0.0
    %1470 = vmatpush.xpose.msra.mxu0 0.0
    %1471 = vmatpush.xpose.msra.mxu0 0.0
    %1472 = vmatpush.xpose.msra.mxu0 %v807
    %1473 = vmatpush.xpose.msra.mxu0 %v679
    %1474 = vmatpush.xpose.msra.mxu0 %v551
    %1475 = vmatpush.xpose.msra.mxu0 %v423
    %1476 = vmatmul.f32.gmra.mxu0 %v39
    %v1477 = vpop.f32.mrf.mxu0
    %v1478 = vadd.f32 %v1452, %v1477
    %1479 = vmatmul.f32.gmra.mxu0 %v167
    %v1480 = vpop.f32.mrf.mxu0
    %v1481 = vadd.f32 %v1455, %v1480
    %1482 = vmatmul.f32.gmra.mxu0 %v295
    %v1483 = vpop.f32.mrf.mxu0
    %v1484 = vadd.f32 %v1458, %v1483
    %1485 = vdwg.mxu0
    %1486 = vmatpush.xpose.msra.mxu0 0.0
    %1487 = vmatpush.xpose.msra.mxu0 0.0
    %1488 = vmatpush.xpose.msra.mxu0 0.0
    %1489 = vmatpush.xpose.msra.mxu0 0.0
    %1490 = vmatpush.xpose.msra.mxu0 0.0
    %1491 = vmatpush.xpose.msra.mxu0 0.0
    %1492 = vmatpush.xpose.msra.mxu0 0.0
    %1493 = vmatpush.xpose.msra.mxu0 0.0
    %1494 = vmatpush.xpose.msra.mxu0 0.0
    %1495 = vmatpush.xpose.msra.mxu0 0.0
    %1496 = vmatpush.xpose.msra.mxu0 0.0
    %1497 = vmatpush.xpose.msra.mxu0 0.0
    %1498 = vmatpush.xpose.msra.mxu0 %v808
    %1499 = vmatpush.xpose.msra.mxu0 %v680
    %1500 = vmatpush.xpose.msra.mxu0 %v552
    %1501 = vmatpush.xpose.msra.mxu0 %v424
    %1502 = vmatmul.f32.gmra.mxu0 %v40
    %v1503 = vpop.f32.mrf.mxu0
    %v1504 = vadd.f32 %v1478, %v1503
    %1505 = vmatmul.f32.gmra.mxu0 %v168
    %v1506 = vpop.f32.mrf.mxu0
    %v1507 = vadd.f32 %v1481, %v1506
    %1508 = vmatmul.f32.gmra.mxu0 %v296
    %v1509 = vpop.f32.mrf.mxu0
    %v1510 = vadd.f32 %v1484, %v1509
    %1511 = vdwg.mxu0
    %1512 = vmatpush.xpose.msra.mxu0 0.0
    %1513 = vmatpush.xpose.msra.mxu0 0.0
    %1514 = vmatpush.xpose.msra.mxu0 0.0
    %1515 = vmatpush.xpose.msra.mxu0 0.0
    %1516 = vmatpush.xpose.msra.mxu0 0.0
    %1517 = vmatpush.xpose.msra.mxu0 0.0
    %1518 = vmatpush.xpose.msra.mxu0 0.0
    %1519 = vmatpush.xpose.msra.mxu0 0.0
    %1520 = vmatpush.xpose.msra.mxu0 0.0
    %1521 = vmatpush.xpose.msra.mxu0 0.0
    %1522 = vmatpush.xpose.msra.mxu0 0.0
    %1523 = vmatpush.xpose.msra.mxu0 0.0
    %1524 = vmatpush.xpose.msra.mxu0 %v809
    %1525 = vmatpush.xpose.msra.mxu0 %v681
    %1526 = vmatpush.xpose.msra.mxu0 %v553
    %1527 = vmatpush.xpose.msra.mxu0 %v425
    %1528 = vmatmul.f32.gmra.mxu0 %v41
    %v1529 = vpop.f32.mrf.mxu0
    %v1530 = vadd.f32 %v1504, %v1529
    %1531 = vmatmul.f32.gmra.mxu0 %v169
    %v1532 = vpop.f32.mrf.mxu0
    %v1533 = vadd.f32 %v1507, %v1532
    %1534 = vmatmul.f32.gmra.mxu0 %v297
    %v1535 = vpop.f32.mrf.mxu0
    %v1536 = vadd.f32 %v1510, %v1535
    %1537 = vdwg.mxu0
    %1538 = vmatpush.xpose.msra.mxu0 0.0
    %1539 = vmatpush.xpose.msra.mxu0 0.0
    %1540 = vmatpush.xpose.msra.mxu0 0.0
    %1541 = vmatpush.xpose.msra.mxu0 0.0
    %1542 = vmatpush.xpose.msra.mxu0 0.0
    %1543 = vmatpush.xpose.msra.mxu0 0.0
    %1544 = vmatpush.xpose.msra.mxu0 0.0
    %1545 = vmatpush.xpose.msra.mxu0 0.0
    %1546 = vmatpush.xpose.msra.mxu0 0.0
    %1547 = vmatpush.xpose.msra.mxu0 0.0
    %1548 = vmatpush.xpose.msra.mxu0 0.0
    %1549 = vmatpush.xpose.msra.mxu0 0.0
    %1550 = vmatpush.xpose.msra.mxu0 %v810
    %1551 = vmatpush.xpose.msra.mxu0 %v682
    %1552 = vmatpush.xpose.msra.mxu0 %v554
    %1553 = vmatpush.xpose.msra.mxu0 %v426
    %1554 = vmatmul.f32.gmra.mxu0 %v42
    %v1555 = vpop.f32.mrf.mxu0
    %v1556 = vadd.f32 %v1530, %v1555
    %1557 = vmatmul.f32.gmra.mxu0 %v170
    %v1558 = vpop.f32.mrf.mxu0
    %v1559 = vadd.f32 %v1533, %v1558
    %1560 = vmatmul.f32.gmra.mxu0 %v298
    %v1561 = vpop.f32.mrf.mxu0
    %v1562 = vadd.f32 %v1536, %v1561
    %1563 = vdwg.mxu0
    %1564 = vmatpush.xpose.msra.mxu0 0.0
    %1565 = vmatpush.xpose.msra.mxu0 0.0
    %1566 = vmatpush.xpose.msra.mxu0 0.0
    %1567 = vmatpush.xpose.msra.mxu0 0.0
    %1568 = vmatpush.xpose.msra.mxu0 0.0
    %1569 = vmatpush.xpose.msra.mxu0 0.0
    %1570 = vmatpush.xpose.msra.mxu0 0.0
    %1571 = vmatpush.xpose.msra.mxu0 0.0
    %1572 = vmatpush.xpose.msra.mxu0 0.0
    %1573 = vmatpush.xpose.msra.mxu0 0.0
    %1574 = vmatpush.xpose.msra.mxu0 0.0
    %1575 = vmatpush.xpose.msra.mxu0 0.0
    %1576 = vmatpush.xpose.msra.mxu0 %v811
    %1577 = vmatpush.xpose.msra.mxu0 %v683
    %1578 = vmatpush.xpose.msra.mxu0 %v555
    %1579 = vmatpush.xpose.msra.mxu0 %v427
    %1580 = vmatmul.f32.gmra.mxu0 %v43
    %v1581 = vpop.f32.mrf.mxu0
    %v1582 = vadd.f32 %v1556, %v1581
    %1583 = vmatmul.f32.gmra.mxu0 %v171
    %v1584 = vpop.f32.mrf.mxu0
    %v1585 = vadd.f32 %v1559, %v1584
    %1586 = vmatmul.f32.gmra.mxu0 %v299
    %v1587 = vpop.f32.mrf.mxu0
    %v1588 = vadd.f32 %v1562, %v1587
    %1589 = vdwg.mxu0
    %1590 = vmatpush.xpose.msra.mxu0 0.0
    %1591 = vmatpush.xpose.msra.mxu0 0.0
    %1592 = vmatpush.xpose.msra.mxu0 0.0
    %1593 = vmatpush.xpose.msra.mxu0 0.0
    %1594 = vmatpush.xpose.msra.mxu0 0.0
    %1595 = vmatpush.xpose.msra.mxu0 0.0
    %1596 = vmatpush.xpose.msra.mxu0 0.0
    %1597 = vmatpush.xpose.msra.mxu0 0.0
    %1598 = vmatpush.xpose.msra.mxu0 0.0
    %1599 = vmatpush.xpose.msra.mxu0 0.0
    %1600 = vmatpush.xpose.msra.mxu0 0.0
    %1601 = vmatpush.xpose.msra.mxu0 0.0
    %1602 = vmatpush.xpose.msra.mxu0 %v812
    %1603 = vmatpush.xpose.msra.mxu0 %v684
    %1604 = vmatpush.xpose.msra.mxu0 %v556
    %1605 = vmatpush.xpose.msra.mxu0 %v428
    %1606 = vmatmul.f32.gmra.mxu0 %v44
    %v1607 = vpop.f32.mrf.mxu0
    %v1608 = vadd.f32 %v1582, %v1607
    %1609 = vmatmul.f32.gmra.mxu0 %v172
    %v1610 = vpop.f32.mrf.mxu0
    %v1611 = vadd.f32 %v1585, %v1610
    %1612 = vmatmul.f32.gmra.mxu0 %v300
    %v1613 = vpop.f32.mrf.mxu0
    %v1614 = vadd.f32 %v1588, %v1613
    %1615 = vdwg.mxu0
    %1616 = vmatpush.xpose.msra.mxu0 0.0
    %1617 = vmatpush.xpose.msra.mxu0 0.0
    %1618 = vmatpush.xpose.msra.mxu0 0.0
    %1619 = vmatpush.xpose.msra.mxu0 0.0
    %1620 = vmatpush.xpose.msra.mxu0 0.0
    %1621 = vmatpush.xpose.msra.mxu0 0.0
    %1622 = vmatpush.xpose.msra.mxu0 0.0
    %1623 = vmatpush.xpose.msra.mxu0 0.0
    %1624 = vmatpush.xpose.msra.mxu0 0.0
    %1625 = vmatpush.xpose.msra.mxu0 0.0
    %1626 = vmatpush.xpose.msra.mxu0 0.0
    %1627 = vmatpush.xpose.msra.mxu0 0.0
    %1628 = vmatpush.xpose.msra.mxu0 %v813
    %1629 = vmatpush.xpose.msra.mxu0 %v685
    %1630 = vmatpush.xpose.msra.mxu0 %v557
    %1631 = vmatpush.xpose.msra.mxu0 %v429
    %1632 = vmatmul.f32.gmra.mxu0 %v45
    %v1633 = vpop.f32.mrf.mxu0
    %v1634 = vadd.f32 %v1608, %v1633
    %1635 = vmatmul.f32.gmra.mxu0 %v173
    %v1636 = vpop.f32.mrf.mxu0
    %v1637 = vadd.f32 %v1611, %v1636
    %1638 = vmatmul.f32.gmra.mxu0 %v301
    %v1639 = vpop.f32.mrf.mxu0
    %v1640 = vadd.f32 %v1614, %v1639
    %1641 = vdwg.mxu0
    %1642 = vmatpush.xpose.msra.mxu0 0.0
    %1643 = vmatpush.xpose.msra.mxu0 0.0
    %1644 = vmatpush.xpose.msra.mxu0 0.0
    %1645 = vmatpush.xpose.msra.mxu0 0.0
    %1646 = vmatpush.xpose.msra.mxu0 0.0
    %1647 = vmatpush.xpose.msra.mxu0 0.0
    %1648 = vmatpush.xpose.msra.mxu0 0.0
    %1649 = vmatpush.xpose.msra.mxu0 0.0
    %1650 = vmatpush.xpose.msra.mxu0 0.0
    %1651 = vmatpush.xpose.msra.mxu0 0.0
    %1652 = vmatpush.xpose.msra.mxu0 0.0
    %1653 = vmatpush.xpose.msra.mxu0 0.0
    %1654 = vmatpush.xpose.msra.mxu0 %v814
    %1655 = vmatpush.xpose.msra.mxu0 %v686
    %1656 = vmatpush.xpose.msra.mxu0 %v558
    %1657 = vmatpush.xpose.msra.mxu0 %v430
    %1658 = vmatmul.f32.gmra.mxu0 %v46
    %v1659 = vpop.f32.mrf.mxu0
    %v1660 = vadd.f32 %v1634, %v1659
    %1661 = vmatmul.f32.gmra.mxu0 %v174
    %v1662 = vpop.f32.mrf.mxu0
    %v1663 = vadd.f32 %v1637, %v1662
    %1664 = vmatmul.f32.gmra.mxu0 %v302
    %v1665 = vpop.f32.mrf.mxu0
    %v1666 = vadd.f32 %v1640, %v1665
    %1667 = vdwg.mxu0
    %1668 = vmatpush.xpose.msra.mxu0 0.0
    %1669 = vmatpush.xpose.msra.mxu0 0.0
    %1670 = vmatpush.xpose.msra.mxu0 0.0
    %1671 = vmatpush.xpose.msra.mxu0 0.0
    %1672 = vmatpush.xpose.msra.mxu0 0.0
    %1673 = vmatpush.xpose.msra.mxu0 0.0
    %1674 = vmatpush.xpose.msra.mxu0 0.0
    %1675 = vmatpush.xpose.msra.mxu0 0.0
    %1676 = vmatpush.xpose.msra.mxu0 0.0
    %1677 = vmatpush.xpose.msra.mxu0 0.0
    %1678 = vmatpush.xpose.msra.mxu0 0.0
    %1679 = vmatpush.xpose.msra.mxu0 0.0
    %1680 = vmatpush.xpose.msra.mxu0 %v815
    %1681 = vmatpush.xpose.msra.mxu0 %v687
    %1682 = vmatpush.xpose.msra.mxu0 %v559
    %1683 = vmatpush.xpose.msra.mxu0 %v431
    %1684 = vmatmul.f32.gmra.mxu0 %v47
    %v1685 = vpop.f32.mrf.mxu0
    %v1686 = vadd.f32 %v1660, %v1685
    %1687 = vmatmul.f32.gmra.mxu0 %v175
    %v1688 = vpop.f32.mrf.mxu0
    %v1689 = vadd.f32 %v1663, %v1688
    %1690 = vmatmul.f32.gmra.mxu0 %v303
    %v1691 = vpop.f32.mrf.mxu0
    %v1692 = vadd.f32 %v1666, %v1691
    %1693 = vdwg.mxu0
    %1694 = vmatpush.xpose.msra.mxu0 0.0
    %1695 = vmatpush.xpose.msra.mxu0 0.0
    %1696 = vmatpush.xpose.msra.mxu0 0.0
    %1697 = vmatpush.xpose.msra.mxu0 0.0
    %1698 = vmatpush.xpose.msra.mxu0 0.0
    %1699 = vmatpush.xpose.msra.mxu0 0.0
    %1700 = vmatpush.xpose.msra.mxu0 0.0
    %1701 = vmatpush.xpose.msra.mxu0 0.0
    %1702 = vmatpush.xpose.msra.mxu0 0.0
    %1703 = vmatpush.xpose.msra.mxu0 0.0
    %1704 = vmatpush.xpose.msra.mxu0 0.0
    %1705 = vmatpush.xpose.msra.mxu0 0.0
    %1706 = vmatpush.xpose.msra.mxu0 %v816
    %1707 = vmatpush.xpose.msra.mxu0 %v688
    %1708 = vmatpush.xpose.msra.mxu0 %v560
    %1709 = vmatpush.xpose.msra.mxu0 %v432
    %1710 = vmatmul.f32.gmra.mxu0 %v48
    %v1711 = vpop.f32.mrf.mxu0
    %v1712 = vadd.f32 %v1686, %v1711
    %1713 = vmatmul.f32.gmra.mxu0 %v176
    %v1714 = vpop.f32.mrf.mxu0
    %v1715 = vadd.f32 %v1689, %v1714
    %1716 = vmatmul.f32.gmra.mxu0 %v304
    %v1717 = vpop.f32.mrf.mxu0
    %v1718 = vadd.f32 %v1692, %v1717
    %1719 = vdwg.mxu0
    %1720 = vmatpush.xpose.msra.mxu0 0.0
    %1721 = vmatpush.xpose.msra.mxu0 0.0
    %1722 = vmatpush.xpose.msra.mxu0 0.0
    %1723 = vmatpush.xpose.msra.mxu0 0.0
    %1724 = vmatpush.xpose.msra.mxu0 0.0
    %1725 = vmatpush.xpose.msra.mxu0 0.0
    %1726 = vmatpush.xpose.msra.mxu0 0.0
    %1727 = vmatpush.xpose.msra.mxu0 0.0
    %1728 = vmatpush.xpose.msra.mxu0 0.0
    %1729 = vmatpush.xpose.msra.mxu0 0.0
    %1730 = vmatpush.xpose.msra.mxu0 0.0
    %1731 = vmatpush.xpose.msra.mxu0 0.0
    %1732 = vmatpush.xpose.msra.mxu0 %v817
    %1733 = vmatpush.xpose.msra.mxu0 %v689
    %1734 = vmatpush.xpose.msra.mxu0 %v561
    %1735 = vmatpush.xpose.msra.mxu0 %v433
    %1736 = vmatmul.f32.gmra.mxu0 %v49
    %v1737 = vpop.f32.mrf.mxu0
    %v1738 = vadd.f32 %v1712, %v1737
    %1739 = vmatmul.f32.gmra.mxu0 %v177
    %v1740 = vpop.f32.mrf.mxu0
    %v1741 = vadd.f32 %v1715, %v1740
    %1742 = vmatmul.f32.gmra.mxu0 %v305
    %v1743 = vpop.f32.mrf.mxu0
    %v1744 = vadd.f32 %v1718, %v1743
    %1745 = vdwg.mxu0
    %1746 = vmatpush.xpose.msra.mxu0 0.0
    %1747 = vmatpush.xpose.msra.mxu0 0.0
    %1748 = vmatpush.xpose.msra.mxu0 0.0
    %1749 = vmatpush.xpose.msra.mxu0 0.0
    %1750 = vmatpush.xpose.msra.mxu0 0.0
    %1751 = vmatpush.xpose.msra.mxu0 0.0
    %1752 = vmatpush.xpose.msra.mxu0 0.0
    %1753 = vmatpush.xpose.msra.mxu0 0.0
    %1754 = vmatpush.xpose.msra.mxu0 0.0
    %1755 = vmatpush.xpose.msra.mxu0 0.0
    %1756 = vmatpush.xpose.msra.mxu0 0.0
    %1757 = vmatpush.xpose.msra.mxu0 0.0
    %1758 = vmatpush.xpose.msra.mxu0 %v818
    %1759 = vmatpush.xpose.msra.mxu0 %v690
    %1760 = vmatpush.xpose.msra.mxu0 %v562
    %1761 = vmatpush.xpose.msra.mxu0 %v434
    %1762 = vmatmul.f32.gmra.mxu0 %v50
    %v1763 = vpop.f32.mrf.mxu0
    %v1764 = vadd.f32 %v1738, %v1763
    %1765 = vmatmul.f32.gmra.mxu0 %v178
    %v1766 = vpop.f32.mrf.mxu0
    %v1767 = vadd.f32 %v1741, %v1766
    %1768 = vmatmul.f32.gmra.mxu0 %v306
    %v1769 = vpop.f32.mrf.mxu0
    %v1770 = vadd.f32 %v1744, %v1769
    %1771 = vdwg.mxu0
    %1772 = vmatpush.xpose.msra.mxu0 0.0
    %1773 = vmatpush.xpose.msra.mxu0 0.0
    %1774 = vmatpush.xpose.msra.mxu0 0.0
    %1775 = vmatpush.xpose.msra.mxu0 0.0
    %1776 = vmatpush.xpose.msra.mxu0 0.0
    %1777 = vmatpush.xpose.msra.mxu0 0.0
    %1778 = vmatpush.xpose.msra.mxu0 0.0
    %1779 = vmatpush.xpose.msra.mxu0 0.0
    %1780 = vmatpush.xpose.msra.mxu0 0.0
    %1781 = vmatpush.xpose.msra.mxu0 0.0
    %1782 = vmatpush.xpose.msra.mxu0 0.0
    %1783 = vmatpush.xpose.msra.mxu0 0.0
    %1784 = vmatpush.xpose.msra.mxu0 %v819
    %1785 = vmatpush.xpose.msra.mxu0 %v691
    %1786 = vmatpush.xpose.msra.mxu0 %v563
    %1787 = vmatpush.xpose.msra.mxu0 %v435
    %1788 = vmatmul.f32.gmra.mxu0 %v51
    %v1789 = vpop.f32.mrf.mxu0
    %v1790 = vadd.f32 %v1764, %v1789
    %1791 = vmatmul.f32.gmra.mxu0 %v179
    %v1792 = vpop.f32.mrf.mxu0
    %v1793 = vadd.f32 %v1767, %v1792
    %1794 = vmatmul.f32.gmra.mxu0 %v307
    %v1795 = vpop.f32.mrf.mxu0
    %v1796 = vadd.f32 %v1770, %v1795
    %1797 = vdwg.mxu0
    %1798 = vmatpush.xpose.msra.mxu0 0.0
    %1799 = vmatpush.xpose.msra.mxu0 0.0
    %1800 = vmatpush.xpose.msra.mxu0 0.0
    %1801 = vmatpush.xpose.msra.mxu0 0.0
    %1802 = vmatpush.xpose.msra.mxu0 0.0
    %1803 = vmatpush.xpose.msra.mxu0 0.0
    %1804 = vmatpush.xpose.msra.mxu0 0.0
    %1805 = vmatpush.xpose.msra.mxu0 0.0
    %1806 = vmatpush.xpose.msra.mxu0 0.0
    %1807 = vmatpush.xpose.msra.mxu0 0.0
    %1808 = vmatpush.xpose.msra.mxu0 0.0
    %1809 = vmatpush.xpose.msra.mxu0 0.0
    %1810 = vmatpush.xpose.msra.mxu0 %v820
    %1811 = vmatpush.xpose.msra.mxu0 %v692
    %1812 = vmatpush.xpose.msra.mxu0 %v564
    %1813 = vmatpush.xpose.msra.mxu0 %v436
    %1814 = vmatmul.f32.gmra.mxu0 %v52
    %v1815 = vpop.f32.mrf.mxu0
    %v1816 = vadd.f32 %v1790, %v1815
    %1817 = vmatmul.f32.gmra.mxu0 %v180
    %v1818 = vpop.f32.mrf.mxu0
    %v1819 = vadd.f32 %v1793, %v1818
    %1820 = vmatmul.f32.gmra.mxu0 %v308
    %v1821 = vpop.f32.mrf.mxu0
    %v1822 = vadd.f32 %v1796, %v1821
    %1823 = vdwg.mxu0
    %1824 = vmatpush.xpose.msra.mxu0 0.0
    %1825 = vmatpush.xpose.msra.mxu0 0.0
    %1826 = vmatpush.xpose.msra.mxu0 0.0
    %1827 = vmatpush.xpose.msra.mxu0 0.0
    %1828 = vmatpush.xpose.msra.mxu0 0.0
    %1829 = vmatpush.xpose.msra.mxu0 0.0
    %1830 = vmatpush.xpose.msra.mxu0 0.0
    %1831 = vmatpush.xpose.msra.mxu0 0.0
    %1832 = vmatpush.xpose.msra.mxu0 0.0
    %1833 = vmatpush.xpose.msra.mxu0 0.0
    %1834 = vmatpush.xpose.msra.mxu0 0.0
    %1835 = vmatpush.xpose.msra.mxu0 0.0
    %1836 = vmatpush.xpose.msra.mxu0 %v821
    %1837 = vmatpush.xpose.msra.mxu0 %v693
    %1838 = vmatpush.xpose.msra.mxu0 %v565
    %1839 = vmatpush.xpose.msra.mxu0 %v437
    %1840 = vmatmul.f32.gmra.mxu0 %v53
    %v1841 = vpop.f32.mrf.mxu0
    %v1842 = vadd.f32 %v1816, %v1841
    %1843 = vmatmul.f32.gmra.mxu0 %v181
    %v1844 = vpop.f32.mrf.mxu0
    %v1845 = vadd.f32 %v1819, %v1844
    %1846 = vmatmul.f32.gmra.mxu0 %v309
    %v1847 = vpop.f32.mrf.mxu0
    %v1848 = vadd.f32 %v1822, %v1847
    %1849 = vdwg.mxu0
    %1850 = vmatpush.xpose.msra.mxu0 0.0
    %1851 = vmatpush.xpose.msra.mxu0 0.0
    %1852 = vmatpush.xpose.msra.mxu0 0.0
    %1853 = vmatpush.xpose.msra.mxu0 0.0
    %1854 = vmatpush.xpose.msra.mxu0 0.0
    %1855 = vmatpush.xpose.msra.mxu0 0.0
    %1856 = vmatpush.xpose.msra.mxu0 0.0
    %1857 = vmatpush.xpose.msra.mxu0 0.0
    %1858 = vmatpush.xpose.msra.mxu0 0.0
    %1859 = vmatpush.xpose.msra.mxu0 0.0
    %1860 = vmatpush.xpose.msra.mxu0 0.0
    %1861 = vmatpush.xpose.msra.mxu0 0.0
    %1862 = vmatpush.xpose.msra.mxu0 %v822
    %1863 = vmatpush.xpose.msra.mxu0 %v694
    %1864 = vmatpush.xpose.msra.mxu0 %v566
    %1865 = vmatpush.xpose.msra.mxu0 %v438
    %1866 = vmatmul.f32.gmra.mxu0 %v54
    %v1867 = vpop.f32.mrf.mxu0
    %v1868 = vadd.f32 %v1842, %v1867
    %1869 = vmatmul.f32.gmra.mxu0 %v182
    %v1870 = vpop.f32.mrf.mxu0
    %v1871 = vadd.f32 %v1845, %v1870
    %1872 = vmatmul.f32.gmra.mxu0 %v310
    %v1873 = vpop.f32.mrf.mxu0
    %v1874 = vadd.f32 %v1848, %v1873
    %1875 = vdwg.mxu0
    %1876 = vmatpush.xpose.msra.mxu0 0.0
    %1877 = vmatpush.xpose.msra.mxu0 0.0
    %1878 = vmatpush.xpose.msra.mxu0 0.0
    %1879 = vmatpush.xpose.msra.mxu0 0.0
    %1880 = vmatpush.xpose.msra.mxu0 0.0
    %1881 = vmatpush.xpose.msra.mxu0 0.0
    %1882 = vmatpush.xpose.msra.mxu0 0.0
    %1883 = vmatpush.xpose.msra.mxu0 0.0
    %1884 = vmatpush.xpose.msra.mxu0 0.0
    %1885 = vmatpush.xpose.msra.mxu0 0.0
    %1886 = vmatpush.xpose.msra.mxu0 0.0
    %1887 = vmatpush.xpose.msra.mxu0 0.0
    %1888 = vmatpush.xpose.msra.mxu0 %v823
    %1889 = vmatpush.xpose.msra.mxu0 %v695
    %1890 = vmatpush.xpose.msra.mxu0 %v567
    %1891 = vmatpush.xpose.msra.mxu0 %v439
    %1892 = vmatmul.f32.gmra.mxu0 %v55
    %v1893 = vpop.f32.mrf.mxu0
    %v1894 = vadd.f32 %v1868, %v1893
    %1895 = vmatmul.f32.gmra.mxu0 %v183
    %v1896 = vpop.f32.mrf.mxu0
    %v1897 = vadd.f32 %v1871, %v1896
    %1898 = vmatmul.f32.gmra.mxu0 %v311
    %v1899 = vpop.f32.mrf.mxu0
    %v1900 = vadd.f32 %v1874, %v1899
    %1901 = vdwg.mxu0
    %1902 = vmatpush.xpose.msra.mxu0 0.0
    %1903 = vmatpush.xpose.msra.mxu0 0.0
    %1904 = vmatpush.xpose.msra.mxu0 0.0
    %1905 = vmatpush.xpose.msra.mxu0 0.0
    %1906 = vmatpush.xpose.msra.mxu0 0.0
    %1907 = vmatpush.xpose.msra.mxu0 0.0
    %1908 = vmatpush.xpose.msra.mxu0 0.0
    %1909 = vmatpush.xpose.msra.mxu0 0.0
    %1910 = vmatpush.xpose.msra.mxu0 0.0
    %1911 = vmatpush.xpose.msra.mxu0 0.0
    %1912 = vmatpush.xpose.msra.mxu0 0.0
    %1913 = vmatpush.xpose.msra.mxu0 0.0
    %1914 = vmatpush.xpose.msra.mxu0 %v824
    %1915 = vmatpush.xpose.msra.mxu0 %v696
    %1916 = vmatpush.xpose.msra.mxu0 %v568
    %1917 = vmatpush.xpose.msra.mxu0 %v440
    %1918 = vmatmul.f32.gmra.mxu0 %v56
    %v1919 = vpop.f32.mrf.mxu0
    %v1920 = vadd.f32 %v1894, %v1919
    %1921 = vmatmul.f32.gmra.mxu0 %v184
    %v1922 = vpop.f32.mrf.mxu0
    %v1923 = vadd.f32 %v1897, %v1922
    %1924 = vmatmul.f32.gmra.mxu0 %v312
    %v1925 = vpop.f32.mrf.mxu0
    %v1926 = vadd.f32 %v1900, %v1925
    %1927 = vdwg.mxu0
    %1928 = vmatpush.xpose.msra.mxu0 0.0
    %1929 = vmatpush.xpose.msra.mxu0 0.0
    %1930 = vmatpush.xpose.msra.mxu0 0.0
    %1931 = vmatpush.xpose.msra.mxu0 0.0
    %1932 = vmatpush.xpose.msra.mxu0 0.0
    %1933 = vmatpush.xpose.msra.mxu0 0.0
    %1934 = vmatpush.xpose.msra.mxu0 0.0
    %1935 = vmatpush.xpose.msra.mxu0 0.0
    %1936 = vmatpush.xpose.msra.mxu0 0.0
    %1937 = vmatpush.xpose.msra.mxu0 0.0
    %1938 = vmatpush.xpose.msra.mxu0 0.0
    %1939 = vmatpush.xpose.msra.mxu0 0.0
    %1940 = vmatpush.xpose.msra.mxu0 %v825
    %1941 = vmatpush.xpose.msra.mxu0 %v697
    %1942 = vmatpush.xpose.msra.mxu0 %v569
    %1943 = vmatpush.xpose.msra.mxu0 %v441
    %1944 = vmatmul.f32.gmra.mxu0 %v57
    %v1945 = vpop.f32.mrf.mxu0
    %v1946 = vadd.f32 %v1920, %v1945
    %1947 = vmatmul.f32.gmra.mxu0 %v185
    %v1948 = vpop.f32.mrf.mxu0
    %v1949 = vadd.f32 %v1923, %v1948
    %1950 = vmatmul.f32.gmra.mxu0 %v313
    %v1951 = vpop.f32.mrf.mxu0
    %v1952 = vadd.f32 %v1926, %v1951
    %1953 = vdwg.mxu0
    %1954 = vmatpush.xpose.msra.mxu0 0.0
    %1955 = vmatpush.xpose.msra.mxu0 0.0
    %1956 = vmatpush.xpose.msra.mxu0 0.0
    %1957 = vmatpush.xpose.msra.mxu0 0.0
    %1958 = vmatpush.xpose.msra.mxu0 0.0
    %1959 = vmatpush.xpose.msra.mxu0 0.0
    %1960 = vmatpush.xpose.msra.mxu0 0.0
    %1961 = vmatpush.xpose.msra.mxu0 0.0
    %1962 = vmatpush.xpose.msra.mxu0 0.0
    %1963 = vmatpush.xpose.msra.mxu0 0.0
    %1964 = vmatpush.xpose.msra.mxu0 0.0
    %1965 = vmatpush.xpose.msra.mxu0 0.0
    %1966 = vmatpush.xpose.msra.mxu0 %v826
    %1967 = vmatpush.xpose.msra.mxu0 %v698
    %1968 = vmatpush.xpose.msra.mxu0 %v570
    %1969 = vmatpush.xpose.msra.mxu0 %v442
    %1970 = vmatmul.f32.gmra.mxu0 %v58
    %v1971 = vpop.f32.mrf.mxu0
    %v1972 = vadd.f32 %v1946, %v1971
    %1973 = vmatmul.f32.gmra.mxu0 %v186
    %v1974 = vpop.f32.mrf.mxu0
    %v1975 = vadd.f32 %v1949, %v1974
    %1976 = vmatmul.f32.gmra.mxu0 %v314
    %v1977 = vpop.f32.mrf.mxu0
    %v1978 = vadd.f32 %v1952, %v1977
    %1979 = vdwg.mxu0
    %1980 = vmatpush.xpose.msra.mxu0 0.0
    %1981 = vmatpush.xpose.msra.mxu0 0.0
    %1982 = vmatpush.xpose.msra.mxu0 0.0
    %1983 = vmatpush.xpose.msra.mxu0 0.0
    %1984 = vmatpush.xpose.msra.mxu0 0.0
    %1985 = vmatpush.xpose.msra.mxu0 0.0
    %1986 = vmatpush.xpose.msra.mxu0 0.0
    %1987 = vmatpush.xpose.msra.mxu0 0.0
    %1988 = vmatpush.xpose.msra.mxu0 0.0
    %1989 = vmatpush.xpose.msra.mxu0 0.0
    %1990 = vmatpush.xpose.msra.mxu0 0.0
    %1991 = vmatpush.xpose.msra.mxu0 0.0
    %1992 = vmatpush.xpose.msra.mxu0 %v827
    %1993 = vmatpush.xpose.msra.mxu0 %v699
    %1994 = vmatpush.xpose.msra.mxu0 %v571
    %1995 = vmatpush.xpose.msra.mxu0 %v443
    %1996 = vmatmul.f32.gmra.mxu0 %v59
    %v1997 = vpop.f32.mrf.mxu0
    %v1998 = vadd.f32 %v1972, %v1997
    %1999 = vmatmul.f32.gmra.mxu0 %v187
    %v2000 = vpop.f32.mrf.mxu0
    %v2001 = vadd.f32 %v1975, %v2000
    %2002 = vmatmul.f32.gmra.mxu0 %v315
    %v2003 = vpop.f32.mrf.mxu0
    %v2004 = vadd.f32 %v1978, %v2003
    %2005 = vdwg.mxu0
    %2006 = vmatpush.xpose.msra.mxu0 0.0
    %2007 = vmatpush.xpose.msra.mxu0 0.0
    %2008 = vmatpush.xpose.msra.mxu0 0.0
    %2009 = vmatpush.xpose.msra.mxu0 0.0
    %2010 = vmatpush.xpose.msra.mxu0 0.0
    %2011 = vmatpush.xpose.msra.mxu0 0.0
    %2012 = vmatpush.xpose.msra.mxu0 0.0
    %2013 = vmatpush.xpose.msra.mxu0 0.0
    %2014 = vmatpush.xpose.msra.mxu0 0.0
    %2015 = vmatpush.xpose.msra.mxu0 0.0
    %2016 = vmatpush.xpose.msra.mxu0 0.0
    %2017 = vmatpush.xpose.msra.mxu0 0.0
    %2018 = vmatpush.xpose.msra.mxu0 %v828
    %2019 = vmatpush.xpose.msra.mxu0 %v700
    %2020 = vmatpush.xpose.msra.mxu0 %v572
    %2021 = vmatpush.xpose.msra.mxu0 %v444
    %2022 = vmatmul.f32.gmra.mxu0 %v60
    %v2023 = vpop.f32.mrf.mxu0
    %v2024 = vadd.f32 %v1998, %v2023
    %2025 = vmatmul.f32.gmra.mxu0 %v188
    %v2026 = vpop.f32.mrf.mxu0
    %v2027 = vadd.f32 %v2001, %v2026
    %2028 = vmatmul.f32.gmra.mxu0 %v316
    %v2029 = vpop.f32.mrf.mxu0
    %v2030 = vadd.f32 %v2004, %v2029
    %2031 = vdwg.mxu0
    %2032 = vmatpush.xpose.msra.mxu0 0.0
    %2033 = vmatpush.xpose.msra.mxu0 0.0
    %2034 = vmatpush.xpose.msra.mxu0 0.0
    %2035 = vmatpush.xpose.msra.mxu0 0.0
    %2036 = vmatpush.xpose.msra.mxu0 0.0
    %2037 = vmatpush.xpose.msra.mxu0 0.0
    %2038 = vmatpush.xpose.msra.mxu0 0.0
    %2039 = vmatpush.xpose.msra.mxu0 0.0
    %2040 = vmatpush.xpose.msra.mxu0 0.0
    %2041 = vmatpush.xpose.msra.mxu0 0.0
    %2042 = vmatpush.xpose.msra.mxu0 0.0
    %2043 = vmatpush.xpose.msra.mxu0 0.0
    %2044 = vmatpush.xpose.msra.mxu0 %v829
    %2045 = vmatpush.xpose.msra.mxu0 %v701
    %2046 = vmatpush.xpose.msra.mxu0 %v573
    %2047 = vmatpush.xpose.msra.mxu0 %v445
    %2048 = vmatmul.f32.gmra.mxu0 %v61
    %v2049 = vpop.f32.mrf.mxu0
    %v2050 = vadd.f32 %v2024, %v2049
    %2051 = vmatmul.f32.gmra.mxu0 %v189
    %v2052 = vpop.f32.mrf.mxu0
    %v2053 = vadd.f32 %v2027, %v2052
    %2054 = vmatmul.f32.gmra.mxu0 %v317
    %v2055 = vpop.f32.mrf.mxu0
    %v2056 = vadd.f32 %v2030, %v2055
    %2057 = vdwg.mxu0
    %2058 = vmatpush.xpose.msra.mxu0 0.0
    %2059 = vmatpush.xpose.msra.mxu0 0.0
    %2060 = vmatpush.xpose.msra.mxu0 0.0
    %2061 = vmatpush.xpose.msra.mxu0 0.0
    %2062 = vmatpush.xpose.msra.mxu0 0.0
    %2063 = vmatpush.xpose.msra.mxu0 0.0
    %2064 = vmatpush.xpose.msra.mxu0 0.0
    %2065 = vmatpush.xpose.msra.mxu0 0.0
    %2066 = vmatpush.xpose.msra.mxu0 0.0
    %2067 = vmatpush.xpose.msra.mxu0 0.0
    %2068 = vmatpush.xpose.msra.mxu0 0.0
    %2069 = vmatpush.xpose.msra.mxu0 0.0
    %2070 = vmatpush.xpose.msra.mxu0 %v830
    %2071 = vmatpush.xpose.msra.mxu0 %v702
    %2072 = vmatpush.xpose.msra.mxu0 %v574
    %2073 = vmatpush.xpose.msra.mxu0 %v446
    %2074 = vmatmul.f32.gmra.mxu0 %v62
    %v2075 = vpop.f32.mrf.mxu0
    %v2076 = vadd.f32 %v2050, %v2075
    %2077 = vmatmul.f32.gmra.mxu0 %v190
    %v2078 = vpop.f32.mrf.mxu0
    %v2079 = vadd.f32 %v2053, %v2078
    %2080 = vmatmul.f32.gmra.mxu0 %v318
    %v2081 = vpop.f32.mrf.mxu0
    %v2082 = vadd.f32 %v2056, %v2081
    %2083 = vdwg.mxu0
    %2084 = vmatpush.xpose.msra.mxu0 0.0
    %2085 = vmatpush.xpose.msra.mxu0 0.0
    %2086 = vmatpush.xpose.msra.mxu0 0.0
    %2087 = vmatpush.xpose.msra.mxu0 0.0
    %2088 = vmatpush.xpose.msra.mxu0 0.0
    %2089 = vmatpush.xpose.msra.mxu0 0.0
    %2090 = vmatpush.xpose.msra.mxu0 0.0
    %2091 = vmatpush.xpose.msra.mxu0 0.0
    %2092 = vmatpush.xpose.msra.mxu0 0.0
    %2093 = vmatpush.xpose.msra.mxu0 0.0
    %2094 = vmatpush.xpose.msra.mxu0 0.0
    %2095 = vmatpush.xpose.msra.mxu0 0.0
    %2096 = vmatpush.xpose.msra.mxu0 %v831
    %2097 = vmatpush.xpose.msra.mxu0 %v703
    %2098 = vmatpush.xpose.msra.mxu0 %v575
    %2099 = vmatpush.xpose.msra.mxu0 %v447
    %2100 = vmatmul.f32.gmra.mxu0 %v63
    %v2101 = vpop.f32.mrf.mxu0
    %v2102 = vadd.f32 %v2076, %v2101
    %2103 = vmatmul.f32.gmra.mxu0 %v191
    %v2104 = vpop.f32.mrf.mxu0
    %v2105 = vadd.f32 %v2079, %v2104
    %2106 = vmatmul.f32.gmra.mxu0 %v319
    %v2107 = vpop.f32.mrf.mxu0
    %v2108 = vadd.f32 %v2082, %v2107
    %2109 = vdwg.mxu0
    %2110 = vmatpush.xpose.msra.mxu0 0.0
    %2111 = vmatpush.xpose.msra.mxu0 0.0
    %2112 = vmatpush.xpose.msra.mxu0 0.0
    %2113 = vmatpush.xpose.msra.mxu0 0.0
    %2114 = vmatpush.xpose.msra.mxu0 0.0
    %2115 = vmatpush.xpose.msra.mxu0 0.0
    %2116 = vmatpush.xpose.msra.mxu0 0.0
    %2117 = vmatpush.xpose.msra.mxu0 0.0
    %2118 = vmatpush.xpose.msra.mxu0 0.0
    %2119 = vmatpush.xpose.msra.mxu0 0.0
    %2120 = vmatpush.xpose.msra.mxu0 0.0
    %2121 = vmatpush.xpose.msra.mxu0 0.0
    %2122 = vmatpush.xpose.msra.mxu0 %v832
    %2123 = vmatpush.xpose.msra.mxu0 %v704
    %2124 = vmatpush.xpose.msra.mxu0 %v576
    %2125 = vmatpush.xpose.msra.mxu0 %v448
    %2126 = vmatmul.f32.gmra.mxu0 %v64
    %v2127 = vpop.f32.mrf.mxu0
    %v2128 = vadd.f32 %v2102, %v2127
    %2129 = vmatmul.f32.gmra.mxu0 %v192
    %v2130 = vpop.f32.mrf.mxu0
    %v2131 = vadd.f32 %v2105, %v2130
    %2132 = vmatmul.f32.gmra.mxu0 %v320
    %v2133 = vpop.f32.mrf.mxu0
    %v2134 = vadd.f32 %v2108, %v2133
    %2135 = vdwg.mxu0
    %2136 = vmatpush.xpose.msra.mxu0 0.0
    %2137 = vmatpush.xpose.msra.mxu0 0.0
    %2138 = vmatpush.xpose.msra.mxu0 0.0
    %2139 = vmatpush.xpose.msra.mxu0 0.0
    %2140 = vmatpush.xpose.msra.mxu0 0.0
    %2141 = vmatpush.xpose.msra.mxu0 0.0
    %2142 = vmatpush.xpose.msra.mxu0 0.0
    %2143 = vmatpush.xpose.msra.mxu0 0.0
    %2144 = vmatpush.xpose.msra.mxu0 0.0
    %2145 = vmatpush.xpose.msra.mxu0 0.0
    %2146 = vmatpush.xpose.msra.mxu0 0.0
    %2147 = vmatpush.xpose.msra.mxu0 0.0
    %2148 = vmatpush.xpose.msra.mxu0 %v833
    %2149 = vmatpush.xpose.msra.mxu0 %v705
    %2150 = vmatpush.xpose.msra.mxu0 %v577
    %2151 = vmatpush.xpose.msra.mxu0 %v449
    %2152 = vmatmul.f32.gmra.mxu0 %v65
    %v2153 = vpop.f32.mrf.mxu0
    %v2154 = vadd.f32 %v2128, %v2153
    %2155 = vmatmul.f32.gmra.mxu0 %v193
    %v2156 = vpop.f32.mrf.mxu0
    %v2157 = vadd.f32 %v2131, %v2156
    %2158 = vmatmul.f32.gmra.mxu0 %v321
    %v2159 = vpop.f32.mrf.mxu0
    %v2160 = vadd.f32 %v2134, %v2159
    %2161 = vdwg.mxu0
    %2162 = vmatpush.xpose.msra.mxu0 0.0
    %2163 = vmatpush.xpose.msra.mxu0 0.0
    %2164 = vmatpush.xpose.msra.mxu0 0.0
    %2165 = vmatpush.xpose.msra.mxu0 0.0
    %2166 = vmatpush.xpose.msra.mxu0 0.0
    %2167 = vmatpush.xpose.msra.mxu0 0.0
    %2168 = vmatpush.xpose.msra.mxu0 0.0
    %2169 = vmatpush.xpose.msra.mxu0 0.0
    %2170 = vmatpush.xpose.msra.mxu0 0.0
    %2171 = vmatpush.xpose.msra.mxu0 0.0
    %2172 = vmatpush.xpose.msra.mxu0 0.0
    %2173 = vmatpush.xpose.msra.mxu0 0.0
    %2174 = vmatpush.xpose.msra.mxu0 %v834
    %2175 = vmatpush.xpose.msra.mxu0 %v706
    %2176 = vmatpush.xpose.msra.mxu0 %v578
    %2177 = vmatpush.xpose.msra.mxu0 %v450
    %2178 = vmatmul.f32.gmra.mxu0 %v66
    %v2179 = vpop.f32.mrf.mxu0
    %v2180 = vadd.f32 %v2154, %v2179
    %2181 = vmatmul.f32.gmra.mxu0 %v194
    %v2182 = vpop.f32.mrf.mxu0
    %v2183 = vadd.f32 %v2157, %v2182
    %2184 = vmatmul.f32.gmra.mxu0 %v322
    %v2185 = vpop.f32.mrf.mxu0
    %v2186 = vadd.f32 %v2160, %v2185
    %2187 = vdwg.mxu0
    %2188 = vmatpush.xpose.msra.mxu0 0.0
    %2189 = vmatpush.xpose.msra.mxu0 0.0
    %2190 = vmatpush.xpose.msra.mxu0 0.0
    %2191 = vmatpush.xpose.msra.mxu0 0.0
    %2192 = vmatpush.xpose.msra.mxu0 0.0
    %2193 = vmatpush.xpose.msra.mxu0 0.0
    %2194 = vmatpush.xpose.msra.mxu0 0.0
    %2195 = vmatpush.xpose.msra.mxu0 0.0
    %2196 = vmatpush.xpose.msra.mxu0 0.0
    %2197 = vmatpush.xpose.msra.mxu0 0.0
    %2198 = vmatpush.xpose.msra.mxu0 0.0
    %2199 = vmatpush.xpose.msra.mxu0 0.0
    %2200 = vmatpush.xpose.msra.mxu0 %v835
    %2201 = vmatpush.xpose.msra.mxu0 %v707
    %2202 = vmatpush.xpose.msra.mxu0 %v579
    %2203 = vmatpush.xpose.msra.mxu0 %v451
    %2204 = vmatmul.f32.gmra.mxu0 %v67
    %v2205 = vpop.f32.mrf.mxu0
    %v2206 = vadd.f32 %v2180, %v2205
    %2207 = vmatmul.f32.gmra.mxu0 %v195
    %v2208 = vpop.f32.mrf.mxu0
    %v2209 = vadd.f32 %v2183, %v2208
    %2210 = vmatmul.f32.gmra.mxu0 %v323
    %v2211 = vpop.f32.mrf.mxu0
    %v2212 = vadd.f32 %v2186, %v2211
    %2213 = vdwg.mxu0
    %2214 = vmatpush.xpose.msra.mxu0 0.0
    %2215 = vmatpush.xpose.msra.mxu0 0.0
    %2216 = vmatpush.xpose.msra.mxu0 0.0
    %2217 = vmatpush.xpose.msra.mxu0 0.0
    %2218 = vmatpush.xpose.msra.mxu0 0.0
    %2219 = vmatpush.xpose.msra.mxu0 0.0
    %2220 = vmatpush.xpose.msra.mxu0 0.0
    %2221 = vmatpush.xpose.msra.mxu0 0.0
    %2222 = vmatpush.xpose.msra.mxu0 0.0
    %2223 = vmatpush.xpose.msra.mxu0 0.0
    %2224 = vmatpush.xpose.msra.mxu0 0.0
    %2225 = vmatpush.xpose.msra.mxu0 0.0
    %2226 = vmatpush.xpose.msra.mxu0 %v836
    %2227 = vmatpush.xpose.msra.mxu0 %v708
    %2228 = vmatpush.xpose.msra.mxu0 %v580
    %2229 = vmatpush.xpose.msra.mxu0 %v452
    %2230 = vmatmul.f32.gmra.mxu0 %v68
    %v2231 = vpop.f32.mrf.mxu0
    %v2232 = vadd.f32 %v2206, %v2231
    %2233 = vmatmul.f32.gmra.mxu0 %v196
    %v2234 = vpop.f32.mrf.mxu0
    %v2235 = vadd.f32 %v2209, %v2234
    %2236 = vmatmul.f32.gmra.mxu0 %v324
    %v2237 = vpop.f32.mrf.mxu0
    %v2238 = vadd.f32 %v2212, %v2237
    %2239 = vdwg.mxu0
    %2240 = vmatpush.xpose.msra.mxu0 0.0
    %2241 = vmatpush.xpose.msra.mxu0 0.0
    %2242 = vmatpush.xpose.msra.mxu0 0.0
    %2243 = vmatpush.xpose.msra.mxu0 0.0
    %2244 = vmatpush.xpose.msra.mxu0 0.0
    %2245 = vmatpush.xpose.msra.mxu0 0.0
    %2246 = vmatpush.xpose.msra.mxu0 0.0
    %2247 = vmatpush.xpose.msra.mxu0 0.0
    %2248 = vmatpush.xpose.msra.mxu0 0.0
    %2249 = vmatpush.xpose.msra.mxu0 0.0
    %2250 = vmatpush.xpose.msra.mxu0 0.0
    %2251 = vmatpush.xpose.msra.mxu0 0.0
    %2252 = vmatpush.xpose.msra.mxu0 %v837
    %2253 = vmatpush.xpose.msra.mxu0 %v709
    %2254 = vmatpush.xpose.msra.mxu0 %v581
    %2255 = vmatpush.xpose.msra.mxu0 %v453
    %2256 = vmatmul.f32.gmra.mxu0 %v69
    %v2257 = vpop.f32.mrf.mxu0
    %v2258 = vadd.f32 %v2232, %v2257
    %2259 = vmatmul.f32.gmra.mxu0 %v197
    %v2260 = vpop.f32.mrf.mxu0
    %v2261 = vadd.f32 %v2235, %v2260
    %2262 = vmatmul.f32.gmra.mxu0 %v325
    %v2263 = vpop.f32.mrf.mxu0
    %v2264 = vadd.f32 %v2238, %v2263
    %2265 = vdwg.mxu0
    %2266 = vmatpush.xpose.msra.mxu0 0.0
    %2267 = vmatpush.xpose.msra.mxu0 0.0
    %2268 = vmatpush.xpose.msra.mxu0 0.0
    %2269 = vmatpush.xpose.msra.mxu0 0.0
    %2270 = vmatpush.xpose.msra.mxu0 0.0
    %2271 = vmatpush.xpose.msra.mxu0 0.0
    %2272 = vmatpush.xpose.msra.mxu0 0.0
    %2273 = vmatpush.xpose.msra.mxu0 0.0
    %2274 = vmatpush.xpose.msra.mxu0 0.0
    %2275 = vmatpush.xpose.msra.mxu0 0.0
    %2276 = vmatpush.xpose.msra.mxu0 0.0
    %2277 = vmatpush.xpose.msra.mxu0 0.0
    %2278 = vmatpush.xpose.msra.mxu0 %v838
    %2279 = vmatpush.xpose.msra.mxu0 %v710
    %2280 = vmatpush.xpose.msra.mxu0 %v582
    %2281 = vmatpush.xpose.msra.mxu0 %v454
    %2282 = vmatmul.f32.gmra.mxu0 %v70
    %v2283 = vpop.f32.mrf.mxu0
    %v2284 = vadd.f32 %v2258, %v2283
    %2285 = vmatmul.f32.gmra.mxu0 %v198
    %v2286 = vpop.f32.mrf.mxu0
    %v2287 = vadd.f32 %v2261, %v2286
    %2288 = vmatmul.f32.gmra.mxu0 %v326
    %v2289 = vpop.f32.mrf.mxu0
    %v2290 = vadd.f32 %v2264, %v2289
    %2291 = vdwg.mxu0
    %2292 = vmatpush.xpose.msra.mxu0 0.0
    %2293 = vmatpush.xpose.msra.mxu0 0.0
    %2294 = vmatpush.xpose.msra.mxu0 0.0
    %2295 = vmatpush.xpose.msra.mxu0 0.0
    %2296 = vmatpush.xpose.msra.mxu0 0.0
    %2297 = vmatpush.xpose.msra.mxu0 0.0
    %2298 = vmatpush.xpose.msra.mxu0 0.0
    %2299 = vmatpush.xpose.msra.mxu0 0.0
    %2300 = vmatpush.xpose.msra.mxu0 0.0
    %2301 = vmatpush.xpose.msra.mxu0 0.0
    %2302 = vmatpush.xpose.msra.mxu0 0.0
    %2303 = vmatpush.xpose.msra.mxu0 0.0
    %2304 = vmatpush.xpose.msra.mxu0 %v839
    %2305 = vmatpush.xpose.msra.mxu0 %v711
    %2306 = vmatpush.xpose.msra.mxu0 %v583
    %2307 = vmatpush.xpose.msra.mxu0 %v455
    %2308 = vmatmul.f32.gmra.mxu0 %v71
    %v2309 = vpop.f32.mrf.mxu0
    %v2310 = vadd.f32 %v2284, %v2309
    %2311 = vmatmul.f32.gmra.mxu0 %v199
    %v2312 = vpop.f32.mrf.mxu0
    %v2313 = vadd.f32 %v2287, %v2312
    %2314 = vmatmul.f32.gmra.mxu0 %v327
    %v2315 = vpop.f32.mrf.mxu0
    %v2316 = vadd.f32 %v2290, %v2315
    %2317 = vdwg.mxu0
    %2318 = vmatpush.xpose.msra.mxu0 0.0
    %2319 = vmatpush.xpose.msra.mxu0 0.0
    %2320 = vmatpush.xpose.msra.mxu0 0.0
    %2321 = vmatpush.xpose.msra.mxu0 0.0
    %2322 = vmatpush.xpose.msra.mxu0 0.0
    %2323 = vmatpush.xpose.msra.mxu0 0.0
    %2324 = vmatpush.xpose.msra.mxu0 0.0
    %2325 = vmatpush.xpose.msra.mxu0 0.0
    %2326 = vmatpush.xpose.msra.mxu0 0.0
    %2327 = vmatpush.xpose.msra.mxu0 0.0
    %2328 = vmatpush.xpose.msra.mxu0 0.0
    %2329 = vmatpush.xpose.msra.mxu0 0.0
    %2330 = vmatpush.xpose.msra.mxu0 %v840
    %2331 = vmatpush.xpose.msra.mxu0 %v712
    %2332 = vmatpush.xpose.msra.mxu0 %v584
    %2333 = vmatpush.xpose.msra.mxu0 %v456
    %2334 = vmatmul.f32.gmra.mxu0 %v72
    %v2335 = vpop.f32.mrf.mxu0
    %v2336 = vadd.f32 %v2310, %v2335
    %2337 = vmatmul.f32.gmra.mxu0 %v200
    %v2338 = vpop.f32.mrf.mxu0
    %v2339 = vadd.f32 %v2313, %v2338
    %2340 = vmatmul.f32.gmra.mxu0 %v328
    %v2341 = vpop.f32.mrf.mxu0
    %v2342 = vadd.f32 %v2316, %v2341
    %2343 = vdwg.mxu0
    %2344 = vmatpush.xpose.msra.mxu0 0.0
    %2345 = vmatpush.xpose.msra.mxu0 0.0
    %2346 = vmatpush.xpose.msra.mxu0 0.0
    %2347 = vmatpush.xpose.msra.mxu0 0.0
    %2348 = vmatpush.xpose.msra.mxu0 0.0
    %2349 = vmatpush.xpose.msra.mxu0 0.0
    %2350 = vmatpush.xpose.msra.mxu0 0.0
    %2351 = vmatpush.xpose.msra.mxu0 0.0
    %2352 = vmatpush.xpose.msra.mxu0 0.0
    %2353 = vmatpush.xpose.msra.mxu0 0.0
    %2354 = vmatpush.xpose.msra.mxu0 0.0
    %2355 = vmatpush.xpose.msra.mxu0 0.0
    %2356 = vmatpush.xpose.msra.mxu0 %v841
    %2357 = vmatpush.xpose.msra.mxu0 %v713
    %2358 = vmatpush.xpose.msra.mxu0 %v585
    %2359 = vmatpush.xpose.msra.mxu0 %v457
    %2360 = vmatmul.f32.gmra.mxu0 %v73
    %v2361 = vpop.f32.mrf.mxu0
    %v2362 = vadd.f32 %v2336, %v2361
    %2363 = vmatmul.f32.gmra.mxu0 %v201
    %v2364 = vpop.f32.mrf.mxu0
    %v2365 = vadd.f32 %v2339, %v2364
    %2366 = vmatmul.f32.gmra.mxu0 %v329
    %v2367 = vpop.f32.mrf.mxu0
    %v2368 = vadd.f32 %v2342, %v2367
    %2369 = vdwg.mxu0
    %2370 = vmatpush.xpose.msra.mxu0 0.0
    %2371 = vmatpush.xpose.msra.mxu0 0.0
    %2372 = vmatpush.xpose.msra.mxu0 0.0
    %2373 = vmatpush.xpose.msra.mxu0 0.0
    %2374 = vmatpush.xpose.msra.mxu0 0.0
    %2375 = vmatpush.xpose.msra.mxu0 0.0
    %2376 = vmatpush.xpose.msra.mxu0 0.0
    %2377 = vmatpush.xpose.msra.mxu0 0.0
    %2378 = vmatpush.xpose.msra.mxu0 0.0
    %2379 = vmatpush.xpose.msra.mxu0 0.0
    %2380 = vmatpush.xpose.msra.mxu0 0.0
    %2381 = vmatpush.xpose.msra.mxu0 0.0
    %2382 = vmatpush.xpose.msra.mxu0 %v842
    %2383 = vmatpush.xpose.msra.mxu0 %v714
    %2384 = vmatpush.xpose.msra.mxu0 %v586
    %2385 = vmatpush.xpose.msra.mxu0 %v458
    %2386 = vmatmul.f32.gmra.mxu0 %v74
    %v2387 = vpop.f32.mrf.mxu0
    %v2388 = vadd.f32 %v2362, %v2387
    %2389 = vmatmul.f32.gmra.mxu0 %v202
    %v2390 = vpop.f32.mrf.mxu0
    %v2391 = vadd.f32 %v2365, %v2390
    %2392 = vmatmul.f32.gmra.mxu0 %v330
    %v2393 = vpop.f32.mrf.mxu0
    %v2394 = vadd.f32 %v2368, %v2393
    %2395 = vdwg.mxu0
    %2396 = vmatpush.xpose.msra.mxu0 0.0
    %2397 = vmatpush.xpose.msra.mxu0 0.0
    %2398 = vmatpush.xpose.msra.mxu0 0.0
    %2399 = vmatpush.xpose.msra.mxu0 0.0
    %2400 = vmatpush.xpose.msra.mxu0 0.0
    %2401 = vmatpush.xpose.msra.mxu0 0.0
    %2402 = vmatpush.xpose.msra.mxu0 0.0
    %2403 = vmatpush.xpose.msra.mxu0 0.0
    %2404 = vmatpush.xpose.msra.mxu0 0.0
    %2405 = vmatpush.xpose.msra.mxu0 0.0
    %2406 = vmatpush.xpose.msra.mxu0 0.0
    %2407 = vmatpush.xpose.msra.mxu0 0.0
    %2408 = vmatpush.xpose.msra.mxu0 %v843
    %2409 = vmatpush.xpose.msra.mxu0 %v715
    %2410 = vmatpush.xpose.msra.mxu0 %v587
    %2411 = vmatpush.xpose.msra.mxu0 %v459
    %2412 = vmatmul.f32.gmra.mxu0 %v75
    %v2413 = vpop.f32.mrf.mxu0
    %v2414 = vadd.f32 %v2388, %v2413
    %2415 = vmatmul.f32.gmra.mxu0 %v203
    %v2416 = vpop.f32.mrf.mxu0
    %v2417 = vadd.f32 %v2391, %v2416
    %2418 = vmatmul.f32.gmra.mxu0 %v331
    %v2419 = vpop.f32.mrf.mxu0
    %v2420 = vadd.f32 %v2394, %v2419
    %2421 = vdwg.mxu0
    %2422 = vmatpush.xpose.msra.mxu0 0.0
    %2423 = vmatpush.xpose.msra.mxu0 0.0
    %2424 = vmatpush.xpose.msra.mxu0 0.0
    %2425 = vmatpush.xpose.msra.mxu0 0.0
    %2426 = vmatpush.xpose.msra.mxu0 0.0
    %2427 = vmatpush.xpose.msra.mxu0 0.0
    %2428 = vmatpush.xpose.msra.mxu0 0.0
    %2429 = vmatpush.xpose.msra.mxu0 0.0
    %2430 = vmatpush.xpose.msra.mxu0 0.0
    %2431 = vmatpush.xpose.msra.mxu0 0.0
    %2432 = vmatpush.xpose.msra.mxu0 0.0
    %2433 = vmatpush.xpose.msra.mxu0 0.0
    %2434 = vmatpush.xpose.msra.mxu0 %v844
    %2435 = vmatpush.xpose.msra.mxu0 %v716
    %2436 = vmatpush.xpose.msra.mxu0 %v588
    %2437 = vmatpush.xpose.msra.mxu0 %v460
    %2438 = vmatmul.f32.gmra.mxu0 %v76
    %v2439 = vpop.f32.mrf.mxu0
    %v2440 = vadd.f32 %v2414, %v2439
    %2441 = vmatmul.f32.gmra.mxu0 %v204
    %v2442 = vpop.f32.mrf.mxu0
    %v2443 = vadd.f32 %v2417, %v2442
    %2444 = vmatmul.f32.gmra.mxu0 %v332
    %v2445 = vpop.f32.mrf.mxu0
    %v2446 = vadd.f32 %v2420, %v2445
    %2447 = vdwg.mxu0
    %2448 = vmatpush.xpose.msra.mxu0 0.0
    %2449 = vmatpush.xpose.msra.mxu0 0.0
    %2450 = vmatpush.xpose.msra.mxu0 0.0
    %2451 = vmatpush.xpose.msra.mxu0 0.0
    %2452 = vmatpush.xpose.msra.mxu0 0.0
    %2453 = vmatpush.xpose.msra.mxu0 0.0
    %2454 = vmatpush.xpose.msra.mxu0 0.0
    %2455 = vmatpush.xpose.msra.mxu0 0.0
    %2456 = vmatpush.xpose.msra.mxu0 0.0
    %2457 = vmatpush.xpose.msra.mxu0 0.0
    %2458 = vmatpush.xpose.msra.mxu0 0.0
    %2459 = vmatpush.xpose.msra.mxu0 0.0
    %2460 = vmatpush.xpose.msra.mxu0 %v845
    %2461 = vmatpush.xpose.msra.mxu0 %v717
    %2462 = vmatpush.xpose.msra.mxu0 %v589
    %2463 = vmatpush.xpose.msra.mxu0 %v461
    %2464 = vmatmul.f32.gmra.mxu0 %v77
    %v2465 = vpop.f32.mrf.mxu0
    %v2466 = vadd.f32 %v2440, %v2465
    %2467 = vmatmul.f32.gmra.mxu0 %v205
    %v2468 = vpop.f32.mrf.mxu0
    %v2469 = vadd.f32 %v2443, %v2468
    %2470 = vmatmul.f32.gmra.mxu0 %v333
    %v2471 = vpop.f32.mrf.mxu0
    %v2472 = vadd.f32 %v2446, %v2471
    %2473 = vdwg.mxu0
    %2474 = vmatpush.xpose.msra.mxu0 0.0
    %2475 = vmatpush.xpose.msra.mxu0 0.0
    %2476 = vmatpush.xpose.msra.mxu0 0.0
    %2477 = vmatpush.xpose.msra.mxu0 0.0
    %2478 = vmatpush.xpose.msra.mxu0 0.0
    %2479 = vmatpush.xpose.msra.mxu0 0.0
    %2480 = vmatpush.xpose.msra.mxu0 0.0
    %2481 = vmatpush.xpose.msra.mxu0 0.0
    %2482 = vmatpush.xpose.msra.mxu0 0.0
    %2483 = vmatpush.xpose.msra.mxu0 0.0
    %2484 = vmatpush.xpose.msra.mxu0 0.0
    %2485 = vmatpush.xpose.msra.mxu0 0.0
    %2486 = vmatpush.xpose.msra.mxu0 %v846
    %2487 = vmatpush.xpose.msra.mxu0 %v718
    %2488 = vmatpush.xpose.msra.mxu0 %v590
    %2489 = vmatpush.xpose.msra.mxu0 %v462
    %2490 = vmatmul.f32.gmra.mxu0 %v78
    %v2491 = vpop.f32.mrf.mxu0
    %v2492 = vadd.f32 %v2466, %v2491
    %2493 = vmatmul.f32.gmra.mxu0 %v206
    %v2494 = vpop.f32.mrf.mxu0
    %v2495 = vadd.f32 %v2469, %v2494
    %2496 = vmatmul.f32.gmra.mxu0 %v334
    %v2497 = vpop.f32.mrf.mxu0
    %v2498 = vadd.f32 %v2472, %v2497
    %2499 = vdwg.mxu0
    %2500 = vmatpush.xpose.msra.mxu0 0.0
    %2501 = vmatpush.xpose.msra.mxu0 0.0
    %2502 = vmatpush.xpose.msra.mxu0 0.0
    %2503 = vmatpush.xpose.msra.mxu0 0.0
    %2504 = vmatpush.xpose.msra.mxu0 0.0
    %2505 = vmatpush.xpose.msra.mxu0 0.0
    %2506 = vmatpush.xpose.msra.mxu0 0.0
    %2507 = vmatpush.xpose.msra.mxu0 0.0
    %2508 = vmatpush.xpose.msra.mxu0 0.0
    %2509 = vmatpush.xpose.msra.mxu0 0.0
    %2510 = vmatpush.xpose.msra.mxu0 0.0
    %2511 = vmatpush.xpose.msra.mxu0 0.0
    %2512 = vmatpush.xpose.msra.mxu0 %v847
    %2513 = vmatpush.xpose.msra.mxu0 %v719
    %2514 = vmatpush.xpose.msra.mxu0 %v591
    %2515 = vmatpush.xpose.msra.mxu0 %v463
    %2516 = vmatmul.f32.gmra.mxu0 %v79
    %v2517 = vpop.f32.mrf.mxu0
    %v2518 = vadd.f32 %v2492, %v2517
    %2519 = vmatmul.f32.gmra.mxu0 %v207
    %v2520 = vpop.f32.mrf.mxu0
    %v2521 = vadd.f32 %v2495, %v2520
    %2522 = vmatmul.f32.gmra.mxu0 %v335
    %v2523 = vpop.f32.mrf.mxu0
    %v2524 = vadd.f32 %v2498, %v2523
    %2525 = vdwg.mxu0
    %2526 = vmatpush.xpose.msra.mxu0 0.0
    %2527 = vmatpush.xpose.msra.mxu0 0.0
    %2528 = vmatpush.xpose.msra.mxu0 0.0
    %2529 = vmatpush.xpose.msra.mxu0 0.0
    %2530 = vmatpush.xpose.msra.mxu0 0.0
    %2531 = vmatpush.xpose.msra.mxu0 0.0
    %2532 = vmatpush.xpose.msra.mxu0 0.0
    %2533 = vmatpush.xpose.msra.mxu0 0.0
    %2534 = vmatpush.xpose.msra.mxu0 0.0
    %2535 = vmatpush.xpose.msra.mxu0 0.0
    %2536 = vmatpush.xpose.msra.mxu0 0.0
    %2537 = vmatpush.xpose.msra.mxu0 0.0
    %2538 = vmatpush.xpose.msra.mxu0 %v848
    %2539 = vmatpush.xpose.msra.mxu0 %v720
    %2540 = vmatpush.xpose.msra.mxu0 %v592
    %2541 = vmatpush.xpose.msra.mxu0 %v464
    %2542 = vmatmul.f32.gmra.mxu0 %v80
    %v2543 = vpop.f32.mrf.mxu0
    %v2544 = vadd.f32 %v2518, %v2543
    %2545 = vmatmul.f32.gmra.mxu0 %v208
    %v2546 = vpop.f32.mrf.mxu0
    %v2547 = vadd.f32 %v2521, %v2546
    %2548 = vmatmul.f32.gmra.mxu0 %v336
    %v2549 = vpop.f32.mrf.mxu0
    %v2550 = vadd.f32 %v2524, %v2549
    %2551 = vdwg.mxu0
    %2552 = vmatpush.xpose.msra.mxu0 0.0
    %2553 = vmatpush.xpose.msra.mxu0 0.0
    %2554 = vmatpush.xpose.msra.mxu0 0.0
    %2555 = vmatpush.xpose.msra.mxu0 0.0
    %2556 = vmatpush.xpose.msra.mxu0 0.0
    %2557 = vmatpush.xpose.msra.mxu0 0.0
    %2558 = vmatpush.xpose.msra.mxu0 0.0
    %2559 = vmatpush.xpose.msra.mxu0 0.0
    %2560 = vmatpush.xpose.msra.mxu0 0.0
    %2561 = vmatpush.xpose.msra.mxu0 0.0
    %2562 = vmatpush.xpose.msra.mxu0 0.0
    %2563 = vmatpush.xpose.msra.mxu0 0.0
    %2564 = vmatpush.xpose.msra.mxu0 %v849
    %2565 = vmatpush.xpose.msra.mxu0 %v721
    %2566 = vmatpush.xpose.msra.mxu0 %v593
    %2567 = vmatpush.xpose.msra.mxu0 %v465
    %2568 = vmatmul.f32.gmra.mxu0 %v81
    %v2569 = vpop.f32.mrf.mxu0
    %v2570 = vadd.f32 %v2544, %v2569
    %2571 = vmatmul.f32.gmra.mxu0 %v209
    %v2572 = vpop.f32.mrf.mxu0
    %v2573 = vadd.f32 %v2547, %v2572
    %2574 = vmatmul.f32.gmra.mxu0 %v337
    %v2575 = vpop.f32.mrf.mxu0
    %v2576 = vadd.f32 %v2550, %v2575
    %2577 = vdwg.mxu0
    %2578 = vmatpush.xpose.msra.mxu0 0.0
    %2579 = vmatpush.xpose.msra.mxu0 0.0
    %2580 = vmatpush.xpose.msra.mxu0 0.0
    %2581 = vmatpush.xpose.msra.mxu0 0.0
    %2582 = vmatpush.xpose.msra.mxu0 0.0
    %2583 = vmatpush.xpose.msra.mxu0 0.0
    %2584 = vmatpush.xpose.msra.mxu0 0.0
    %2585 = vmatpush.xpose.msra.mxu0 0.0
    %2586 = vmatpush.xpose.msra.mxu0 0.0
    %2587 = vmatpush.xpose.msra.mxu0 0.0
    %2588 = vmatpush.xpose.msra.mxu0 0.0
    %2589 = vmatpush.xpose.msra.mxu0 0.0
    %2590 = vmatpush.xpose.msra.mxu0 %v850
    %2591 = vmatpush.xpose.msra.mxu0 %v722
    %2592 = vmatpush.xpose.msra.mxu0 %v594
    %2593 = vmatpush.xpose.msra.mxu0 %v466
    %2594 = vmatmul.f32.gmra.mxu0 %v82
    %v2595 = vpop.f32.mrf.mxu0
    %v2596 = vadd.f32 %v2570, %v2595
    %2597 = vmatmul.f32.gmra.mxu0 %v210
    %v2598 = vpop.f32.mrf.mxu0
    %v2599 = vadd.f32 %v2573, %v2598
    %2600 = vmatmul.f32.gmra.mxu0 %v338
    %v2601 = vpop.f32.mrf.mxu0
    %v2602 = vadd.f32 %v2576, %v2601
    %2603 = vdwg.mxu0
    %2604 = vmatpush.xpose.msra.mxu0 0.0
    %2605 = vmatpush.xpose.msra.mxu0 0.0
    %2606 = vmatpush.xpose.msra.mxu0 0.0
    %2607 = vmatpush.xpose.msra.mxu0 0.0
    %2608 = vmatpush.xpose.msra.mxu0 0.0
    %2609 = vmatpush.xpose.msra.mxu0 0.0
    %2610 = vmatpush.xpose.msra.mxu0 0.0
    %2611 = vmatpush.xpose.msra.mxu0 0.0
    %2612 = vmatpush.xpose.msra.mxu0 0.0
    %2613 = vmatpush.xpose.msra.mxu0 0.0
    %2614 = vmatpush.xpose.msra.mxu0 0.0
    %2615 = vmatpush.xpose.msra.mxu0 0.0
    %2616 = vmatpush.xpose.msra.mxu0 %v851
    %2617 = vmatpush.xpose.msra.mxu0 %v723
    %2618 = vmatpush.xpose.msra.mxu0 %v595
    %2619 = vmatpush.xpose.msra.mxu0 %v467
    %2620 = vmatmul.f32.gmra.mxu0 %v83
    %v2621 = vpop.f32.mrf.mxu0
    %v2622 = vadd.f32 %v2596, %v2621
    %2623 = vmatmul.f32.gmra.mxu0 %v211
    %v2624 = vpop.f32.mrf.mxu0
    %v2625 = vadd.f32 %v2599, %v2624
    %2626 = vmatmul.f32.gmra.mxu0 %v339
    %v2627 = vpop.f32.mrf.mxu0
    %v2628 = vadd.f32 %v2602, %v2627
    %2629 = vdwg.mxu0
    %2630 = vmatpush.xpose.msra.mxu0 0.0
    %2631 = vmatpush.xpose.msra.mxu0 0.0
    %2632 = vmatpush.xpose.msra.mxu0 0.0
    %2633 = vmatpush.xpose.msra.mxu0 0.0
    %2634 = vmatpush.xpose.msra.mxu0 0.0
    %2635 = vmatpush.xpose.msra.mxu0 0.0
    %2636 = vmatpush.xpose.msra.mxu0 0.0
    %2637 = vmatpush.xpose.msra.mxu0 0.0
    %2638 = vmatpush.xpose.msra.mxu0 0.0
    %2639 = vmatpush.xpose.msra.mxu0 0.0
    %2640 = vmatpush.xpose.msra.mxu0 0.0
    %2641 = vmatpush.xpose.msra.mxu0 0.0
    %2642 = vmatpush.xpose.msra.mxu0 %v852
    %2643 = vmatpush.xpose.msra.mxu0 %v724
    %2644 = vmatpush.xpose.msra.mxu0 %v596
    %2645 = vmatpush.xpose.msra.mxu0 %v468
    %2646 = vmatmul.f32.gmra.mxu0 %v84
    %v2647 = vpop.f32.mrf.mxu0
    %v2648 = vadd.f32 %v2622, %v2647
    %2649 = vmatmul.f32.gmra.mxu0 %v212
    %v2650 = vpop.f32.mrf.mxu0
    %v2651 = vadd.f32 %v2625, %v2650
    %2652 = vmatmul.f32.gmra.mxu0 %v340
    %v2653 = vpop.f32.mrf.mxu0
    %v2654 = vadd.f32 %v2628, %v2653
    %2655 = vdwg.mxu0
    %2656 = vmatpush.xpose.msra.mxu0 0.0
    %2657 = vmatpush.xpose.msra.mxu0 0.0
    %2658 = vmatpush.xpose.msra.mxu0 0.0
    %2659 = vmatpush.xpose.msra.mxu0 0.0
    %2660 = vmatpush.xpose.msra.mxu0 0.0
    %2661 = vmatpush.xpose.msra.mxu0 0.0
    %2662 = vmatpush.xpose.msra.mxu0 0.0
    %2663 = vmatpush.xpose.msra.mxu0 0.0
    %2664 = vmatpush.xpose.msra.mxu0 0.0
    %2665 = vmatpush.xpose.msra.mxu0 0.0
    %2666 = vmatpush.xpose.msra.mxu0 0.0
    %2667 = vmatpush.xpose.msra.mxu0 0.0
    %2668 = vmatpush.xpose.msra.mxu0 %v853
    %2669 = vmatpush.xpose.msra.mxu0 %v725
    %2670 = vmatpush.xpose.msra.mxu0 %v597
    %2671 = vmatpush.xpose.msra.mxu0 %v469
    %2672 = vmatmul.f32.gmra.mxu0 %v85
    %v2673 = vpop.f32.mrf.mxu0
    %v2674 = vadd.f32 %v2648, %v2673
    %2675 = vmatmul.f32.gmra.mxu0 %v213
    %v2676 = vpop.f32.mrf.mxu0
    %v2677 = vadd.f32 %v2651, %v2676
    %2678 = vmatmul.f32.gmra.mxu0 %v341
    %v2679 = vpop.f32.mrf.mxu0
    %v2680 = vadd.f32 %v2654, %v2679
    %2681 = vdwg.mxu0
    %2682 = vmatpush.xpose.msra.mxu0 0.0
    %2683 = vmatpush.xpose.msra.mxu0 0.0
    %2684 = vmatpush.xpose.msra.mxu0 0.0
    %2685 = vmatpush.xpose.msra.mxu0 0.0
    %2686 = vmatpush.xpose.msra.mxu0 0.0
    %2687 = vmatpush.xpose.msra.mxu0 0.0
    %2688 = vmatpush.xpose.msra.mxu0 0.0
    %2689 = vmatpush.xpose.msra.mxu0 0.0
    %2690 = vmatpush.xpose.msra.mxu0 0.0
    %2691 = vmatpush.xpose.msra.mxu0 0.0
    %2692 = vmatpush.xpose.msra.mxu0 0.0
    %2693 = vmatpush.xpose.msra.mxu0 0.0
    %2694 = vmatpush.xpose.msra.mxu0 %v854
    %2695 = vmatpush.xpose.msra.mxu0 %v726
    %2696 = vmatpush.xpose.msra.mxu0 %v598
    %2697 = vmatpush.xpose.msra.mxu0 %v470
    %2698 = vmatmul.f32.gmra.mxu0 %v86
    %v2699 = vpop.f32.mrf.mxu0
    %v2700 = vadd.f32 %v2674, %v2699
    %2701 = vmatmul.f32.gmra.mxu0 %v214
    %v2702 = vpop.f32.mrf.mxu0
    %v2703 = vadd.f32 %v2677, %v2702
    %2704 = vmatmul.f32.gmra.mxu0 %v342
    %v2705 = vpop.f32.mrf.mxu0
    %v2706 = vadd.f32 %v2680, %v2705
    %2707 = vdwg.mxu0
    %2708 = vmatpush.xpose.msra.mxu0 0.0
    %2709 = vmatpush.xpose.msra.mxu0 0.0
    %2710 = vmatpush.xpose.msra.mxu0 0.0
    %2711 = vmatpush.xpose.msra.mxu0 0.0
    %2712 = vmatpush.xpose.msra.mxu0 0.0
    %2713 = vmatpush.xpose.msra.mxu0 0.0
    %2714 = vmatpush.xpose.msra.mxu0 0.0
    %2715 = vmatpush.xpose.msra.mxu0 0.0
    %2716 = vmatpush.xpose.msra.mxu0 0.0
    %2717 = vmatpush.xpose.msra.mxu0 0.0
    %2718 = vmatpush.xpose.msra.mxu0 0.0
    %2719 = vmatpush.xpose.msra.mxu0 0.0
    %2720 = vmatpush.xpose.msra.mxu0 %v855
    %2721 = vmatpush.xpose.msra.mxu0 %v727
    %2722 = vmatpush.xpose.msra.mxu0 %v599
    %2723 = vmatpush.xpose.msra.mxu0 %v471
    %2724 = vmatmul.f32.gmra.mxu0 %v87
    %v2725 = vpop.f32.mrf.mxu0
    %v2726 = vadd.f32 %v2700, %v2725
    %2727 = vmatmul.f32.gmra.mxu0 %v215
    %v2728 = vpop.f32.mrf.mxu0
    %v2729 = vadd.f32 %v2703, %v2728
    %2730 = vmatmul.f32.gmra.mxu0 %v343
    %v2731 = vpop.f32.mrf.mxu0
    %v2732 = vadd.f32 %v2706, %v2731
    %2733 = vdwg.mxu0
    %2734 = vmatpush.xpose.msra.mxu0 0.0
    %2735 = vmatpush.xpose.msra.mxu0 0.0
    %2736 = vmatpush.xpose.msra.mxu0 0.0
    %2737 = vmatpush.xpose.msra.mxu0 0.0
    %2738 = vmatpush.xpose.msra.mxu0 0.0
    %2739 = vmatpush.xpose.msra.mxu0 0.0
    %2740 = vmatpush.xpose.msra.mxu0 0.0
    %2741 = vmatpush.xpose.msra.mxu0 0.0
    %2742 = vmatpush.xpose.msra.mxu0 0.0
    %2743 = vmatpush.xpose.msra.mxu0 0.0
    %2744 = vmatpush.xpose.msra.mxu0 0.0
    %2745 = vmatpush.xpose.msra.mxu0 0.0
    %2746 = vmatpush.xpose.msra.mxu0 %v856
    %2747 = vmatpush.xpose.msra.mxu0 %v728
    %2748 = vmatpush.xpose.msra.mxu0 %v600
    %2749 = vmatpush.xpose.msra.mxu0 %v472
    %2750 = vmatmul.f32.gmra.mxu0 %v88
    %v2751 = vpop.f32.mrf.mxu0
    %v2752 = vadd.f32 %v2726, %v2751
    %2753 = vmatmul.f32.gmra.mxu0 %v216
    %v2754 = vpop.f32.mrf.mxu0
    %v2755 = vadd.f32 %v2729, %v2754
    %2756 = vmatmul.f32.gmra.mxu0 %v344
    %v2757 = vpop.f32.mrf.mxu0
    %v2758 = vadd.f32 %v2732, %v2757
    %2759 = vdwg.mxu0
    %2760 = vmatpush.xpose.msra.mxu0 0.0
    %2761 = vmatpush.xpose.msra.mxu0 0.0
    %2762 = vmatpush.xpose.msra.mxu0 0.0
    %2763 = vmatpush.xpose.msra.mxu0 0.0
    %2764 = vmatpush.xpose.msra.mxu0 0.0
    %2765 = vmatpush.xpose.msra.mxu0 0.0
    %2766 = vmatpush.xpose.msra.mxu0 0.0
    %2767 = vmatpush.xpose.msra.mxu0 0.0
    %2768 = vmatpush.xpose.msra.mxu0 0.0
    %2769 = vmatpush.xpose.msra.mxu0 0.0
    %2770 = vmatpush.xpose.msra.mxu0 0.0
    %2771 = vmatpush.xpose.msra.mxu0 0.0
    %2772 = vmatpush.xpose.msra.mxu0 %v857
    %2773 = vmatpush.xpose.msra.mxu0 %v729
    %2774 = vmatpush.xpose.msra.mxu0 %v601
    %2775 = vmatpush.xpose.msra.mxu0 %v473
    %2776 = vmatmul.f32.gmra.mxu0 %v89
    %v2777 = vpop.f32.mrf.mxu0
    %v2778 = vadd.f32 %v2752, %v2777
    %2779 = vmatmul.f32.gmra.mxu0 %v217
    %v2780 = vpop.f32.mrf.mxu0
    %v2781 = vadd.f32 %v2755, %v2780
    %2782 = vmatmul.f32.gmra.mxu0 %v345
    %v2783 = vpop.f32.mrf.mxu0
    %v2784 = vadd.f32 %v2758, %v2783
    %2785 = vdwg.mxu0
    %2786 = vmatpush.xpose.msra.mxu0 0.0
    %2787 = vmatpush.xpose.msra.mxu0 0.0
    %2788 = vmatpush.xpose.msra.mxu0 0.0
    %2789 = vmatpush.xpose.msra.mxu0 0.0
    %2790 = vmatpush.xpose.msra.mxu0 0.0
    %2791 = vmatpush.xpose.msra.mxu0 0.0
    %2792 = vmatpush.xpose.msra.mxu0 0.0
    %2793 = vmatpush.xpose.msra.mxu0 0.0
    %2794 = vmatpush.xpose.msra.mxu0 0.0
    %2795 = vmatpush.xpose.msra.mxu0 0.0
    %2796 = vmatpush.xpose.msra.mxu0 0.0
    %2797 = vmatpush.xpose.msra.mxu0 0.0
    %2798 = vmatpush.xpose.msra.mxu0 %v858
    %2799 = vmatpush.xpose.msra.mxu0 %v730
    %2800 = vmatpush.xpose.msra.mxu0 %v602
    %2801 = vmatpush.xpose.msra.mxu0 %v474
    %2802 = vmatmul.f32.gmra.mxu0 %v90
    %v2803 = vpop.f32.mrf.mxu0
    %v2804 = vadd.f32 %v2778, %v2803
    %2805 = vmatmul.f32.gmra.mxu0 %v218
    %v2806 = vpop.f32.mrf.mxu0
    %v2807 = vadd.f32 %v2781, %v2806
    %2808 = vmatmul.f32.gmra.mxu0 %v346
    %v2809 = vpop.f32.mrf.mxu0
    %v2810 = vadd.f32 %v2784, %v2809
    %2811 = vdwg.mxu0
    %2812 = vmatpush.xpose.msra.mxu0 0.0
    %2813 = vmatpush.xpose.msra.mxu0 0.0
    %2814 = vmatpush.xpose.msra.mxu0 0.0
    %2815 = vmatpush.xpose.msra.mxu0 0.0
    %2816 = vmatpush.xpose.msra.mxu0 0.0
    %2817 = vmatpush.xpose.msra.mxu0 0.0
    %2818 = vmatpush.xpose.msra.mxu0 0.0
    %2819 = vmatpush.xpose.msra.mxu0 0.0
    %2820 = vmatpush.xpose.msra.mxu0 0.0
    %2821 = vmatpush.xpose.msra.mxu0 0.0
    %2822 = vmatpush.xpose.msra.mxu0 0.0
    %2823 = vmatpush.xpose.msra.mxu0 0.0
    %2824 = vmatpush.xpose.msra.mxu0 %v859
    %2825 = vmatpush.xpose.msra.mxu0 %v731
    %2826 = vmatpush.xpose.msra.mxu0 %v603
    %2827 = vmatpush.xpose.msra.mxu0 %v475
    %2828 = vmatmul.f32.gmra.mxu0 %v91
    %v2829 = vpop.f32.mrf.mxu0
    %v2830 = vadd.f32 %v2804, %v2829
    %2831 = vmatmul.f32.gmra.mxu0 %v219
    %v2832 = vpop.f32.mrf.mxu0
    %v2833 = vadd.f32 %v2807, %v2832
    %2834 = vmatmul.f32.gmra.mxu0 %v347
    %v2835 = vpop.f32.mrf.mxu0
    %v2836 = vadd.f32 %v2810, %v2835
    %2837 = vdwg.mxu0
    %2838 = vmatpush.xpose.msra.mxu0 0.0
    %2839 = vmatpush.xpose.msra.mxu0 0.0
    %2840 = vmatpush.xpose.msra.mxu0 0.0
    %2841 = vmatpush.xpose.msra.mxu0 0.0
    %2842 = vmatpush.xpose.msra.mxu0 0.0
    %2843 = vmatpush.xpose.msra.mxu0 0.0
    %2844 = vmatpush.xpose.msra.mxu0 0.0
    %2845 = vmatpush.xpose.msra.mxu0 0.0
    %2846 = vmatpush.xpose.msra.mxu0 0.0
    %2847 = vmatpush.xpose.msra.mxu0 0.0
    %2848 = vmatpush.xpose.msra.mxu0 0.0
    %2849 = vmatpush.xpose.msra.mxu0 0.0
    %2850 = vmatpush.xpose.msra.mxu0 %v860
    %2851 = vmatpush.xpose.msra.mxu0 %v732
    %2852 = vmatpush.xpose.msra.mxu0 %v604
    %2853 = vmatpush.xpose.msra.mxu0 %v476
    %2854 = vmatmul.f32.gmra.mxu0 %v92
    %v2855 = vpop.f32.mrf.mxu0
    %v2856 = vadd.f32 %v2830, %v2855
    %2857 = vmatmul.f32.gmra.mxu0 %v220
    %v2858 = vpop.f32.mrf.mxu0
    %v2859 = vadd.f32 %v2833, %v2858
    %2860 = vmatmul.f32.gmra.mxu0 %v348
    %v2861 = vpop.f32.mrf.mxu0
    %v2862 = vadd.f32 %v2836, %v2861
    %2863 = vdwg.mxu0
    %2864 = vmatpush.xpose.msra.mxu0 0.0
    %2865 = vmatpush.xpose.msra.mxu0 0.0
    %2866 = vmatpush.xpose.msra.mxu0 0.0
    %2867 = vmatpush.xpose.msra.mxu0 0.0
    %2868 = vmatpush.xpose.msra.mxu0 0.0
    %2869 = vmatpush.xpose.msra.mxu0 0.0
    %2870 = vmatpush.xpose.msra.mxu0 0.0
    %2871 = vmatpush.xpose.msra.mxu0 0.0
    %2872 = vmatpush.xpose.msra.mxu0 0.0
    %2873 = vmatpush.xpose.msra.mxu0 0.0
    %2874 = vmatpush.xpose.msra.mxu0 0.0
    %2875 = vmatpush.xpose.msra.mxu0 0.0
    %2876 = vmatpush.xpose.msra.mxu0 %v861
    %2877 = vmatpush.xpose.msra.mxu0 %v733
    %2878 = vmatpush.xpose.msra.mxu0 %v605
    %2879 = vmatpush.xpose.msra.mxu0 %v477
    %2880 = vmatmul.f32.gmra.mxu0 %v93
    %v2881 = vpop.f32.mrf.mxu0
    %v2882 = vadd.f32 %v2856, %v2881
    %2883 = vmatmul.f32.gmra.mxu0 %v221
    %v2884 = vpop.f32.mrf.mxu0
    %v2885 = vadd.f32 %v2859, %v2884
    %2886 = vmatmul.f32.gmra.mxu0 %v349
    %v2887 = vpop.f32.mrf.mxu0
    %v2888 = vadd.f32 %v2862, %v2887
    %2889 = vdwg.mxu0
    %2890 = vmatpush.xpose.msra.mxu0 0.0
    %2891 = vmatpush.xpose.msra.mxu0 0.0
    %2892 = vmatpush.xpose.msra.mxu0 0.0
    %2893 = vmatpush.xpose.msra.mxu0 0.0
    %2894 = vmatpush.xpose.msra.mxu0 0.0
    %2895 = vmatpush.xpose.msra.mxu0 0.0
    %2896 = vmatpush.xpose.msra.mxu0 0.0
    %2897 = vmatpush.xpose.msra.mxu0 0.0
    %2898 = vmatpush.xpose.msra.mxu0 0.0
    %2899 = vmatpush.xpose.msra.mxu0 0.0
    %2900 = vmatpush.xpose.msra.mxu0 0.0
    %2901 = vmatpush.xpose.msra.mxu0 0.0
    %2902 = vmatpush.xpose.msra.mxu0 %v862
    %2903 = vmatpush.xpose.msra.mxu0 %v734
    %2904 = vmatpush.xpose.msra.mxu0 %v606
    %2905 = vmatpush.xpose.msra.mxu0 %v478
    %2906 = vmatmul.f32.gmra.mxu0 %v94
    %v2907 = vpop.f32.mrf.mxu0
    %v2908 = vadd.f32 %v2882, %v2907
    %2909 = vmatmul.f32.gmra.mxu0 %v222
    %v2910 = vpop.f32.mrf.mxu0
    %v2911 = vadd.f32 %v2885, %v2910
    %2912 = vmatmul.f32.gmra.mxu0 %v350
    %v2913 = vpop.f32.mrf.mxu0
    %v2914 = vadd.f32 %v2888, %v2913
    %2915 = vdwg.mxu0
    %2916 = vmatpush.xpose.msra.mxu0 0.0
    %2917 = vmatpush.xpose.msra.mxu0 0.0
    %2918 = vmatpush.xpose.msra.mxu0 0.0
    %2919 = vmatpush.xpose.msra.mxu0 0.0
    %2920 = vmatpush.xpose.msra.mxu0 0.0
    %2921 = vmatpush.xpose.msra.mxu0 0.0
    %2922 = vmatpush.xpose.msra.mxu0 0.0
    %2923 = vmatpush.xpose.msra.mxu0 0.0
    %2924 = vmatpush.xpose.msra.mxu0 0.0
    %2925 = vmatpush.xpose.msra.mxu0 0.0
    %2926 = vmatpush.xpose.msra.mxu0 0.0
    %2927 = vmatpush.xpose.msra.mxu0 0.0
    %2928 = vmatpush.xpose.msra.mxu0 %v863
    %2929 = vmatpush.xpose.msra.mxu0 %v735
    %2930 = vmatpush.xpose.msra.mxu0 %v607
    %2931 = vmatpush.xpose.msra.mxu0 %v479
    %2932 = vmatmul.f32.gmra.mxu0 %v95
    %v2933 = vpop.f32.mrf.mxu0
    %v2934 = vadd.f32 %v2908, %v2933
    %2935 = vmatmul.f32.gmra.mxu0 %v223
    %v2936 = vpop.f32.mrf.mxu0
    %v2937 = vadd.f32 %v2911, %v2936
    %2938 = vmatmul.f32.gmra.mxu0 %v351
    %v2939 = vpop.f32.mrf.mxu0
    %v2940 = vadd.f32 %v2914, %v2939
    %2941 = vdwg.mxu0
    %2942 = vmatpush.xpose.msra.mxu0 0.0
    %2943 = vmatpush.xpose.msra.mxu0 0.0
    %2944 = vmatpush.xpose.msra.mxu0 0.0
    %2945 = vmatpush.xpose.msra.mxu0 0.0
    %2946 = vmatpush.xpose.msra.mxu0 0.0
    %2947 = vmatpush.xpose.msra.mxu0 0.0
    %2948 = vmatpush.xpose.msra.mxu0 0.0
    %2949 = vmatpush.xpose.msra.mxu0 0.0
    %2950 = vmatpush.xpose.msra.mxu0 0.0
    %2951 = vmatpush.xpose.msra.mxu0 0.0
    %2952 = vmatpush.xpose.msra.mxu0 0.0
    %2953 = vmatpush.xpose.msra.mxu0 0.0
    %2954 = vmatpush.xpose.msra.mxu0 %v864
    %2955 = vmatpush.xpose.msra.mxu0 %v736
    %2956 = vmatpush.xpose.msra.mxu0 %v608
    %2957 = vmatpush.xpose.msra.mxu0 %v480
    %2958 = vmatmul.f32.gmra.mxu0 %v96
    %v2959 = vpop.f32.mrf.mxu0
    %v2960 = vadd.f32 %v2934, %v2959
    %2961 = vmatmul.f32.gmra.mxu0 %v224
    %v2962 = vpop.f32.mrf.mxu0
    %v2963 = vadd.f32 %v2937, %v2962
    %2964 = vmatmul.f32.gmra.mxu0 %v352
    %v2965 = vpop.f32.mrf.mxu0
    %v2966 = vadd.f32 %v2940, %v2965
    %2967 = vdwg.mxu0
    %2968 = vmatpush.xpose.msra.mxu0 0.0
    %2969 = vmatpush.xpose.msra.mxu0 0.0
    %2970 = vmatpush.xpose.msra.mxu0 0.0
    %2971 = vmatpush.xpose.msra.mxu0 0.0
    %2972 = vmatpush.xpose.msra.mxu0 0.0
    %2973 = vmatpush.xpose.msra.mxu0 0.0
    %2974 = vmatpush.xpose.msra.mxu0 0.0
    %2975 = vmatpush.xpose.msra.mxu0 0.0
    %2976 = vmatpush.xpose.msra.mxu0 0.0
    %2977 = vmatpush.xpose.msra.mxu0 0.0
    %2978 = vmatpush.xpose.msra.mxu0 0.0
    %2979 = vmatpush.xpose.msra.mxu0 0.0
    %2980 = vmatpush.xpose.msra.mxu0 %v865
    %2981 = vmatpush.xpose.msra.mxu0 %v737
    %2982 = vmatpush.xpose.msra.mxu0 %v609
    %2983 = vmatpush.xpose.msra.mxu0 %v481
    %2984 = vmatmul.f32.gmra.mxu0 %v97
    %v2985 = vpop.f32.mrf.mxu0
    %v2986 = vadd.f32 %v2960, %v2985
    %2987 = vmatmul.f32.gmra.mxu0 %v225
    %v2988 = vpop.f32.mrf.mxu0
    %v2989 = vadd.f32 %v2963, %v2988
    %2990 = vmatmul.f32.gmra.mxu0 %v353
    %v2991 = vpop.f32.mrf.mxu0
    %v2992 = vadd.f32 %v2966, %v2991
    %2993 = vdwg.mxu0
    %2994 = vmatpush.xpose.msra.mxu0 0.0
    %2995 = vmatpush.xpose.msra.mxu0 0.0
    %2996 = vmatpush.xpose.msra.mxu0 0.0
    %2997 = vmatpush.xpose.msra.mxu0 0.0
    %2998 = vmatpush.xpose.msra.mxu0 0.0
    %2999 = vmatpush.xpose.msra.mxu0 0.0
    %3000 = vmatpush.xpose.msra.mxu0 0.0
    %3001 = vmatpush.xpose.msra.mxu0 0.0
    %3002 = vmatpush.xpose.msra.mxu0 0.0
    %3003 = vmatpush.xpose.msra.mxu0 0.0
    %3004 = vmatpush.xpose.msra.mxu0 0.0
    %3005 = vmatpush.xpose.msra.mxu0 0.0
    %3006 = vmatpush.xpose.msra.mxu0 %v866
    %3007 = vmatpush.xpose.msra.mxu0 %v738
    %3008 = vmatpush.xpose.msra.mxu0 %v610
    %3009 = vmatpush.xpose.msra.mxu0 %v482
    %3010 = vmatmul.f32.gmra.mxu0 %v98
    %v3011 = vpop.f32.mrf.mxu0
    %v3012 = vadd.f32 %v2986, %v3011
    %3013 = vmatmul.f32.gmra.mxu0 %v226
    %v3014 = vpop.f32.mrf.mxu0
    %v3015 = vadd.f32 %v2989, %v3014
    %3016 = vmatmul.f32.gmra.mxu0 %v354
    %v3017 = vpop.f32.mrf.mxu0
    %v3018 = vadd.f32 %v2992, %v3017
    %3019 = vdwg.mxu0
    %3020 = vmatpush.xpose.msra.mxu0 0.0
    %3021 = vmatpush.xpose.msra.mxu0 0.0
    %3022 = vmatpush.xpose.msra.mxu0 0.0
    %3023 = vmatpush.xpose.msra.mxu0 0.0
    %3024 = vmatpush.xpose.msra.mxu0 0.0
    %3025 = vmatpush.xpose.msra.mxu0 0.0
    %3026 = vmatpush.xpose.msra.mxu0 0.0
    %3027 = vmatpush.xpose.msra.mxu0 0.0
    %3028 = vmatpush.xpose.msra.mxu0 0.0
    %3029 = vmatpush.xpose.msra.mxu0 0.0
    %3030 = vmatpush.xpose.msra.mxu0 0.0
    %3031 = vmatpush.xpose.msra.mxu0 0.0
    %3032 = vmatpush.xpose.msra.mxu0 %v867
    %3033 = vmatpush.xpose.msra.mxu0 %v739
    %3034 = vmatpush.xpose.msra.mxu0 %v611
    %3035 = vmatpush.xpose.msra.mxu0 %v483
    %3036 = vmatmul.f32.gmra.mxu0 %v99
    %v3037 = vpop.f32.mrf.mxu0
    %v3038 = vadd.f32 %v3012, %v3037
    %3039 = vmatmul.f32.gmra.mxu0 %v227
    %v3040 = vpop.f32.mrf.mxu0
    %v3041 = vadd.f32 %v3015, %v3040
    %3042 = vmatmul.f32.gmra.mxu0 %v355
    %v3043 = vpop.f32.mrf.mxu0
    %v3044 = vadd.f32 %v3018, %v3043
    %3045 = vdwg.mxu0
    %3046 = vmatpush.xpose.msra.mxu0 0.0
    %3047 = vmatpush.xpose.msra.mxu0 0.0
    %3048 = vmatpush.xpose.msra.mxu0 0.0
    %3049 = vmatpush.xpose.msra.mxu0 0.0
    %3050 = vmatpush.xpose.msra.mxu0 0.0
    %3051 = vmatpush.xpose.msra.mxu0 0.0
    %3052 = vmatpush.xpose.msra.mxu0 0.0
    %3053 = vmatpush.xpose.msra.mxu0 0.0
    %3054 = vmatpush.xpose.msra.mxu0 0.0
    %3055 = vmatpush.xpose.msra.mxu0 0.0
    %3056 = vmatpush.xpose.msra.mxu0 0.0
    %3057 = vmatpush.xpose.msra.mxu0 0.0
    %3058 = vmatpush.xpose.msra.mxu0 %v868
    %3059 = vmatpush.xpose.msra.mxu0 %v740
    %3060 = vmatpush.xpose.msra.mxu0 %v612
    %3061 = vmatpush.xpose.msra.mxu0 %v484
    %3062 = vmatmul.f32.gmra.mxu0 %v100
    %v3063 = vpop.f32.mrf.mxu0
    %v3064 = vadd.f32 %v3038, %v3063
    %3065 = vmatmul.f32.gmra.mxu0 %v228
    %v3066 = vpop.f32.mrf.mxu0
    %v3067 = vadd.f32 %v3041, %v3066
    %3068 = vmatmul.f32.gmra.mxu0 %v356
    %v3069 = vpop.f32.mrf.mxu0
    %v3070 = vadd.f32 %v3044, %v3069
    %3071 = vdwg.mxu0
    %3072 = vmatpush.xpose.msra.mxu0 0.0
    %3073 = vmatpush.xpose.msra.mxu0 0.0
    %3074 = vmatpush.xpose.msra.mxu0 0.0
    %3075 = vmatpush.xpose.msra.mxu0 0.0
    %3076 = vmatpush.xpose.msra.mxu0 0.0
    %3077 = vmatpush.xpose.msra.mxu0 0.0
    %3078 = vmatpush.xpose.msra.mxu0 0.0
    %3079 = vmatpush.xpose.msra.mxu0 0.0
    %3080 = vmatpush.xpose.msra.mxu0 0.0
    %3081 = vmatpush.xpose.msra.mxu0 0.0
    %3082 = vmatpush.xpose.msra.mxu0 0.0
    %3083 = vmatpush.xpose.msra.mxu0 0.0
    %3084 = vmatpush.xpose.msra.mxu0 %v869
    %3085 = vmatpush.xpose.msra.mxu0 %v741
    %3086 = vmatpush.xpose.msra.mxu0 %v613
    %3087 = vmatpush.xpose.msra.mxu0 %v485
    %3088 = vmatmul.f32.gmra.mxu0 %v101
    %v3089 = vpop.f32.mrf.mxu0
    %v3090 = vadd.f32 %v3064, %v3089
    %3091 = vmatmul.f32.gmra.mxu0 %v229
    %v3092 = vpop.f32.mrf.mxu0
    %v3093 = vadd.f32 %v3067, %v3092
    %3094 = vmatmul.f32.gmra.mxu0 %v357
    %v3095 = vpop.f32.mrf.mxu0
    %v3096 = vadd.f32 %v3070, %v3095
    %3097 = vdwg.mxu0
    %3098 = vmatpush.xpose.msra.mxu0 0.0
    %3099 = vmatpush.xpose.msra.mxu0 0.0
    %3100 = vmatpush.xpose.msra.mxu0 0.0
    %3101 = vmatpush.xpose.msra.mxu0 0.0
    %3102 = vmatpush.xpose.msra.mxu0 0.0
    %3103 = vmatpush.xpose.msra.mxu0 0.0
    %3104 = vmatpush.xpose.msra.mxu0 0.0
    %3105 = vmatpush.xpose.msra.mxu0 0.0
    %3106 = vmatpush.xpose.msra.mxu0 0.0
    %3107 = vmatpush.xpose.msra.mxu0 0.0
    %3108 = vmatpush.xpose.msra.mxu0 0.0
    %3109 = vmatpush.xpose.msra.mxu0 0.0
    %3110 = vmatpush.xpose.msra.mxu0 %v870
    %3111 = vmatpush.xpose.msra.mxu0 %v742
    %3112 = vmatpush.xpose.msra.mxu0 %v614
    %3113 = vmatpush.xpose.msra.mxu0 %v486
    %3114 = vmatmul.f32.gmra.mxu0 %v102
    %v3115 = vpop.f32.mrf.mxu0
    %v3116 = vadd.f32 %v3090, %v3115
    %3117 = vmatmul.f32.gmra.mxu0 %v230
    %v3118 = vpop.f32.mrf.mxu0
    %v3119 = vadd.f32 %v3093, %v3118
    %3120 = vmatmul.f32.gmra.mxu0 %v358
    %v3121 = vpop.f32.mrf.mxu0
    %v3122 = vadd.f32 %v3096, %v3121
    %3123 = vdwg.mxu0
    %3124 = vmatpush.xpose.msra.mxu0 0.0
    %3125 = vmatpush.xpose.msra.mxu0 0.0
    %3126 = vmatpush.xpose.msra.mxu0 0.0
    %3127 = vmatpush.xpose.msra.mxu0 0.0
    %3128 = vmatpush.xpose.msra.mxu0 0.0
    %3129 = vmatpush.xpose.msra.mxu0 0.0
    %3130 = vmatpush.xpose.msra.mxu0 0.0
    %3131 = vmatpush.xpose.msra.mxu0 0.0
    %3132 = vmatpush.xpose.msra.mxu0 0.0
    %3133 = vmatpush.xpose.msra.mxu0 0.0
    %3134 = vmatpush.xpose.msra.mxu0 0.0
    %3135 = vmatpush.xpose.msra.mxu0 0.0
    %3136 = vmatpush.xpose.msra.mxu0 %v871
    %3137 = vmatpush.xpose.msra.mxu0 %v743
    %3138 = vmatpush.xpose.msra.mxu0 %v615
    %3139 = vmatpush.xpose.msra.mxu0 %v487
    %3140 = vmatmul.f32.gmra.mxu0 %v103
    %v3141 = vpop.f32.mrf.mxu0
    %v3142 = vadd.f32 %v3116, %v3141
    %3143 = vmatmul.f32.gmra.mxu0 %v231
    %v3144 = vpop.f32.mrf.mxu0
    %v3145 = vadd.f32 %v3119, %v3144
    %3146 = vmatmul.f32.gmra.mxu0 %v359
    %v3147 = vpop.f32.mrf.mxu0
    %v3148 = vadd.f32 %v3122, %v3147
    %3149 = vdwg.mxu0
    %3150 = vmatpush.xpose.msra.mxu0 0.0
    %3151 = vmatpush.xpose.msra.mxu0 0.0
    %3152 = vmatpush.xpose.msra.mxu0 0.0
    %3153 = vmatpush.xpose.msra.mxu0 0.0
    %3154 = vmatpush.xpose.msra.mxu0 0.0
    %3155 = vmatpush.xpose.msra.mxu0 0.0
    %3156 = vmatpush.xpose.msra.mxu0 0.0
    %3157 = vmatpush.xpose.msra.mxu0 0.0
    %3158 = vmatpush.xpose.msra.mxu0 0.0
    %3159 = vmatpush.xpose.msra.mxu0 0.0
    %3160 = vmatpush.xpose.msra.mxu0 0.0
    %3161 = vmatpush.xpose.msra.mxu0 0.0
    %3162 = vmatpush.xpose.msra.mxu0 %v872
    %3163 = vmatpush.xpose.msra.mxu0 %v744
    %3164 = vmatpush.xpose.msra.mxu0 %v616
    %3165 = vmatpush.xpose.msra.mxu0 %v488
    %3166 = vmatmul.f32.gmra.mxu0 %v104
    %v3167 = vpop.f32.mrf.mxu0
    %v3168 = vadd.f32 %v3142, %v3167
    %3169 = vmatmul.f32.gmra.mxu0 %v232
    %v3170 = vpop.f32.mrf.mxu0
    %v3171 = vadd.f32 %v3145, %v3170
    %3172 = vmatmul.f32.gmra.mxu0 %v360
    %v3173 = vpop.f32.mrf.mxu0
    %v3174 = vadd.f32 %v3148, %v3173
    %3175 = vdwg.mxu0
    %3176 = vmatpush.xpose.msra.mxu0 0.0
    %3177 = vmatpush.xpose.msra.mxu0 0.0
    %3178 = vmatpush.xpose.msra.mxu0 0.0
    %3179 = vmatpush.xpose.msra.mxu0 0.0
    %3180 = vmatpush.xpose.msra.mxu0 0.0
    %3181 = vmatpush.xpose.msra.mxu0 0.0
    %3182 = vmatpush.xpose.msra.mxu0 0.0
    %3183 = vmatpush.xpose.msra.mxu0 0.0
    %3184 = vmatpush.xpose.msra.mxu0 0.0
    %3185 = vmatpush.xpose.msra.mxu0 0.0
    %3186 = vmatpush.xpose.msra.mxu0 0.0
    %3187 = vmatpush.xpose.msra.mxu0 0.0
    %3188 = vmatpush.xpose.msra.mxu0 %v873
    %3189 = vmatpush.xpose.msra.mxu0 %v745
    %3190 = vmatpush.xpose.msra.mxu0 %v617
    %3191 = vmatpush.xpose.msra.mxu0 %v489
    %3192 = vmatmul.f32.gmra.mxu0 %v105
    %v3193 = vpop.f32.mrf.mxu0
    %v3194 = vadd.f32 %v3168, %v3193
    %3195 = vmatmul.f32.gmra.mxu0 %v233
    %v3196 = vpop.f32.mrf.mxu0
    %v3197 = vadd.f32 %v3171, %v3196
    %3198 = vmatmul.f32.gmra.mxu0 %v361
    %v3199 = vpop.f32.mrf.mxu0
    %v3200 = vadd.f32 %v3174, %v3199
    %3201 = vdwg.mxu0
    %3202 = vmatpush.xpose.msra.mxu0 0.0
    %3203 = vmatpush.xpose.msra.mxu0 0.0
    %3204 = vmatpush.xpose.msra.mxu0 0.0
    %3205 = vmatpush.xpose.msra.mxu0 0.0
    %3206 = vmatpush.xpose.msra.mxu0 0.0
    %3207 = vmatpush.xpose.msra.mxu0 0.0
    %3208 = vmatpush.xpose.msra.mxu0 0.0
    %3209 = vmatpush.xpose.msra.mxu0 0.0
    %3210 = vmatpush.xpose.msra.mxu0 0.0
    %3211 = vmatpush.xpose.msra.mxu0 0.0
    %3212 = vmatpush.xpose.msra.mxu0 0.0
    %3213 = vmatpush.xpose.msra.mxu0 0.0
    %3214 = vmatpush.xpose.msra.mxu0 %v874
    %3215 = vmatpush.xpose.msra.mxu0 %v746
    %3216 = vmatpush.xpose.msra.mxu0 %v618
    %3217 = vmatpush.xpose.msra.mxu0 %v490
    %3218 = vmatmul.f32.gmra.mxu0 %v106
    %v3219 = vpop.f32.mrf.mxu0
    %v3220 = vadd.f32 %v3194, %v3219
    %3221 = vmatmul.f32.gmra.mxu0 %v234
    %v3222 = vpop.f32.mrf.mxu0
    %v3223 = vadd.f32 %v3197, %v3222
    %3224 = vmatmul.f32.gmra.mxu0 %v362
    %v3225 = vpop.f32.mrf.mxu0
    %v3226 = vadd.f32 %v3200, %v3225
    %3227 = vdwg.mxu0
    %3228 = vmatpush.xpose.msra.mxu0 0.0
    %3229 = vmatpush.xpose.msra.mxu0 0.0
    %3230 = vmatpush.xpose.msra.mxu0 0.0
    %3231 = vmatpush.xpose.msra.mxu0 0.0
    %3232 = vmatpush.xpose.msra.mxu0 0.0
    %3233 = vmatpush.xpose.msra.mxu0 0.0
    %3234 = vmatpush.xpose.msra.mxu0 0.0
    %3235 = vmatpush.xpose.msra.mxu0 0.0
    %3236 = vmatpush.xpose.msra.mxu0 0.0
    %3237 = vmatpush.xpose.msra.mxu0 0.0
    %3238 = vmatpush.xpose.msra.mxu0 0.0
    %3239 = vmatpush.xpose.msra.mxu0 0.0
    %3240 = vmatpush.xpose.msra.mxu0 %v875
    %3241 = vmatpush.xpose.msra.mxu0 %v747
    %3242 = vmatpush.xpose.msra.mxu0 %v619
    %3243 = vmatpush.xpose.msra.mxu0 %v491
    %3244 = vmatmul.f32.gmra.mxu0 %v107
    %v3245 = vpop.f32.mrf.mxu0
    %v3246 = vadd.f32 %v3220, %v3245
    %3247 = vmatmul.f32.gmra.mxu0 %v235
    %v3248 = vpop.f32.mrf.mxu0
    %v3249 = vadd.f32 %v3223, %v3248
    %3250 = vmatmul.f32.gmra.mxu0 %v363
    %v3251 = vpop.f32.mrf.mxu0
    %v3252 = vadd.f32 %v3226, %v3251
    %3253 = vdwg.mxu0
    %3254 = vmatpush.xpose.msra.mxu0 0.0
    %3255 = vmatpush.xpose.msra.mxu0 0.0
    %3256 = vmatpush.xpose.msra.mxu0 0.0
    %3257 = vmatpush.xpose.msra.mxu0 0.0
    %3258 = vmatpush.xpose.msra.mxu0 0.0
    %3259 = vmatpush.xpose.msra.mxu0 0.0
    %3260 = vmatpush.xpose.msra.mxu0 0.0
    %3261 = vmatpush.xpose.msra.mxu0 0.0
    %3262 = vmatpush.xpose.msra.mxu0 0.0
    %3263 = vmatpush.xpose.msra.mxu0 0.0
    %3264 = vmatpush.xpose.msra.mxu0 0.0
    %3265 = vmatpush.xpose.msra.mxu0 0.0
    %3266 = vmatpush.xpose.msra.mxu0 %v876
    %3267 = vmatpush.xpose.msra.mxu0 %v748
    %3268 = vmatpush.xpose.msra.mxu0 %v620
    %3269 = vmatpush.xpose.msra.mxu0 %v492
    %3270 = vmatmul.f32.gmra.mxu0 %v108
    %v3271 = vpop.f32.mrf.mxu0
    %v3272 = vadd.f32 %v3246, %v3271
    %3273 = vmatmul.f32.gmra.mxu0 %v236
    %v3274 = vpop.f32.mrf.mxu0
    %v3275 = vadd.f32 %v3249, %v3274
    %3276 = vmatmul.f32.gmra.mxu0 %v364
    %v3277 = vpop.f32.mrf.mxu0
    %v3278 = vadd.f32 %v3252, %v3277
    %3279 = vdwg.mxu0
    %3280 = vmatpush.xpose.msra.mxu0 0.0
    %3281 = vmatpush.xpose.msra.mxu0 0.0
    %3282 = vmatpush.xpose.msra.mxu0 0.0
    %3283 = vmatpush.xpose.msra.mxu0 0.0
    %3284 = vmatpush.xpose.msra.mxu0 0.0
    %3285 = vmatpush.xpose.msra.mxu0 0.0
    %3286 = vmatpush.xpose.msra.mxu0 0.0
    %3287 = vmatpush.xpose.msra.mxu0 0.0
    %3288 = vmatpush.xpose.msra.mxu0 0.0
    %3289 = vmatpush.xpose.msra.mxu0 0.0
    %3290 = vmatpush.xpose.msra.mxu0 0.0
    %3291 = vmatpush.xpose.msra.mxu0 0.0
    %3292 = vmatpush.xpose.msra.mxu0 %v877
    %3293 = vmatpush.xpose.msra.mxu0 %v749
    %3294 = vmatpush.xpose.msra.mxu0 %v621
    %3295 = vmatpush.xpose.msra.mxu0 %v493
    %3296 = vmatmul.f32.gmra.mxu0 %v109
    %v3297 = vpop.f32.mrf.mxu0
    %v3298 = vadd.f32 %v3272, %v3297
    %3299 = vmatmul.f32.gmra.mxu0 %v237
    %v3300 = vpop.f32.mrf.mxu0
    %v3301 = vadd.f32 %v3275, %v3300
    %3302 = vmatmul.f32.gmra.mxu0 %v365
    %v3303 = vpop.f32.mrf.mxu0
    %v3304 = vadd.f32 %v3278, %v3303
    %3305 = vdwg.mxu0
    %3306 = vmatpush.xpose.msra.mxu0 0.0
    %3307 = vmatpush.xpose.msra.mxu0 0.0
    %3308 = vmatpush.xpose.msra.mxu0 0.0
    %3309 = vmatpush.xpose.msra.mxu0 0.0
    %3310 = vmatpush.xpose.msra.mxu0 0.0
    %3311 = vmatpush.xpose.msra.mxu0 0.0
    %3312 = vmatpush.xpose.msra.mxu0 0.0
    %3313 = vmatpush.xpose.msra.mxu0 0.0
    %3314 = vmatpush.xpose.msra.mxu0 0.0
    %3315 = vmatpush.xpose.msra.mxu0 0.0
    %3316 = vmatpush.xpose.msra.mxu0 0.0
    %3317 = vmatpush.xpose.msra.mxu0 0.0
    %3318 = vmatpush.xpose.msra.mxu0 %v878
    %3319 = vmatpush.xpose.msra.mxu0 %v750
    %3320 = vmatpush.xpose.msra.mxu0 %v622
    %3321 = vmatpush.xpose.msra.mxu0 %v494
    %3322 = vmatmul.f32.gmra.mxu0 %v110
    %v3323 = vpop.f32.mrf.mxu0
    %v3324 = vadd.f32 %v3298, %v3323
    %3325 = vmatmul.f32.gmra.mxu0 %v238
    %v3326 = vpop.f32.mrf.mxu0
    %v3327 = vadd.f32 %v3301, %v3326
    %3328 = vmatmul.f32.gmra.mxu0 %v366
    %v3329 = vpop.f32.mrf.mxu0
    %v3330 = vadd.f32 %v3304, %v3329
    %3331 = vdwg.mxu0
    %3332 = vmatpush.xpose.msra.mxu0 0.0
    %3333 = vmatpush.xpose.msra.mxu0 0.0
    %3334 = vmatpush.xpose.msra.mxu0 0.0
    %3335 = vmatpush.xpose.msra.mxu0 0.0
    %3336 = vmatpush.xpose.msra.mxu0 0.0
    %3337 = vmatpush.xpose.msra.mxu0 0.0
    %3338 = vmatpush.xpose.msra.mxu0 0.0
    %3339 = vmatpush.xpose.msra.mxu0 0.0
    %3340 = vmatpush.xpose.msra.mxu0 0.0
    %3341 = vmatpush.xpose.msra.mxu0 0.0
    %3342 = vmatpush.xpose.msra.mxu0 0.0
    %3343 = vmatpush.xpose.msra.mxu0 0.0
    %3344 = vmatpush.xpose.msra.mxu0 %v879
    %3345 = vmatpush.xpose.msra.mxu0 %v751
    %3346 = vmatpush.xpose.msra.mxu0 %v623
    %3347 = vmatpush.xpose.msra.mxu0 %v495
    %3348 = vmatmul.f32.gmra.mxu0 %v111
    %v3349 = vpop.f32.mrf.mxu0
    %v3350 = vadd.f32 %v3324, %v3349
    %3351 = vmatmul.f32.gmra.mxu0 %v239
    %v3352 = vpop.f32.mrf.mxu0
    %v3353 = vadd.f32 %v3327, %v3352
    %3354 = vmatmul.f32.gmra.mxu0 %v367
    %v3355 = vpop.f32.mrf.mxu0
    %v3356 = vadd.f32 %v3330, %v3355
    %3357 = vdwg.mxu0
    %3358 = vmatpush.xpose.msra.mxu0 0.0
    %3359 = vmatpush.xpose.msra.mxu0 0.0
    %3360 = vmatpush.xpose.msra.mxu0 0.0
    %3361 = vmatpush.xpose.msra.mxu0 0.0
    %3362 = vmatpush.xpose.msra.mxu0 0.0
    %3363 = vmatpush.xpose.msra.mxu0 0.0
    %3364 = vmatpush.xpose.msra.mxu0 0.0
    %3365 = vmatpush.xpose.msra.mxu0 0.0
    %3366 = vmatpush.xpose.msra.mxu0 0.0
    %3367 = vmatpush.xpose.msra.mxu0 0.0
    %3368 = vmatpush.xpose.msra.mxu0 0.0
    %3369 = vmatpush.xpose.msra.mxu0 0.0
    %3370 = vmatpush.xpose.msra.mxu0 %v880
    %3371 = vmatpush.xpose.msra.mxu0 %v752
    %3372 = vmatpush.xpose.msra.mxu0 %v624
    %3373 = vmatpush.xpose.msra.mxu0 %v496
    %3374 = vmatmul.f32.gmra.mxu0 %v112
    %v3375 = vpop.f32.mrf.mxu0
    %v3376 = vadd.f32 %v3350, %v3375
    %3377 = vmatmul.f32.gmra.mxu0 %v240
    %v3378 = vpop.f32.mrf.mxu0
    %v3379 = vadd.f32 %v3353, %v3378
    %3380 = vmatmul.f32.gmra.mxu0 %v368
    %v3381 = vpop.f32.mrf.mxu0
    %v3382 = vadd.f32 %v3356, %v3381
    %3383 = vdwg.mxu0
    %3384 = vmatpush.xpose.msra.mxu0 0.0
    %3385 = vmatpush.xpose.msra.mxu0 0.0
    %3386 = vmatpush.xpose.msra.mxu0 0.0
    %3387 = vmatpush.xpose.msra.mxu0 0.0
    %3388 = vmatpush.xpose.msra.mxu0 0.0
    %3389 = vmatpush.xpose.msra.mxu0 0.0
    %3390 = vmatpush.xpose.msra.mxu0 0.0
    %3391 = vmatpush.xpose.msra.mxu0 0.0
    %3392 = vmatpush.xpose.msra.mxu0 0.0
    %3393 = vmatpush.xpose.msra.mxu0 0.0
    %3394 = vmatpush.xpose.msra.mxu0 0.0
    %3395 = vmatpush.xpose.msra.mxu0 0.0
    %3396 = vmatpush.xpose.msra.mxu0 %v881
    %3397 = vmatpush.xpose.msra.mxu0 %v753
    %3398 = vmatpush.xpose.msra.mxu0 %v625
    %3399 = vmatpush.xpose.msra.mxu0 %v497
    %3400 = vmatmul.f32.gmra.mxu0 %v113
    %v3401 = vpop.f32.mrf.mxu0
    %v3402 = vadd.f32 %v3376, %v3401
    %3403 = vmatmul.f32.gmra.mxu0 %v241
    %v3404 = vpop.f32.mrf.mxu0
    %v3405 = vadd.f32 %v3379, %v3404
    %3406 = vmatmul.f32.gmra.mxu0 %v369
    %v3407 = vpop.f32.mrf.mxu0
    %v3408 = vadd.f32 %v3382, %v3407
    %3409 = vdwg.mxu0
    %3410 = vmatpush.xpose.msra.mxu0 0.0
    %3411 = vmatpush.xpose.msra.mxu0 0.0
    %3412 = vmatpush.xpose.msra.mxu0 0.0
    %3413 = vmatpush.xpose.msra.mxu0 0.0
    %3414 = vmatpush.xpose.msra.mxu0 0.0
    %3415 = vmatpush.xpose.msra.mxu0 0.0
    %3416 = vmatpush.xpose.msra.mxu0 0.0
    %3417 = vmatpush.xpose.msra.mxu0 0.0
    %3418 = vmatpush.xpose.msra.mxu0 0.0
    %3419 = vmatpush.xpose.msra.mxu0 0.0
    %3420 = vmatpush.xpose.msra.mxu0 0.0
    %3421 = vmatpush.xpose.msra.mxu0 0.0
    %3422 = vmatpush.xpose.msra.mxu0 %v882
    %3423 = vmatpush.xpose.msra.mxu0 %v754
    %3424 = vmatpush.xpose.msra.mxu0 %v626
    %3425 = vmatpush.xpose.msra.mxu0 %v498
    %3426 = vmatmul.f32.gmra.mxu0 %v114
    %v3427 = vpop.f32.mrf.mxu0
    %v3428 = vadd.f32 %v3402, %v3427
    %3429 = vmatmul.f32.gmra.mxu0 %v242
    %v3430 = vpop.f32.mrf.mxu0
    %v3431 = vadd.f32 %v3405, %v3430
    %3432 = vmatmul.f32.gmra.mxu0 %v370
    %v3433 = vpop.f32.mrf.mxu0
    %v3434 = vadd.f32 %v3408, %v3433
    %3435 = vdwg.mxu0
    %3436 = vmatpush.xpose.msra.mxu0 0.0
    %3437 = vmatpush.xpose.msra.mxu0 0.0
    %3438 = vmatpush.xpose.msra.mxu0 0.0
    %3439 = vmatpush.xpose.msra.mxu0 0.0
    %3440 = vmatpush.xpose.msra.mxu0 0.0
    %3441 = vmatpush.xpose.msra.mxu0 0.0
    %3442 = vmatpush.xpose.msra.mxu0 0.0
    %3443 = vmatpush.xpose.msra.mxu0 0.0
    %3444 = vmatpush.xpose.msra.mxu0 0.0
    %3445 = vmatpush.xpose.msra.mxu0 0.0
    %3446 = vmatpush.xpose.msra.mxu0 0.0
    %3447 = vmatpush.xpose.msra.mxu0 0.0
    %3448 = vmatpush.xpose.msra.mxu0 %v883
    %3449 = vmatpush.xpose.msra.mxu0 %v755
    %3450 = vmatpush.xpose.msra.mxu0 %v627
    %3451 = vmatpush.xpose.msra.mxu0 %v499
    %3452 = vmatmul.f32.gmra.mxu0 %v115
    %v3453 = vpop.f32.mrf.mxu0
    %v3454 = vadd.f32 %v3428, %v3453
    %3455 = vmatmul.f32.gmra.mxu0 %v243
    %v3456 = vpop.f32.mrf.mxu0
    %v3457 = vadd.f32 %v3431, %v3456
    %3458 = vmatmul.f32.gmra.mxu0 %v371
    %v3459 = vpop.f32.mrf.mxu0
    %v3460 = vadd.f32 %v3434, %v3459
    %3461 = vdwg.mxu0
    %3462 = vmatpush.xpose.msra.mxu0 0.0
    %3463 = vmatpush.xpose.msra.mxu0 0.0
    %3464 = vmatpush.xpose.msra.mxu0 0.0
    %3465 = vmatpush.xpose.msra.mxu0 0.0
    %3466 = vmatpush.xpose.msra.mxu0 0.0
    %3467 = vmatpush.xpose.msra.mxu0 0.0
    %3468 = vmatpush.xpose.msra.mxu0 0.0
    %3469 = vmatpush.xpose.msra.mxu0 0.0
    %3470 = vmatpush.xpose.msra.mxu0 0.0
    %3471 = vmatpush.xpose.msra.mxu0 0.0
    %3472 = vmatpush.xpose.msra.mxu0 0.0
    %3473 = vmatpush.xpose.msra.mxu0 0.0
    %3474 = vmatpush.xpose.msra.mxu0 %v884
    %3475 = vmatpush.xpose.msra.mxu0 %v756
    %3476 = vmatpush.xpose.msra.mxu0 %v628
    %3477 = vmatpush.xpose.msra.mxu0 %v500
    %3478 = vmatmul.f32.gmra.mxu0 %v116
    %v3479 = vpop.f32.mrf.mxu0
    %v3480 = vadd.f32 %v3454, %v3479
    %3481 = vmatmul.f32.gmra.mxu0 %v244
    %v3482 = vpop.f32.mrf.mxu0
    %v3483 = vadd.f32 %v3457, %v3482
    %3484 = vmatmul.f32.gmra.mxu0 %v372
    %v3485 = vpop.f32.mrf.mxu0
    %v3486 = vadd.f32 %v3460, %v3485
    %3487 = vdwg.mxu0
    %3488 = vmatpush.xpose.msra.mxu0 0.0
    %3489 = vmatpush.xpose.msra.mxu0 0.0
    %3490 = vmatpush.xpose.msra.mxu0 0.0
    %3491 = vmatpush.xpose.msra.mxu0 0.0
    %3492 = vmatpush.xpose.msra.mxu0 0.0
    %3493 = vmatpush.xpose.msra.mxu0 0.0
    %3494 = vmatpush.xpose.msra.mxu0 0.0
    %3495 = vmatpush.xpose.msra.mxu0 0.0
    %3496 = vmatpush.xpose.msra.mxu0 0.0
    %3497 = vmatpush.xpose.msra.mxu0 0.0
    %3498 = vmatpush.xpose.msra.mxu0 0.0
    %3499 = vmatpush.xpose.msra.mxu0 0.0
    %3500 = vmatpush.xpose.msra.mxu0 %v885
    %3501 = vmatpush.xpose.msra.mxu0 %v757
    %3502 = vmatpush.xpose.msra.mxu0 %v629
    %3503 = vmatpush.xpose.msra.mxu0 %v501
    %3504 = vmatmul.f32.gmra.mxu0 %v117
    %v3505 = vpop.f32.mrf.mxu0
    %v3506 = vadd.f32 %v3480, %v3505
    %3507 = vmatmul.f32.gmra.mxu0 %v245
    %v3508 = vpop.f32.mrf.mxu0
    %v3509 = vadd.f32 %v3483, %v3508
    %3510 = vmatmul.f32.gmra.mxu0 %v373
    %v3511 = vpop.f32.mrf.mxu0
    %v3512 = vadd.f32 %v3486, %v3511
    %3513 = vdwg.mxu0
    %3514 = vmatpush.xpose.msra.mxu0 0.0
    %3515 = vmatpush.xpose.msra.mxu0 0.0
    %3516 = vmatpush.xpose.msra.mxu0 0.0
    %3517 = vmatpush.xpose.msra.mxu0 0.0
    %3518 = vmatpush.xpose.msra.mxu0 0.0
    %3519 = vmatpush.xpose.msra.mxu0 0.0
    %3520 = vmatpush.xpose.msra.mxu0 0.0
    %3521 = vmatpush.xpose.msra.mxu0 0.0
    %3522 = vmatpush.xpose.msra.mxu0 0.0
    %3523 = vmatpush.xpose.msra.mxu0 0.0
    %3524 = vmatpush.xpose.msra.mxu0 0.0
    %3525 = vmatpush.xpose.msra.mxu0 0.0
    %3526 = vmatpush.xpose.msra.mxu0 %v886
    %3527 = vmatpush.xpose.msra.mxu0 %v758
    %3528 = vmatpush.xpose.msra.mxu0 %v630
    %3529 = vmatpush.xpose.msra.mxu0 %v502
    %3530 = vmatmul.f32.gmra.mxu0 %v118
    %v3531 = vpop.f32.mrf.mxu0
    %v3532 = vadd.f32 %v3506, %v3531
    %3533 = vmatmul.f32.gmra.mxu0 %v246
    %v3534 = vpop.f32.mrf.mxu0
    %v3535 = vadd.f32 %v3509, %v3534
    %3536 = vmatmul.f32.gmra.mxu0 %v374
    %v3537 = vpop.f32.mrf.mxu0
    %v3538 = vadd.f32 %v3512, %v3537
    %3539 = vdwg.mxu0
    %3540 = vmatpush.xpose.msra.mxu0 0.0
    %3541 = vmatpush.xpose.msra.mxu0 0.0
    %3542 = vmatpush.xpose.msra.mxu0 0.0
    %3543 = vmatpush.xpose.msra.mxu0 0.0
    %3544 = vmatpush.xpose.msra.mxu0 0.0
    %3545 = vmatpush.xpose.msra.mxu0 0.0
    %3546 = vmatpush.xpose.msra.mxu0 0.0
    %3547 = vmatpush.xpose.msra.mxu0 0.0
    %3548 = vmatpush.xpose.msra.mxu0 0.0
    %3549 = vmatpush.xpose.msra.mxu0 0.0
    %3550 = vmatpush.xpose.msra.mxu0 0.0
    %3551 = vmatpush.xpose.msra.mxu0 0.0
    %3552 = vmatpush.xpose.msra.mxu0 %v887
    %3553 = vmatpush.xpose.msra.mxu0 %v759
    %3554 = vmatpush.xpose.msra.mxu0 %v631
    %3555 = vmatpush.xpose.msra.mxu0 %v503
    %3556 = vmatmul.f32.gmra.mxu0 %v119
    %v3557 = vpop.f32.mrf.mxu0
    %v3558 = vadd.f32 %v3532, %v3557
    %3559 = vmatmul.f32.gmra.mxu0 %v247
    %v3560 = vpop.f32.mrf.mxu0
    %v3561 = vadd.f32 %v3535, %v3560
    %3562 = vmatmul.f32.gmra.mxu0 %v375
    %v3563 = vpop.f32.mrf.mxu0
    %v3564 = vadd.f32 %v3538, %v3563
    %3565 = vdwg.mxu0
    %3566 = vmatpush.xpose.msra.mxu0 0.0
    %3567 = vmatpush.xpose.msra.mxu0 0.0
    %3568 = vmatpush.xpose.msra.mxu0 0.0
    %3569 = vmatpush.xpose.msra.mxu0 0.0
    %3570 = vmatpush.xpose.msra.mxu0 0.0
    %3571 = vmatpush.xpose.msra.mxu0 0.0
    %3572 = vmatpush.xpose.msra.mxu0 0.0
    %3573 = vmatpush.xpose.msra.mxu0 0.0
    %3574 = vmatpush.xpose.msra.mxu0 0.0
    %3575 = vmatpush.xpose.msra.mxu0 0.0
    %3576 = vmatpush.xpose.msra.mxu0 0.0
    %3577 = vmatpush.xpose.msra.mxu0 0.0
    %3578 = vmatpush.xpose.msra.mxu0 %v888
    %3579 = vmatpush.xpose.msra.mxu0 %v760
    %3580 = vmatpush.xpose.msra.mxu0 %v632
    %3581 = vmatpush.xpose.msra.mxu0 %v504
    %3582 = vmatmul.f32.gmra.mxu0 %v120
    %v3583 = vpop.f32.mrf.mxu0
    %v3584 = vadd.f32 %v3558, %v3583
    %3585 = vmatmul.f32.gmra.mxu0 %v248
    %v3586 = vpop.f32.mrf.mxu0
    %v3587 = vadd.f32 %v3561, %v3586
    %3588 = vmatmul.f32.gmra.mxu0 %v376
    %v3589 = vpop.f32.mrf.mxu0
    %v3590 = vadd.f32 %v3564, %v3589
    %3591 = vdwg.mxu0
    %3592 = vmatpush.xpose.msra.mxu0 0.0
    %3593 = vmatpush.xpose.msra.mxu0 0.0
    %3594 = vmatpush.xpose.msra.mxu0 0.0
    %3595 = vmatpush.xpose.msra.mxu0 0.0
    %3596 = vmatpush.xpose.msra.mxu0 0.0
    %3597 = vmatpush.xpose.msra.mxu0 0.0
    %3598 = vmatpush.xpose.msra.mxu0 0.0
    %3599 = vmatpush.xpose.msra.mxu0 0.0
    %3600 = vmatpush.xpose.msra.mxu0 0.0
    %3601 = vmatpush.xpose.msra.mxu0 0.0
    %3602 = vmatpush.xpose.msra.mxu0 0.0
    %3603 = vmatpush.xpose.msra.mxu0 0.0
    %3604 = vmatpush.xpose.msra.mxu0 %v889
    %3605 = vmatpush.xpose.msra.mxu0 %v761
    %3606 = vmatpush.xpose.msra.mxu0 %v633
    %3607 = vmatpush.xpose.msra.mxu0 %v505
    %3608 = vmatmul.f32.gmra.mxu0 %v121
    %v3609 = vpop.f32.mrf.mxu0
    %v3610 = vadd.f32 %v3584, %v3609
    %3611 = vmatmul.f32.gmra.mxu0 %v249
    %v3612 = vpop.f32.mrf.mxu0
    %v3613 = vadd.f32 %v3587, %v3612
    %3614 = vmatmul.f32.gmra.mxu0 %v377
    %v3615 = vpop.f32.mrf.mxu0
    %v3616 = vadd.f32 %v3590, %v3615
    %3617 = vdwg.mxu0
    %3618 = vmatpush.xpose.msra.mxu0 0.0
    %3619 = vmatpush.xpose.msra.mxu0 0.0
    %3620 = vmatpush.xpose.msra.mxu0 0.0
    %3621 = vmatpush.xpose.msra.mxu0 0.0
    %3622 = vmatpush.xpose.msra.mxu0 0.0
    %3623 = vmatpush.xpose.msra.mxu0 0.0
    %3624 = vmatpush.xpose.msra.mxu0 0.0
    %3625 = vmatpush.xpose.msra.mxu0 0.0
    %3626 = vmatpush.xpose.msra.mxu0 0.0
    %3627 = vmatpush.xpose.msra.mxu0 0.0
    %3628 = vmatpush.xpose.msra.mxu0 0.0
    %3629 = vmatpush.xpose.msra.mxu0 0.0
    %3630 = vmatpush.xpose.msra.mxu0 %v890
    %3631 = vmatpush.xpose.msra.mxu0 %v762
    %3632 = vmatpush.xpose.msra.mxu0 %v634
    %3633 = vmatpush.xpose.msra.mxu0 %v506
    %3634 = vmatmul.f32.gmra.mxu0 %v122
    %v3635 = vpop.f32.mrf.mxu0
    %v3636 = vadd.f32 %v3610, %v3635
    %3637 = vmatmul.f32.gmra.mxu0 %v250
    %v3638 = vpop.f32.mrf.mxu0
    %v3639 = vadd.f32 %v3613, %v3638
    %3640 = vmatmul.f32.gmra.mxu0 %v378
    %v3641 = vpop.f32.mrf.mxu0
    %v3642 = vadd.f32 %v3616, %v3641
    %3643 = vdwg.mxu0
    %3644 = vmatpush.xpose.msra.mxu0 0.0
    %3645 = vmatpush.xpose.msra.mxu0 0.0
    %3646 = vmatpush.xpose.msra.mxu0 0.0
    %3647 = vmatpush.xpose.msra.mxu0 0.0
    %3648 = vmatpush.xpose.msra.mxu0 0.0
    %3649 = vmatpush.xpose.msra.mxu0 0.0
    %3650 = vmatpush.xpose.msra.mxu0 0.0
    %3651 = vmatpush.xpose.msra.mxu0 0.0
    %3652 = vmatpush.xpose.msra.mxu0 0.0
    %3653 = vmatpush.xpose.msra.mxu0 0.0
    %3654 = vmatpush.xpose.msra.mxu0 0.0
    %3655 = vmatpush.xpose.msra.mxu0 0.0
    %3656 = vmatpush.xpose.msra.mxu0 %v891
    %3657 = vmatpush.xpose.msra.mxu0 %v763
    %3658 = vmatpush.xpose.msra.mxu0 %v635
    %3659 = vmatpush.xpose.msra.mxu0 %v507
    %3660 = vmatmul.f32.gmra.mxu0 %v123
    %v3661 = vpop.f32.mrf.mxu0
    %v3662 = vadd.f32 %v3636, %v3661
    %3663 = vmatmul.f32.gmra.mxu0 %v251
    %v3664 = vpop.f32.mrf.mxu0
    %v3665 = vadd.f32 %v3639, %v3664
    %3666 = vmatmul.f32.gmra.mxu0 %v379
    %v3667 = vpop.f32.mrf.mxu0
    %v3668 = vadd.f32 %v3642, %v3667
    %3669 = vdwg.mxu0
    %3670 = vmatpush.xpose.msra.mxu0 0.0
    %3671 = vmatpush.xpose.msra.mxu0 0.0
    %3672 = vmatpush.xpose.msra.mxu0 0.0
    %3673 = vmatpush.xpose.msra.mxu0 0.0
    %3674 = vmatpush.xpose.msra.mxu0 0.0
    %3675 = vmatpush.xpose.msra.mxu0 0.0
    %3676 = vmatpush.xpose.msra.mxu0 0.0
    %3677 = vmatpush.xpose.msra.mxu0 0.0
    %3678 = vmatpush.xpose.msra.mxu0 0.0
    %3679 = vmatpush.xpose.msra.mxu0 0.0
    %3680 = vmatpush.xpose.msra.mxu0 0.0
    %3681 = vmatpush.xpose.msra.mxu0 0.0
    %3682 = vmatpush.xpose.msra.mxu0 %v892
    %3683 = vmatpush.xpose.msra.mxu0 %v764
    %3684 = vmatpush.xpose.msra.mxu0 %v636
    %3685 = vmatpush.xpose.msra.mxu0 %v508
    %3686 = vmatmul.f32.gmra.mxu0 %v124
    %v3687 = vpop.f32.mrf.mxu0
    %v3688 = vadd.f32 %v3662, %v3687
    %3689 = vmatmul.f32.gmra.mxu0 %v252
    %v3690 = vpop.f32.mrf.mxu0
    %v3691 = vadd.f32 %v3665, %v3690
    %3692 = vmatmul.f32.gmra.mxu0 %v380
    %v3693 = vpop.f32.mrf.mxu0
    %v3694 = vadd.f32 %v3668, %v3693
    %3695 = vdwg.mxu0
    %3696 = vmatpush.xpose.msra.mxu0 0.0
    %3697 = vmatpush.xpose.msra.mxu0 0.0
    %3698 = vmatpush.xpose.msra.mxu0 0.0
    %3699 = vmatpush.xpose.msra.mxu0 0.0
    %3700 = vmatpush.xpose.msra.mxu0 0.0
    %3701 = vmatpush.xpose.msra.mxu0 0.0
    %3702 = vmatpush.xpose.msra.mxu0 0.0
    %3703 = vmatpush.xpose.msra.mxu0 0.0
    %3704 = vmatpush.xpose.msra.mxu0 0.0
    %3705 = vmatpush.xpose.msra.mxu0 0.0
    %3706 = vmatpush.xpose.msra.mxu0 0.0
    %3707 = vmatpush.xpose.msra.mxu0 0.0
    %3708 = vmatpush.xpose.msra.mxu0 %v893
    %3709 = vmatpush.xpose.msra.mxu0 %v765
    %3710 = vmatpush.xpose.msra.mxu0 %v637
    %3711 = vmatpush.xpose.msra.mxu0 %v509
    %3712 = vmatmul.f32.gmra.mxu0 %v125
    %v3713 = vpop.f32.mrf.mxu0
    %v3714 = vadd.f32 %v3688, %v3713
    %3715 = vmatmul.f32.gmra.mxu0 %v253
    %v3716 = vpop.f32.mrf.mxu0
    %v3717 = vadd.f32 %v3691, %v3716
    %3718 = vmatmul.f32.gmra.mxu0 %v381
    %v3719 = vpop.f32.mrf.mxu0
    %v3720 = vadd.f32 %v3694, %v3719
    %3721 = vdwg.mxu0
    %3722 = vmatpush.xpose.msra.mxu0 0.0
    %3723 = vmatpush.xpose.msra.mxu0 0.0
    %3724 = vmatpush.xpose.msra.mxu0 0.0
    %3725 = vmatpush.xpose.msra.mxu0 0.0
    %3726 = vmatpush.xpose.msra.mxu0 0.0
    %3727 = vmatpush.xpose.msra.mxu0 0.0
    %3728 = vmatpush.xpose.msra.mxu0 0.0
    %3729 = vmatpush.xpose.msra.mxu0 0.0
    %3730 = vmatpush.xpose.msra.mxu0 0.0
    %3731 = vmatpush.xpose.msra.mxu0 0.0
    %3732 = vmatpush.xpose.msra.mxu0 0.0
    %3733 = vmatpush.xpose.msra.mxu0 0.0
    %3734 = vmatpush.xpose.msra.mxu0 %v894
    %3735 = vmatpush.xpose.msra.mxu0 %v766
    %3736 = vmatpush.xpose.msra.mxu0 %v638
    %3737 = vmatpush.xpose.msra.mxu0 %v510
    %3738 = vmatmul.f32.gmra.mxu0 %v126
    %v3739 = vpop.f32.mrf.mxu0
    %v3740 = vadd.f32 %v3714, %v3739
    %3741 = vmatmul.f32.gmra.mxu0 %v254
    %v3742 = vpop.f32.mrf.mxu0
    %v3743 = vadd.f32 %v3717, %v3742
    %3744 = vmatmul.f32.gmra.mxu0 %v382
    %v3745 = vpop.f32.mrf.mxu0
    %v3746 = vadd.f32 %v3720, %v3745
    %3747 = vdwg.mxu0
    %3748 = vmatpush.xpose.msra.mxu0 0.0
    %3749 = vmatpush.xpose.msra.mxu0 0.0
    %3750 = vmatpush.xpose.msra.mxu0 0.0
    %3751 = vmatpush.xpose.msra.mxu0 0.0
    %3752 = vmatpush.xpose.msra.mxu0 0.0
    %3753 = vmatpush.xpose.msra.mxu0 0.0
    %3754 = vmatpush.xpose.msra.mxu0 0.0
    %3755 = vmatpush.xpose.msra.mxu0 0.0
    %3756 = vmatpush.xpose.msra.mxu0 0.0
    %3757 = vmatpush.xpose.msra.mxu0 0.0
    %3758 = vmatpush.xpose.msra.mxu0 0.0
    %3759 = vmatpush.xpose.msra.mxu0 0.0
    %3760 = vmatpush.xpose.msra.mxu0 %v895
    %3761 = vmatpush.xpose.msra.mxu0 %v767
    %3762 = vmatpush.xpose.msra.mxu0 %v639
    %3763 = vmatpush.xpose.msra.mxu0 %v511
    %3764 = vmatmul.f32.gmra.mxu0 %v127
    %v3765 = vpop.f32.mrf.mxu0
    %v3766 = vadd.f32 %v3740, %v3765
    %3767 = vmatmul.f32.gmra.mxu0 %v255
    %v3768 = vpop.f32.mrf.mxu0
    %v3769 = vadd.f32 %v3743, %v3768
    %3770 = vmatmul.f32.gmra.mxu0 %v383
    %v3771 = vpop.f32.mrf.mxu0
    %v3772 = vadd.f32 %v3746, %v3771
    %3773 = vdwg.mxu0
    %3774 = vmatpush.xpose.msra.mxu0 0.0
    %3775 = vmatpush.xpose.msra.mxu0 0.0
    %3776 = vmatpush.xpose.msra.mxu0 0.0
    %3777 = vmatpush.xpose.msra.mxu0 0.0
    %3778 = vmatpush.xpose.msra.mxu0 0.0
    %3779 = vmatpush.xpose.msra.mxu0 0.0
    %3780 = vmatpush.xpose.msra.mxu0 0.0
    %3781 = vmatpush.xpose.msra.mxu0 0.0
    %3782 = vmatpush.xpose.msra.mxu0 0.0
    %3783 = vmatpush.xpose.msra.mxu0 0.0
    %3784 = vmatpush.xpose.msra.mxu0 0.0
    %3785 = vmatpush.xpose.msra.mxu0 0.0
    %3786 = vmatpush.xpose.msra.mxu0 %v896
    %3787 = vmatpush.xpose.msra.mxu0 %v768
    %3788 = vmatpush.xpose.msra.mxu0 %v640
    %3789 = vmatpush.xpose.msra.mxu0 %v512
    %3790 = vmatmul.f32.gmra.mxu0 %v128
    %v3791 = vpop.f32.mrf.mxu0
    %v3792 = vadd.f32 %v3766, %v3791
    %3793 = vmatmul.f32.gmra.mxu0 %v256
    %v3794 = vpop.f32.mrf.mxu0
    %v3795 = vadd.f32 %v3769, %v3794
    %3796 = vmatmul.f32.gmra.mxu0 %v384
    %v3797 = vpop.f32.mrf.mxu0
    %v3798 = vadd.f32 %v3772, %v3797
    %3799 = vdwg.mxu0
    %3800 = vmatpush.xpose.msra.mxu0 0.0
    %3801 = vmatpush.xpose.msra.mxu0 0.0
    %3802 = vmatpush.xpose.msra.mxu0 0.0
    %3803 = vmatpush.xpose.msra.mxu0 0.0
    %3804 = vmatpush.xpose.msra.mxu0 0.0
    %3805 = vmatpush.xpose.msra.mxu0 0.0
    %3806 = vmatpush.xpose.msra.mxu0 0.0
    %3807 = vmatpush.xpose.msra.mxu0 0.0
    %3808 = vmatpush.xpose.msra.mxu0 0.0
    %3809 = vmatpush.xpose.msra.mxu0 0.0
    %3810 = vmatpush.xpose.msra.mxu0 0.0
    %3811 = vmatpush.xpose.msra.mxu0 0.0
    %3812 = vmatpush.xpose.msra.mxu0 %v897
    %3813 = vmatpush.xpose.msra.mxu0 %v769
    %3814 = vmatpush.xpose.msra.mxu0 %v641
    %3815 = vmatpush.xpose.msra.mxu0 %v513
    %3816 = vmatmul.f32.gmra.mxu0 %v129
    %v3817 = vpop.f32.mrf.mxu0
    %v3818 = vadd.f32 %v3792, %v3817
    %3819 = vmatmul.f32.gmra.mxu0 %v257
    %v3820 = vpop.f32.mrf.mxu0
    %v3821 = vadd.f32 %v3795, %v3820
    %3822 = vmatmul.f32.gmra.mxu0 %v385
    %v3823 = vpop.f32.mrf.mxu0
    %v3824 = vadd.f32 %v3798, %v3823
    %3825 = vdwg.mxu0
    %3826 = vmatpush.xpose.msra.mxu0 0.0
    %3827 = vmatpush.xpose.msra.mxu0 0.0
    %3828 = vmatpush.xpose.msra.mxu0 0.0
    %3829 = vmatpush.xpose.msra.mxu0 0.0
    %3830 = vmatpush.xpose.msra.mxu0 0.0
    %3831 = vmatpush.xpose.msra.mxu0 0.0
    %3832 = vmatpush.xpose.msra.mxu0 0.0
    %3833 = vmatpush.xpose.msra.mxu0 0.0
    %3834 = vmatpush.xpose.msra.mxu0 0.0
    %3835 = vmatpush.xpose.msra.mxu0 0.0
    %3836 = vmatpush.xpose.msra.mxu0 0.0
    %3837 = vmatpush.xpose.msra.mxu0 0.0
    %3838 = vmatpush.xpose.msra.mxu0 %v898
    %3839 = vmatpush.xpose.msra.mxu0 %v770
    %3840 = vmatpush.xpose.msra.mxu0 %v642
    %3841 = vmatpush.xpose.msra.mxu0 %v514
    %3842 = vmatmul.f32.gmra.mxu0 %v130
    %v3843 = vpop.f32.mrf.mxu0
    %v3844 = vadd.f32 %v3818, %v3843
    %3845 = vmatmul.f32.gmra.mxu0 %v258
    %v3846 = vpop.f32.mrf.mxu0
    %v3847 = vadd.f32 %v3821, %v3846
    %3848 = vmatmul.f32.gmra.mxu0 %v386
    %v3849 = vpop.f32.mrf.mxu0
    %v3850 = vadd.f32 %v3824, %v3849
    %3851 = vdwg.mxu0
    %3852 = vmatpush.xpose.msra.mxu0 0.0
    %3853 = vmatpush.xpose.msra.mxu0 0.0
    %3854 = vmatpush.xpose.msra.mxu0 0.0
    %3855 = vmatpush.xpose.msra.mxu0 0.0
    %3856 = vmatpush.xpose.msra.mxu0 0.0
    %3857 = vmatpush.xpose.msra.mxu0 0.0
    %3858 = vmatpush.xpose.msra.mxu0 0.0
    %3859 = vmatpush.xpose.msra.mxu0 0.0
    %3860 = vmatpush.xpose.msra.mxu0 0.0
    %3861 = vmatpush.xpose.msra.mxu0 0.0
    %3862 = vmatpush.xpose.msra.mxu0 0.0
    %3863 = vmatpush.xpose.msra.mxu0 0.0
    %3864 = vmatpush.xpose.msra.mxu0 %v899
    %3865 = vmatpush.xpose.msra.mxu0 %v771
    %3866 = vmatpush.xpose.msra.mxu0 %v643
    %3867 = vmatpush.xpose.msra.mxu0 %v515
    %3868 = vmatmul.f32.gmra.mxu0 %v131
    %v3869 = vpop.f32.mrf.mxu0
    %v3870 = vadd.f32 %v3844, %v3869
    %3871 = vmatmul.f32.gmra.mxu0 %v259
    %v3872 = vpop.f32.mrf.mxu0
    %v3873 = vadd.f32 %v3847, %v3872
    %3874 = vmatmul.f32.gmra.mxu0 %v387
    %v3875 = vpop.f32.mrf.mxu0
    %v3876 = vadd.f32 %v3850, %v3875
    %3877 = vdwg.mxu0
    %3878 = vmatpush.xpose.msra.mxu0 0.0
    %3879 = vmatpush.xpose.msra.mxu0 0.0
    %3880 = vmatpush.xpose.msra.mxu0 0.0
    %3881 = vmatpush.xpose.msra.mxu0 0.0
    %3882 = vmatpush.xpose.msra.mxu0 0.0
    %3883 = vmatpush.xpose.msra.mxu0 0.0
    %3884 = vmatpush.xpose.msra.mxu0 0.0
    %3885 = vmatpush.xpose.msra.mxu0 0.0
    %3886 = vmatpush.xpose.msra.mxu0 0.0
    %3887 = vmatpush.xpose.msra.mxu0 0.0
    %3888 = vmatpush.xpose.msra.mxu0 0.0
    %3889 = vmatpush.xpose.msra.mxu0 0.0
    %3890 = vmatpush.xpose.msra.mxu0 %v900
    %3891 = vmatpush.xpose.msra.mxu0 %v772
    %3892 = vmatpush.xpose.msra.mxu0 %v644
    %3893 = vmatpush.xpose.msra.mxu0 %v516
    %3894 = vmatmul.f32.gmra.mxu0 %v132
    %v3895 = vpop.f32.mrf.mxu0
    %v3896 = vadd.f32 %v3870, %v3895
    %3897 = vmatmul.f32.gmra.mxu0 %v260
    %v3898 = vpop.f32.mrf.mxu0
    %v3899 = vadd.f32 %v3873, %v3898
    %3900 = vmatmul.f32.gmra.mxu0 %v388
    %v3901 = vpop.f32.mrf.mxu0
    %v3902 = vadd.f32 %v3876, %v3901
    %3903 = vdwg.mxu0
    %3904 = vmatpush.xpose.msra.mxu0 0.0
    %3905 = vmatpush.xpose.msra.mxu0 0.0
    %3906 = vmatpush.xpose.msra.mxu0 0.0
    %3907 = vmatpush.xpose.msra.mxu0 0.0
    %3908 = vmatpush.xpose.msra.mxu0 0.0
    %3909 = vmatpush.xpose.msra.mxu0 0.0
    %3910 = vmatpush.xpose.msra.mxu0 0.0
    %3911 = vmatpush.xpose.msra.mxu0 0.0
    %3912 = vmatpush.xpose.msra.mxu0 0.0
    %3913 = vmatpush.xpose.msra.mxu0 0.0
    %3914 = vmatpush.xpose.msra.mxu0 0.0
    %3915 = vmatpush.xpose.msra.mxu0 0.0
    %3916 = vmatpush.xpose.msra.mxu0 %v901
    %3917 = vmatpush.xpose.msra.mxu0 %v773
    %3918 = vmatpush.xpose.msra.mxu0 %v645
    %3919 = vmatpush.xpose.msra.mxu0 %v517
    %3920 = vmatmul.f32.gmra.mxu0 %v133
    %v3921 = vpop.f32.mrf.mxu0
    %v3922 = vadd.f32 %v3896, %v3921
    %3923 = vmatmul.f32.gmra.mxu0 %v261
    %v3924 = vpop.f32.mrf.mxu0
    %v3925 = vadd.f32 %v3899, %v3924
    %3926 = vmatmul.f32.gmra.mxu0 %v389
    %v3927 = vpop.f32.mrf.mxu0
    %v3928 = vadd.f32 %v3902, %v3927
    %3929 = vdwg.mxu0
    %3930 = vmatpush.xpose.msra.mxu0 0.0
    %3931 = vmatpush.xpose.msra.mxu0 0.0
    %3932 = vmatpush.xpose.msra.mxu0 0.0
    %3933 = vmatpush.xpose.msra.mxu0 0.0
    %3934 = vmatpush.xpose.msra.mxu0 0.0
    %3935 = vmatpush.xpose.msra.mxu0 0.0
    %3936 = vmatpush.xpose.msra.mxu0 0.0
    %3937 = vmatpush.xpose.msra.mxu0 0.0
    %3938 = vmatpush.xpose.msra.mxu0 0.0
    %3939 = vmatpush.xpose.msra.mxu0 0.0
    %3940 = vmatpush.xpose.msra.mxu0 0.0
    %3941 = vmatpush.xpose.msra.mxu0 0.0
    %3942 = vmatpush.xpose.msra.mxu0 %v902
    %3943 = vmatpush.xpose.msra.mxu0 %v774
    %3944 = vmatpush.xpose.msra.mxu0 %v646
    %3945 = vmatpush.xpose.msra.mxu0 %v518
    %3946 = vmatmul.f32.gmra.mxu0 %v134
    %v3947 = vpop.f32.mrf.mxu0
    %v3948 = vadd.f32 %v3922, %v3947
    %3949 = vmatmul.f32.gmra.mxu0 %v262
    %v3950 = vpop.f32.mrf.mxu0
    %v3951 = vadd.f32 %v3925, %v3950
    %3952 = vmatmul.f32.gmra.mxu0 %v390
    %v3953 = vpop.f32.mrf.mxu0
    %v3954 = vadd.f32 %v3928, %v3953
    %3955 = vdwg.mxu0
    %3956 = vmatpush.xpose.msra.mxu0 0.0
    %3957 = vmatpush.xpose.msra.mxu0 0.0
    %3958 = vmatpush.xpose.msra.mxu0 0.0
    %3959 = vmatpush.xpose.msra.mxu0 0.0
    %3960 = vmatpush.xpose.msra.mxu0 0.0
    %3961 = vmatpush.xpose.msra.mxu0 0.0
    %3962 = vmatpush.xpose.msra.mxu0 0.0
    %3963 = vmatpush.xpose.msra.mxu0 0.0
    %3964 = vmatpush.xpose.msra.mxu0 0.0
    %3965 = vmatpush.xpose.msra.mxu0 0.0
    %3966 = vmatpush.xpose.msra.mxu0 0.0
    %3967 = vmatpush.xpose.msra.mxu0 0.0
    %3968 = vmatpush.xpose.msra.mxu0 %v903
    %3969 = vmatpush.xpose.msra.mxu0 %v775
    %3970 = vmatpush.xpose.msra.mxu0 %v647
    %3971 = vmatpush.xpose.msra.mxu0 %v519
    %3972 = vmatmul.f32.gmra.mxu0 %v135
    %v3973 = vpop.f32.mrf.mxu0
    %v3974 = vadd.f32 %v3948, %v3973
    %3975 = vmatmul.f32.gmra.mxu0 %v263
    %v3976 = vpop.f32.mrf.mxu0
    %v3977 = vadd.f32 %v3951, %v3976
    %3978 = vmatmul.f32.gmra.mxu0 %v391
    %v3979 = vpop.f32.mrf.mxu0
    %v3980 = vadd.f32 %v3954, %v3979
    %3981 = vdwg.mxu0
    %3982 = vmatpush.xpose.msra.mxu0 0.0
    %3983 = vmatpush.xpose.msra.mxu0 0.0
    %3984 = vmatpush.xpose.msra.mxu0 0.0
    %3985 = vmatpush.xpose.msra.mxu0 0.0
    %3986 = vmatpush.xpose.msra.mxu0 0.0
    %3987 = vmatpush.xpose.msra.mxu0 0.0
    %3988 = vmatpush.xpose.msra.mxu0 0.0
    %3989 = vmatpush.xpose.msra.mxu0 0.0
    %3990 = vmatpush.xpose.msra.mxu0 0.0
    %3991 = vmatpush.xpose.msra.mxu0 0.0
    %3992 = vmatpush.xpose.msra.mxu0 0.0
    %3993 = vmatpush.xpose.msra.mxu0 0.0
    %3994 = vmatpush.xpose.msra.mxu0 %v904
    %3995 = vmatpush.xpose.msra.mxu0 %v776
    %3996 = vmatpush.xpose.msra.mxu0 %v648
    %3997 = vmatpush.xpose.msra.mxu0 %v520
    %3998 = vmatmul.f32.gmra.mxu0 %v136
    %v3999 = vpop.f32.mrf.mxu0
    %v4000 = vadd.f32 %v3974, %v3999
    %4001 = vmatmul.f32.gmra.mxu0 %v264
    %v4002 = vpop.f32.mrf.mxu0
    %v4003 = vadd.f32 %v3977, %v4002
    %4004 = vmatmul.f32.gmra.mxu0 %v392
    %v4005 = vpop.f32.mrf.mxu0
    %v4006 = vadd.f32 %v3980, %v4005
    %4007 = vdwg.mxu0
    %4008 = vmatpush.xpose.msra.mxu0 0.0
    %4009 = vmatpush.xpose.msra.mxu0 0.0
    %4010 = vmatpush.xpose.msra.mxu0 0.0
    %4011 = vmatpush.xpose.msra.mxu0 0.0
    %4012 = vmatpush.xpose.msra.mxu0 0.0
    %4013 = vmatpush.xpose.msra.mxu0 0.0
    %4014 = vmatpush.xpose.msra.mxu0 0.0
    %4015 = vmatpush.xpose.msra.mxu0 0.0
    %4016 = vmatpush.xpose.msra.mxu0 0.0
    %4017 = vmatpush.xpose.msra.mxu0 0.0
    %4018 = vmatpush.xpose.msra.mxu0 0.0
    %4019 = vmatpush.xpose.msra.mxu0 0.0
    %4020 = vmatpush.xpose.msra.mxu0 %v905
    %4021 = vmatpush.xpose.msra.mxu0 %v777
    %4022 = vmatpush.xpose.msra.mxu0 %v649
    %4023 = vmatpush.xpose.msra.mxu0 %v521
    %4024 = vmatmul.f32.gmra.mxu0 %v137
    %v4025 = vpop.f32.mrf.mxu0
    %v4026 = vadd.f32 %v4000, %v4025
    %4027 = vmatmul.f32.gmra.mxu0 %v265
    %v4028 = vpop.f32.mrf.mxu0
    %v4029 = vadd.f32 %v4003, %v4028
    %4030 = vmatmul.f32.gmra.mxu0 %v393
    %v4031 = vpop.f32.mrf.mxu0
    %v4032 = vadd.f32 %v4006, %v4031
    %4033 = vdwg.mxu0
    %4034 = vmatpush.xpose.msra.mxu0 0.0
    %4035 = vmatpush.xpose.msra.mxu0 0.0
    %4036 = vmatpush.xpose.msra.mxu0 0.0
    %4037 = vmatpush.xpose.msra.mxu0 0.0
    %4038 = vmatpush.xpose.msra.mxu0 0.0
    %4039 = vmatpush.xpose.msra.mxu0 0.0
    %4040 = vmatpush.xpose.msra.mxu0 0.0
    %4041 = vmatpush.xpose.msra.mxu0 0.0
    %4042 = vmatpush.xpose.msra.mxu0 0.0
    %4043 = vmatpush.xpose.msra.mxu0 0.0
    %4044 = vmatpush.xpose.msra.mxu0 0.0
    %4045 = vmatpush.xpose.msra.mxu0 0.0
    %4046 = vmatpush.xpose.msra.mxu0 %v906
    %4047 = vmatpush.xpose.msra.mxu0 %v778
    %4048 = vmatpush.xpose.msra.mxu0 %v650
    %4049 = vmatpush.xpose.msra.mxu0 %v522
    %4050 = vmatmul.f32.gmra.mxu0 %v138
    %v4051 = vpop.f32.mrf.mxu0
    %v4052 = vadd.f32 %v4026, %v4051
    %4053 = vmatmul.f32.gmra.mxu0 %v266
    %v4054 = vpop.f32.mrf.mxu0
    %v4055 = vadd.f32 %v4029, %v4054
    %4056 = vmatmul.f32.gmra.mxu0 %v394
    %v4057 = vpop.f32.mrf.mxu0
    %v4058 = vadd.f32 %v4032, %v4057
    %4059 = vdwg.mxu0
    %4060 = vmatpush.xpose.msra.mxu0 0.0
    %4061 = vmatpush.xpose.msra.mxu0 0.0
    %4062 = vmatpush.xpose.msra.mxu0 0.0
    %4063 = vmatpush.xpose.msra.mxu0 0.0
    %4064 = vmatpush.xpose.msra.mxu0 0.0
    %4065 = vmatpush.xpose.msra.mxu0 0.0
    %4066 = vmatpush.xpose.msra.mxu0 0.0
    %4067 = vmatpush.xpose.msra.mxu0 0.0
    %4068 = vmatpush.xpose.msra.mxu0 0.0
    %4069 = vmatpush.xpose.msra.mxu0 0.0
    %4070 = vmatpush.xpose.msra.mxu0 0.0
    %4071 = vmatpush.xpose.msra.mxu0 0.0
    %4072 = vmatpush.xpose.msra.mxu0 %v907
    %4073 = vmatpush.xpose.msra.mxu0 %v779
    %4074 = vmatpush.xpose.msra.mxu0 %v651
    %4075 = vmatpush.xpose.msra.mxu0 %v523
    %4076 = vmatmul.f32.gmra.mxu0 %v139
    %v4077 = vpop.f32.mrf.mxu0
    %v4078 = vadd.f32 %v4052, %v4077
    %4079 = vmatmul.f32.gmra.mxu0 %v267
    %v4080 = vpop.f32.mrf.mxu0
    %v4081 = vadd.f32 %v4055, %v4080
    %4082 = vmatmul.f32.gmra.mxu0 %v395
    %v4083 = vpop.f32.mrf.mxu0
    %v4084 = vadd.f32 %v4058, %v4083
    %4085 = vdwg.mxu0
    %4086 = vmatpush.xpose.msra.mxu0 0.0
    %4087 = vmatpush.xpose.msra.mxu0 0.0
    %4088 = vmatpush.xpose.msra.mxu0 0.0
    %4089 = vmatpush.xpose.msra.mxu0 0.0
    %4090 = vmatpush.xpose.msra.mxu0 0.0
    %4091 = vmatpush.xpose.msra.mxu0 0.0
    %4092 = vmatpush.xpose.msra.mxu0 0.0
    %4093 = vmatpush.xpose.msra.mxu0 0.0
    %4094 = vmatpush.xpose.msra.mxu0 0.0
    %4095 = vmatpush.xpose.msra.mxu0 0.0
    %4096 = vmatpush.xpose.msra.mxu0 0.0
    %4097 = vmatpush.xpose.msra.mxu0 0.0
    %4098 = vmatpush.xpose.msra.mxu0 %v908
    %4099 = vmatpush.xpose.msra.mxu0 %v780
    %4100 = vmatpush.xpose.msra.mxu0 %v652
    %4101 = vmatpush.xpose.msra.mxu0 %v524
    %4102 = vmatmul.f32.gmra.mxu0 %v140
    %v4103 = vpop.f32.mrf.mxu0
    %v4104 = vadd.f32 %v4078, %v4103
    %4105 = vmatmul.f32.gmra.mxu0 %v268
    %v4106 = vpop.f32.mrf.mxu0
    %v4107 = vadd.f32 %v4081, %v4106
    %4108 = vmatmul.f32.gmra.mxu0 %v396
    %v4109 = vpop.f32.mrf.mxu0
    %v4110 = vadd.f32 %v4084, %v4109
    %4111 = vdwg.mxu0
    %4112 = vmatpush.xpose.msra.mxu0 0.0
    %4113 = vmatpush.xpose.msra.mxu0 0.0
    %4114 = vmatpush.xpose.msra.mxu0 0.0
    %4115 = vmatpush.xpose.msra.mxu0 0.0
    %4116 = vmatpush.xpose.msra.mxu0 0.0
    %4117 = vmatpush.xpose.msra.mxu0 0.0
    %4118 = vmatpush.xpose.msra.mxu0 0.0
    %4119 = vmatpush.xpose.msra.mxu0 0.0
    %4120 = vmatpush.xpose.msra.mxu0 0.0
    %4121 = vmatpush.xpose.msra.mxu0 0.0
    %4122 = vmatpush.xpose.msra.mxu0 0.0
    %4123 = vmatpush.xpose.msra.mxu0 0.0
    %4124 = vmatpush.xpose.msra.mxu0 %v909
    %4125 = vmatpush.xpose.msra.mxu0 %v781
    %4126 = vmatpush.xpose.msra.mxu0 %v653
    %4127 = vmatpush.xpose.msra.mxu0 %v525
    %4128 = vmatmul.f32.gmra.mxu0 %v141
    %v4129 = vpop.f32.mrf.mxu0
    %v4130 = vadd.f32 %v4104, %v4129
    %4131 = vmatmul.f32.gmra.mxu0 %v269
    %v4132 = vpop.f32.mrf.mxu0
    %v4133 = vadd.f32 %v4107, %v4132
    %4134 = vmatmul.f32.gmra.mxu0 %v397
    %v4135 = vpop.f32.mrf.mxu0
    %v4136 = vadd.f32 %v4110, %v4135
    %4137 = vdwg.mxu0
    %4138 = vmatpush.xpose.msra.mxu0 0.0
    %4139 = vmatpush.xpose.msra.mxu0 0.0
    %4140 = vmatpush.xpose.msra.mxu0 0.0
    %4141 = vmatpush.xpose.msra.mxu0 0.0
    %4142 = vmatpush.xpose.msra.mxu0 0.0
    %4143 = vmatpush.xpose.msra.mxu0 0.0
    %4144 = vmatpush.xpose.msra.mxu0 0.0
    %4145 = vmatpush.xpose.msra.mxu0 0.0
    %4146 = vmatpush.xpose.msra.mxu0 0.0
    %4147 = vmatpush.xpose.msra.mxu0 0.0
    %4148 = vmatpush.xpose.msra.mxu0 0.0
    %4149 = vmatpush.xpose.msra.mxu0 0.0
    %4150 = vmatpush.xpose.msra.mxu0 %v910
    %4151 = vmatpush.xpose.msra.mxu0 %v782
    %4152 = vmatpush.xpose.msra.mxu0 %v654
    %4153 = vmatpush.xpose.msra.mxu0 %v526
    %4154 = vmatmul.f32.gmra.mxu0 %v142
    %v4155 = vpop.f32.mrf.mxu0
    %v4156 = vadd.f32 %v4130, %v4155
    %4157 = vmatmul.f32.gmra.mxu0 %v270
    %v4158 = vpop.f32.mrf.mxu0
    %v4159 = vadd.f32 %v4133, %v4158
    %4160 = vmatmul.f32.gmra.mxu0 %v398
    %v4161 = vpop.f32.mrf.mxu0
    %v4162 = vadd.f32 %v4136, %v4161
    %4163 = vdwg.mxu0
    %4164 = vmatpush.xpose.msra.mxu0 0.0
    %4165 = vmatpush.xpose.msra.mxu0 0.0
    %4166 = vmatpush.xpose.msra.mxu0 0.0
    %4167 = vmatpush.xpose.msra.mxu0 0.0
    %4168 = vmatpush.xpose.msra.mxu0 0.0
    %4169 = vmatpush.xpose.msra.mxu0 0.0
    %4170 = vmatpush.xpose.msra.mxu0 0.0
    %4171 = vmatpush.xpose.msra.mxu0 0.0
    %4172 = vmatpush.xpose.msra.mxu0 0.0
    %4173 = vmatpush.xpose.msra.mxu0 0.0
    %4174 = vmatpush.xpose.msra.mxu0 0.0
    %4175 = vmatpush.xpose.msra.mxu0 0.0
    %4176 = vmatpush.xpose.msra.mxu0 %v911
    %4177 = vmatpush.xpose.msra.mxu0 %v783
    %4178 = vmatpush.xpose.msra.mxu0 %v655
    %4179 = vmatpush.xpose.msra.mxu0 %v527
    %4180 = vmatmul.f32.gmra.mxu0 %v143
    %v4181 = vpop.f32.mrf.mxu0
    %v4182 = vadd.f32 %v4156, %v4181
    %4183 = vmatmul.f32.gmra.mxu0 %v271
    %v4184 = vpop.f32.mrf.mxu0
    %v4185 = vadd.f32 %v4159, %v4184
    %4186 = vmatmul.f32.gmra.mxu0 %v399
    %v4187 = vpop.f32.mrf.mxu0
    %v4188 = vadd.f32 %v4162, %v4187
    %4189 = vdwg.mxu0
    %4190 = vmatpush.xpose.msra.mxu0 0.0
    %4191 = vmatpush.xpose.msra.mxu0 0.0
    %4192 = vmatpush.xpose.msra.mxu0 0.0
    %4193 = vmatpush.xpose.msra.mxu0 0.0
    %4194 = vmatpush.xpose.msra.mxu0 0.0
    %4195 = vmatpush.xpose.msra.mxu0 0.0
    %4196 = vmatpush.xpose.msra.mxu0 0.0
    %4197 = vmatpush.xpose.msra.mxu0 0.0
    %4198 = vmatpush.xpose.msra.mxu0 0.0
    %4199 = vmatpush.xpose.msra.mxu0 0.0
    %4200 = vmatpush.xpose.msra.mxu0 0.0
    %4201 = vmatpush.xpose.msra.mxu0 0.0
    %4202 = vmatpush.xpose.msra.mxu0 %v912
    %4203 = vmatpush.xpose.msra.mxu0 %v784
    %4204 = vmatpush.xpose.msra.mxu0 %v656
    %4205 = vmatpush.xpose.msra.mxu0 %v528
    %4206 = vmatmul.f32.gmra.mxu0 %v144
    %v4207 = vpop.f32.mrf.mxu0
    %v4208 = vadd.f32 %v4182, %v4207
    %4209 = vmatmul.f32.gmra.mxu0 %v272
    %v4210 = vpop.f32.mrf.mxu0
    %v4211 = vadd.f32 %v4185, %v4210
    %4212 = vmatmul.f32.gmra.mxu0 %v400
    %v4213 = vpop.f32.mrf.mxu0
    %v4214 = vadd.f32 %v4188, %v4213
    %4215 = vdwg.mxu0
    %4216 = vmatpush.xpose.msra.mxu0 0.0
    %4217 = vmatpush.xpose.msra.mxu0 0.0
    %4218 = vmatpush.xpose.msra.mxu0 0.0
    %4219 = vmatpush.xpose.msra.mxu0 0.0
    %4220 = vmatpush.xpose.msra.mxu0 0.0
    %4221 = vmatpush.xpose.msra.mxu0 0.0
    %4222 = vmatpush.xpose.msra.mxu0 0.0
    %4223 = vmatpush.xpose.msra.mxu0 0.0
    %4224 = vmatpush.xpose.msra.mxu0 0.0
    %4225 = vmatpush.xpose.msra.mxu0 0.0
    %4226 = vmatpush.xpose.msra.mxu0 0.0
    %4227 = vmatpush.xpose.msra.mxu0 0.0
    %4228 = vmatpush.xpose.msra.mxu0 %v913
    %4229 = vmatpush.xpose.msra.mxu0 %v785
    %4230 = vmatpush.xpose.msra.mxu0 %v657
    %4231 = vmatpush.xpose.msra.mxu0 %v529
    %4232 = vmatmul.f32.gmra.mxu0 %v145
    %v4233 = vpop.f32.mrf.mxu0
    %v4234 = vadd.f32 %v4208, %v4233
    %4235 = vmatmul.f32.gmra.mxu0 %v273
    %v4236 = vpop.f32.mrf.mxu0
    %v4237 = vadd.f32 %v4211, %v4236
    %4238 = vmatmul.f32.gmra.mxu0 %v401
    %v4239 = vpop.f32.mrf.mxu0
    %v4240 = vadd.f32 %v4214, %v4239
    %4241 = vdwg.mxu0
    %v4242 = vld [vmem:[%s2] sm:$0x1]
    %v4243 = vld [vmem:[%s3] sm:$0x1]
    %vm4244 = vcmask 195584
    %v4246 = vsel %vm4244, %v4242, 0
    %4248 = vmatpush.msra.mxu0 0.0
    %4249 = vmatpush.msra.mxu0 0.0
    %4250 = vmatpush.msra.mxu0 0.0
    %4251 = vmatpush.msra.mxu0 0.0
    %4252 = vmatpush.msra.mxu0 0.0
    %4253 = vmatpush.msra.mxu0 0.0
    %4254 = vmatpush.msra.mxu0 0.0
    %4255 = vmatpush.msra.mxu0 0.0
    %4256 = vmatpush.msra.mxu0 0.0
    %4257 = vmatpush.msra.mxu0 0.0
    %4258 = vmatpush.msra.mxu0 0.0
    %4259 = vmatpush.msra.mxu0 0.0
    %4260 = vmatpush.msra.mxu0 0.0
    %4261 = vmatpush.msra.mxu0 %v4240
    %4262 = vmatpush.msra.mxu0 %v4237
    %4263 = vmatpush.msra.mxu0 %v4234
    %4264 = vmatmul.f32.gmra.mxu0 %v4246
    %v4265 = vpop.f32.mrf.mxu0
    %v4266 = vadd.f32 %v4243, %v4265
    %4267 = vdwg.mxu0
    %vm4268 = vcmask 253952
    %4269 = vst.msk [vmem:[#allocation2] sm:$0x1] %vm4268, %v4266
    // Predicated region
    $region18: #{cnn6_forward.1} parent=1 // pred_check
      _
    $region19: #{cnn6_forward.1} parent=1 // pred_check_branch
      %4271 = sbr.rel (0) target = $region21
    $region20: #{cnn6_forward.1} parent=1 // pred_region
      %4273 = vsyncadd [#allocation3], 0
      %s4275 = sshll.u32 [#allocation2], 4
      %s4276 = int_to_ptr.vmem [resolvable:$true] %s4275
      %s4277 = sshll.u32 %s4, 4
      %s4278 = int_to_ptr.hbm [resolvable:$true] %s4277
      %4280 = dma.vmem_to_hbm [thread:$0]  %s4276, 16, %s4278, [#allocation3]
    $region21: #{cnn6_forward.1} parent=1 // pred_fallthru
      _
    // Predicated region
    $region22: #{cnn6_forward.1} parent=1 // pred_check
      _
    $region23: #{cnn6_forward.1} parent=1 // pred_check_branch
      %4282 = sbr.rel (0) target = $region25
    $region24: #{cnn6_forward.1} parent=1 // pred_region
      %4284 = dma.done [#allocation3], 16
    $region25: #{cnn6_forward.1} parent=1 // pred_fallthru
      _
    %4285 = vsyncpa [#allocation3], 1

</llo_original>
